<compile_context>
chip_gen: v7x
topology: tpu7x:2x2x1
jax: 0.10.0
libtpu: 0.0.40
codegen_flags: <defaults>
</compile_context>

<pallas_src>
import functools

import jax
import jax.numpy as jnp
from jax.experimental import pallas as pl
from jax.experimental.pallas import tpu as pltpu

EPS = 1e-5


# ----------------- pass 1: upsampled 3x3 conv + partial BN stats --------------
def _conv_stats_kernel(cs_ref, w_ref, conv_ref, stats_ref, *, tr, w2, cout):
    """One (batch, row-tile) block of the upsample+conv, plus BN partial stats.

    cs_ref:    (tr//2 + 2, KW*Cin, w2) bf16  column-im2col'd ORIGINAL padded rows
    w_ref:     (4, cout, KW*Cin)       bf16  row-combined weights [Wa, Wb, Wc, Wd]
    conv_ref:  (cout, tr*w2)           bf16  conv tile, lane-dense, NCHW-flat
    stats_ref: (2, cout)               f32   per-tile per-channel [sum, sum_sq]
    """
    wa = w_ref[0]
    wb = w_ref[1]
    wc = w_ref[2]
    wd = w_ref[3]

    psum = jnp.zeros((cout, w2), jnp.float32)
    psq = jnp.zeros((cout, w2), jnp.float32)

    # Static loop over output-row pairs (up-rows 2s, 2s+1 of this tile).
    for s in range(tr // 2):
        lo = cs_ref[s]        # original padded row s      (KW*Cin, w2)
        mid = cs_ref[s + 1]   # original padded row s + 1
        hi = cs_ref[s + 2]    # original padded row s + 2
        even = (jnp.dot(wa, lo, preferred_element_type=jnp.float32)
                + jnp.dot(wb, mid, preferred_element_type=jnp.float32))
        odd = (jnp.dot(wc, mid, preferred_element_type=jnp.float32)
               + jnp.dot(wd, hi, preferred_element_type=jnp.float32))
        # Lane-dense stores at static offsets (unmasked when w2 % 128 == 0).
        conv_ref[:, 2 * s * w2:(2 * s + 1) * w2] = even.astype(conv_ref.dtype)
        conv_ref[:, (2 * s + 1) * w2:(2 * s + 2) * w2] = odd.astype(conv_ref.dtype)
        # f32 partial statistics; cross-lane reduce happens once at the end (XLU).
        psum = psum + even + odd
        psq = psq + even * even + odd * odd

    stats_ref[...] = jnp.sum(jnp.stack([psum, psq], axis=0), axis=-1)  # (2, cout)


# ----------------- pass 2: normalize + affine + ReLU --------------------------
def _bn_relu_kernel(y_ref, scale_ref, shift_ref, o_ref):
    y = y_ref[...].astype(jnp.float32)                     # bf16 -> f32 (VPU math in f32)
    o_ref[...] = jnp.maximum(y * scale_ref[...] + shift_ref[...], 0.0)


# ----------------- tiling helpers ---------------------------------------------
def _pick_row_tile(h2, w2, cin, cout, itemsize, vmem_budget=12 * 1024 * 1024,
                   max_lanes=4096):
    """Largest even row tile (in up-rows) that divides H2, keeps the conv tile
    lane-aligned (tr*W2 % 128 == 0) and fits the double-buffered VMEM budget."""
    cands = [t for t in range(2, h2 + 1, 2) if h2 % t == 0]   # h2 = 2H is always even

    def cost(t):
        cs_in = (t // 2 + 2) * 3 * cin * w2 * itemsize
        conv_out = cout * t * w2 * itemsize
        return 2 * (cs_in + conv_out)                          # double-buffered in + out

    ok = [t for t in cands if t * w2 <= max_lanes and cost(t) <= vmem_budget]
    if not ok:
        ok = [cands[0]]
    aligned = [t for t in ok if (t * w2) % 128 == 0]
    if aligned:
        return max(aligned)
    return h2   # fallback: one full-height tile -> full-extent last dim, unmasked stores


def _pick_chunk(total, target=8192, align=128):
    """Largest multiple of `align` dividing `total` and <= target (else full extent)."""
    best = 0
    c = align
    while c <= min(total, target):
        if total % c == 0:
            best = c
        c += align
    return best if best else total


# ----------------- wrapper -----------------------------------------------------
def upblock2d_forward(x_nchw, w_oihw, bias, gamma, beta, *, compute_dtype=jnp.bfloat16):
    """x_nchw: (N, Cin, H, W) f32.  Returns (N, Cout, 2H, 2W) f32 (train-mode BN)."""
    del bias  # cancels exactly in training-mode BatchNorm centering

    N, Cin, H, W = x_nchw.shape
    Cout, _, KH, KW = w_oihw.shape
    assert (KH, KW) == (3, 3), "kernel specialised for kernel_size=3, padding=1"
    H2, W2 = 2 * H, 2 * W
    M_total = N * H2 * W2
    K = KW * Cin
    itemsize = jnp.dtype(compute_dtype).itemsize

    tr = _pick_row_tile(H2, W2, Cin, Cout, itemsize)
    nt = H2 // tr
    tm = tr * W2
    nrows = tr // 2 + 2                       # original padded rows per tile (2-row halo)

    # --- wrapper glue (cheap XLA) -------------------------------------------
    # Column-im2col on ORIGINAL padded rows, folding nearest-2x column upsample and
    # the conv zero pad into one gather:  cs[n, pr, dx*Cin+c, j] = xpad[n, pr, (j+dx+1)//2, c]
    x_nhwc = jnp.transpose(x_nchw, (0, 2, 3, 1))                     # (N, H, W, Cin)
    xp = jnp.pad(x_nhwc, ((0, 0), (1, 1), (1, 1), (0, 0)))           # (N, H+2, W+2, Cin)
    colidx = (jnp.arange(W2)[None, :] + jnp.arange(KW)[:, None] + 1) // 2   # (KW, W2)
    cs = xp[:, :, colidx, :]                                         # (N, H+2, KW, W2, Cin)
    cs = jnp.transpose(cs, (0, 1, 2, 4, 3)).reshape(N, H + 2, K, W2)
    # Per-row-tile blocks (rows t*tr/2 .. t*tr/2 + tr/2 + 1 of the padded original).
    tile_rows = (jnp.arange(nt) * (tr // 2))[:, None] + jnp.arange(nrows)[None, :]
    cs_tiles = cs[:, tile_rows].astype(compute_dtype)                # (N, nt, nrows, K, W2)

    # Row-combined weights: fold the nearest-2x ROW upsample into the 3 row taps.
    wk = jnp.transpose(w_oihw, (0, 2, 3, 1)).astype(jnp.float32)     # (Cout, KH, KW, Cin)
    wdy = wk.reshape(Cout, KH, K)                                    # k = dx*Cin + c
    wcomb = jnp.stack([wdy[:, 0], wdy[:, 1] + wdy[:, 2],
                       wdy[:, 0] + wdy[:, 1], wdy[:, 2]], axis=0)    # (4, Cout, K)
    wcomb = wcomb.astype(compute_dtype)

    cost1 = pl.CostEstimate(
        flops=2 * M_total * Cout * 2 * K,                            # folded: 6*Cin MAC/out
        transcendentals=0,
        bytes_accessed=(cs_tiles.size * itemsize + wcomb.size * itemsize
                        + M_total * Cout * itemsize + N * nt * 2 * Cout * 4))

    kernel1 = functools.partial(_conv_stats_kernel, tr=tr, w2=W2, cout=Cout)

    conv, stats = pl.pallas_call(
        kernel1,
        out_shape=(
            jax.ShapeDtypeStruct((N, Cout, H2 * W2), compute_dtype),  # conv, NCHW-flat
            jax.ShapeDtypeStruct((N, nt, 2, Cout), jnp.float32),      # partial BN stats
        ),
        grid=(N, nt),
        in_specs=[
            pl.BlockSpec((None, None, nrows, K, W2), lambda n, r: (n, r, 0, 0, 0)),
            pl.BlockSpec((4, Cout, K), lambda n, r: (0, 0, 0)),       # resident weights
        ],
        out_specs=(
            pl.BlockSpec((None, Cout, tm), lambda n, r: (n, 0, r)),
            pl.BlockSpec((None, None, 2, Cout), lambda n, r: (n, r, 0, 0)),
        ),
        compiler_params=pltpu.CompilerParams(
            dimension_semantics=("parallel", "parallel"),
            # 48 MiB fits v7x's 64 MiB/TC with headroom; raise (with a bigger
            # _pick_row_tile budget) on v5e/v6e's 128 MiB VMEM.
            vmem_limit_bytes=48 * 1024 * 1024),
        cost_estimate=cost1,
    )(cs_tiles, wcomb)

    # --- tiny per-channel BN finalize (O(Cout), plain JAX glue) --------------
    # NOTE: E[x^2] - mean^2 in f32; fine for activation-scale data.  TODO(synk):
    # switch to mean-shifted per-tile partials if inputs can carry a large offset.
    sums = jnp.sum(stats[:, :, 0, :], axis=(0, 1))                   # (Cout,)
    sqs = jnp.sum(stats[:, :, 1, :], axis=(0, 1))
    mean = sums / M_total
    var = jnp.maximum(sqs / M_total - mean * mean, 0.0)              # biased var (train BN)
    inv_std = jax.lax.rsqrt(var + EPS)
    g32 = gamma.astype(jnp.float32)
    scale = (g32 * inv_std).reshape(Cout, 1)
    shift = (beta.astype(jnp.float32) - mean * g32 * inv_std).reshape(Cout, 1)

    # --- pass 2: elementwise normalize + affine + ReLU (big lane-dense blocks) -
    tm2 = _pick_chunk(H2 * W2)
    cost2 = pl.CostEstimate(
        flops=3 * M_total * Cout, transcendentals=0,
        bytes_accessed=M_total * Cout * (itemsize + 4) + 2 * Cout * 4)

    out_flat = pl.pallas_call(
        _bn_relu_kernel,
        out_shape=jax.ShapeDtypeStruct((N, Cout, H2 * W2), jnp.float32),
        grid=(N, (H2 * W2) // tm2),
        in_specs=[
            pl.BlockSpec((None, Cout, tm2), lambda n, s: (n, 0, s)),
            pl.BlockSpec((Cout, 1), lambda n, s: (0, 0)),
            pl.BlockSpec((Cout, 1), lambda n, s: (0, 0)),
        ],
        out_specs=pl.BlockSpec((None, Cout, tm2), lambda n, s: (n, 0, s)),
        compiler_params=pltpu.CompilerParams(
            dimension_semantics=("parallel", "parallel"),
            vmem_limit_bytes=48 * 1024 * 1024),
        cost_estimate=cost2,
    )(conv, scale, shift)

    return out_flat.reshape(N, Cout, H2, W2)                          # already NCHW


# ----------------- pure-JAX reference -------------------------------------------
def reference_forward(x_nchw, w_oihw, bias, gamma, beta):
    """Mirrors the PyTorch forward (training-mode BN, conv bias included)."""
    up = jnp.repeat(jnp.repeat(x_nchw, 2, axis=2), 2, axis=3)
    conv = jax.lax.conv_general_dilated(
        up, w_oihw, window_strides=(1, 1), padding=((1, 1), (1, 1)),
        dimension_numbers=("NCHW", "OIHW", "NCHW"))
    conv = conv + bias[None, :, None, None]
    mean = conv.mean(axis=(0, 2, 3), keepdims=True)
    var = ((conv - mean) ** 2).mean(axis=(0, 2, 3), keepdims=True)
    y = (conv - mean) * jax.lax.rsqrt(var + EPS)
    y = y * gamma[None, :, None, None] + beta[None, :, None, None]
    return jnp.maximum(y, 0.0)


if __name__ == "__main__":
    in_features, out_features, ksize = 4, 8, 3
    N, H, W = 2, 16, 16

    key = jax.random.PRNGKey(0)
    kx, kw_, kb, kg, kbe = jax.random.split(key, 5)
    x = jax.random.normal(kx, (N, in_features, H, W), dtype=jnp.float32)
    w = 0.1 * jax.random.normal(kw_, (out_features, in_features, ksize, ksize), dtype=jnp.float32)
    b = 0.1 * jax.random.normal(kb, (out_features,), dtype=jnp.float32)
    gamma = 1.0 + 0.1 * jax.random.normal(kg, (out_features,), dtype=jnp.float32)
    beta = 0.1 * jax.random.normal(kbe, (out_features,), dtype=jnp.float32)

    out = jax.block_until_ready(upblock2d_forward(x, w, b, gamma, beta))
    ref = jax.block_until_ready(reference_forward(x, w, b, gamma, beta))

    assert out.shape == (N, out_features, 2 * H, 2 * W), out.shape
    err = float(jnp.max(jnp.abs(out - ref)))
    # bf16 MXU operands + bf16 conv intermediate (f32 accumulation & f32 BN stats).
    # Passing compute_dtype=jnp.float32 matches the reference to <1e-3.
    assert err < 3e-2, err

    print("KERNEL_OK")
</pallas_src>

<mosaic_0001>
module attributes {stable_mosaic.version = 11 : i64} {
  func.func @_conv_stats_kernel(%arg0: i32, %arg1: i32, %arg2: memref<1x1x18x12x32xbf16, #tpu.memory_space<vmem>>, %arg3: memref<4x8x12xbf16, #tpu.memory_space<vmem>>, %arg4: memref<1x8x1024xbf16, #tpu.memory_space<vmem>>, %arg5: memref<1x1x2x8xf32, #tpu.memory_space<vmem>>) attributes {dimension_semantics = [#tpu.dimension_semantics<parallel>, #tpu.dimension_semantics<parallel>], iteration_bounds = array<i64: 2, 1>, scalar_prefetch = 0 : i64, scratch_operands = 0 : i64, tpu.core_type = #tpu.core_type<tc>, window_params = [{transform_indices = @transform_0, window_bounds = array<i64: 1, 1, 18, 12, 32>}, {pipeline_mode = #tpu.pipeline_mode<synchronous>, transform_indices = @transform_1, window_bounds = array<i64: 4, 8, 12>}, {transform_indices = @transform_2, window_bounds = array<i64: 1, 8, 1024>}, {transform_indices = @transform_3, window_bounds = array<i64: 1, 1, 2, 8>}]} {
    %c0 = arith.constant 0 : index
    %c0_0 = arith.constant 0 : index
    %c0_1 = arith.constant 0 : index
    %0 = vector.load %arg3[%c0, %c0_0, %c0_1] : memref<4x8x12xbf16, #tpu.memory_space<vmem>>, vector<1x8x12xbf16>
    %1 = vector.shape_cast %0 : vector<1x8x12xbf16> to vector<8x12xbf16>
    %c1 = arith.constant 1 : index
    %c0_2 = arith.constant 0 : index
    %c0_3 = arith.constant 0 : index
    %2 = vector.load %arg3[%c1, %c0_2, %c0_3] : memref<4x8x12xbf16, #tpu.memory_space<vmem>>, vector<1x8x12xbf16>
    %3 = vector.shape_cast %2 : vector<1x8x12xbf16> to vector<8x12xbf16>
    %c2 = arith.constant 2 : index
    %c0_4 = arith.constant 0 : index
    %c0_5 = arith.constant 0 : index
    %4 = vector.load %arg3[%c2, %c0_4, %c0_5] : memref<4x8x12xbf16, #tpu.memory_space<vmem>>, vector<1x8x12xbf16>
    %5 = vector.shape_cast %4 : vector<1x8x12xbf16> to vector<8x12xbf16>
    %c3 = arith.constant 3 : index
    %c0_6 = arith.constant 0 : index
    %c0_7 = arith.constant 0 : index
    %6 = vector.load %arg3[%c3, %c0_6, %c0_7] : memref<4x8x12xbf16, #tpu.memory_space<vmem>>, vector<1x8x12xbf16>
    %7 = vector.shape_cast %6 : vector<1x8x12xbf16> to vector<8x12xbf16>
    %cst = arith.constant 0.000000e+00 : f32
    %8 = vector.broadcast %cst : f32 to vector<8x32xf32>
    %cst_8 = arith.constant 0.000000e+00 : f32
    %9 = vector.broadcast %cst_8 : f32 to vector<8x32xf32>
    %c0_9 = arith.constant 0 : index
    %c0_10 = arith.constant 0 : index
    %c0_11 = arith.constant 0 : index
    %c0_12 = arith.constant 0 : index
    %c0_13 = arith.constant 0 : index
    %10 = vector.load %arg2[%c0_9, %c0_10, %c0_11, %c0_12, %c0_13] : memref<1x1x18x12x32xbf16, #tpu.memory_space<vmem>>, vector<1x1x1x12x32xbf16>
    %11 = vector.shape_cast %10 : vector<1x1x1x12x32xbf16> to vector<12x32xbf16>
    %c0_14 = arith.constant 0 : index
    %c0_15 = arith.constant 0 : index
    %c1_16 = arith.constant 1 : index
    %c0_17 = arith.constant 0 : index
    %c0_18 = arith.constant 0 : index
    %12 = vector.load %arg2[%c0_14, %c0_15, %c1_16, %c0_17, %c0_18] : memref<1x1x18x12x32xbf16, #tpu.memory_space<vmem>>, vector<1x1x1x12x32xbf16>
    %13 = vector.shape_cast %12 : vector<1x1x1x12x32xbf16> to vector<12x32xbf16>
    %c0_19 = arith.constant 0 : index
    %c0_20 = arith.constant 0 : index
    %c2_21 = arith.constant 2 : index
    %c0_22 = arith.constant 0 : index
    %c0_23 = arith.constant 0 : index
    %14 = vector.load %arg2[%c0_19, %c0_20, %c2_21, %c0_22, %c0_23] : memref<1x1x18x12x32xbf16, #tpu.memory_space<vmem>>, vector<1x1x1x12x32xbf16>
    %15 = vector.shape_cast %14 : vector<1x1x1x12x32xbf16> to vector<12x32xbf16>
    %cst_24 = arith.constant dense<0.000000e+00> : vector<8x32xf32>
    %16 = tpu.matmul %1, %11, %cst_24 {dimension_numbers = #tpu.dot_dimension_numbers<[1], [0], [0], [1], [0, 0, 1, 1], [], []>} : vector<8x12xbf16>, vector<12x32xbf16>, vector<8x32xf32> -> vector<8x32xf32>
    %cst_25 = arith.constant dense<0.000000e+00> : vector<8x32xf32>
    %17 = tpu.matmul %3, %13, %cst_25 {dimension_numbers = #tpu.dot_dimension_numbers<[1], [0], [0], [1], [0, 0, 1, 1], [], []>} : vector<8x12xbf16>, vector<12x32xbf16>, vector<8x32xf32> -> vector<8x32xf32>
    %18 = arith.addf %16, %17 : vector<8x32xf32>
    %cst_26 = arith.constant dense<0.000000e+00> : vector<8x32xf32>
    %19 = tpu.matmul %5, %13, %cst_26 {dimension_numbers = #tpu.dot_dimension_numbers<[1], [0], [0], [1], [0, 0, 1, 1], [], []>} : vector<8x12xbf16>, vector<12x32xbf16>, vector<8x32xf32> -> vector<8x32xf32>
    %cst_27 = arith.constant dense<0.000000e+00> : vector<8x32xf32>
    %20 = tpu.matmul %7, %15, %cst_27 {dimension_numbers = #tpu.dot_dimension_numbers<[1], [0], [0], [1], [0, 0, 1, 1], [], []>} : vector<8x12xbf16>, vector<12x32xbf16>, vector<8x32xf32> -> vector<8x32xf32>
    %21 = arith.addf %19, %20 : vector<8x32xf32>
    %22 = arith.truncf %18 : vector<8x32xf32> to vector<8x32xbf16>
    %c0_28 = arith.constant 0 : index
    %c0_29 = arith.constant 0 : index
    %c0_30 = arith.constant 0 : index
    %23 = vector.load %arg4[%c0_28, %c0_29, %c0_30] : memref<1x8x1024xbf16, #tpu.memory_space<vmem>>, vector<1x8x32xbf16>
    %24 = vector.shape_cast %23 : vector<1x8x32xbf16> to vector<8x32xbf16>
    %25 = vector.shape_cast %22 : vector<8x32xbf16> to vector<1x8x32xbf16>
    tpu.vector_store %arg4[%c0_28, %c0_29, %c0_30], %25 {strides = array<i32>} : memref<1x8x1024xbf16, #tpu.memory_space<vmem>>, vector<1x8x32xbf16>,
    %26 = arith.truncf %21 : vector<8x32xf32> to vector<8x32xbf16>
    %c0_31 = arith.constant 0 : index
    %c0_32 = arith.constant 0 : index
    %c32 = arith.constant 32 : index
    %27 = vector.load %arg4[%c0_31, %c0_32, %c32] : memref<1x8x1024xbf16, #tpu.memory_space<vmem>>, vector<1x8x32xbf16>
    %28 = vector.shape_cast %27 : vector<1x8x32xbf16> to vector<8x32xbf16>
    %29 = vector.shape_cast %26 : vector<8x32xbf16> to vector<1x8x32xbf16>
    tpu.vector_store %arg4[%c0_31, %c0_32, %c32], %29 {strides = array<i32>} : memref<1x8x1024xbf16, #tpu.memory_space<vmem>>, vector<1x8x32xbf16>,
    %30 = arith.addf %8, %18 : vector<8x32xf32>
    %31 = arith.addf %30, %21 : vector<8x32xf32>
    %32 = arith.mulf %18, %18 : vector<8x32xf32>
    %33 = arith.addf %9, %32 : vector<8x32xf32>
    %34 = arith.mulf %21, %21 : vector<8x32xf32>
    %35 = arith.addf %33, %34 : vector<8x32xf32>
    %c0_33 = arith.constant 0 : index
    %c0_34 = arith.constant 0 : index
    %c1_35 = arith.constant 1 : index
    %c0_36 = arith.constant 0 : index
    %c0_37 = arith.constant 0 : index
    %36 = vector.load %arg2[%c0_33, %c0_34, %c1_35, %c0_36, %c0_37] : memref<1x1x18x12x32xbf16, #tpu.memory_space<vmem>>, vector<1x1x1x12x32xbf16>
    %37 = vector.shape_cast %36 : vector<1x1x1x12x32xbf16> to vector<12x32xbf16>
    %c0_38 = arith.constant 0 : index
    %c0_39 = arith.constant 0 : index
    %c2_40 = arith.constant 2 : index
    %c0_41 = arith.constant 0 : index
    %c0_42 = arith.constant 0 : index
    %38 = vector.load %arg2[%c0_38, %c0_39, %c2_40, %c0_41, %c0_42] : memref<1x1x18x12x32xbf16, #tpu.memory_space<vmem>>, vector<1x1x1x12x32xbf16>
    %39 = vector.shape_cast %38 : vector<1x1x1x12x32xbf16> to vector<12x32xbf16>
    %c0_43 = arith.constant 0 : index
    %c0_44 = arith.constant 0 : index
    %c3_45 = arith.constant 3 : index
    %c0_46 = arith.constant 0 : index
    %c0_47 = arith.constant 0 : index
    %40 = vector.load %arg2[%c0_43, %c0_44, %c3_45, %c0_46, %c0_47] : memref<1x1x18x12x32xbf16, #tpu.memory_space<vmem>>, vector<1x1x1x12x32xbf16>
    %41 = vector.shape_cast %40 : vector<1x1x1x12x32xbf16> to vector<12x32xbf16>
    %cst_48 = arith.constant dense<0.000000e+00> : vector<8x32xf32>
    %42 = tpu.matmul %1, %37, %cst_48 {dimension_numbers = #tpu.dot_dimension_numbers<[1], [0], [0], [1], [0, 0, 1, 1], [], []>} : vector<8x12xbf16>, vector<12x32xbf16>, vector<8x32xf32> -> vector<8x32xf32>
    %cst_49 = arith.constant dense<0.000000e+00> : vector<8x32xf32>
    %43 = tpu.matmul %3, %39, %cst_49 {dimension_numbers = #tpu.dot_dimension_numbers<[1], [0], [0], [1], [0, 0, 1, 1], [], []>} : vector<8x12xbf16>, vector<12x32xbf16>, vector<8x32xf32> -> vector<8x32xf32>
    %44 = arith.addf %42, %43 : vector<8x32xf32>
    %cst_50 = arith.constant dense<0.000000e+00> : vector<8x32xf32>
    %45 = tpu.matmul %5, %39, %cst_50 {dimension_numbers = #tpu.dot_dimension_numbers<[1], [0], [0], [1], [0, 0, 1, 1], [], []>} : vector<8x12xbf16>, vector<12x32xbf16>, vector<8x32xf32> -> vector<8x32xf32>
    %cst_51 = arith.constant dense<0.000000e+00> : vector<8x32xf32>
    %46 = tpu.matmul %7, %41, %cst_51 {dimension_numbers = #tpu.dot_dimension_numbers<[1], [0], [0], [1], [0, 0, 1, 1], [], []>} : vector<8x12xbf16>, vector<12x32xbf16>, vector<8x32xf32> -> vector<8x32xf32>
    %47 = arith.addf %45, %46 : vector<8x32xf32>
    %48 = arith.truncf %44 : vector<8x32xf32> to vector<8x32xbf16>
    %c0_52 = arith.constant 0 : index
    %c0_53 = arith.constant 0 : index
    %c64 = arith.constant 64 : index
    %49 = vector.load %arg4[%c0_52, %c0_53, %c64] : memref<1x8x1024xbf16, #tpu.memory_space<vmem>>, vector<1x8x32xbf16>
    %50 = vector.shape_cast %49 : vector<1x8x32xbf16> to vector<8x32xbf16>
    %51 = vector.shape_cast %48 : vector<8x32xbf16> to vector<1x8x32xbf16>
    tpu.vector_store %arg4[%c0_52, %c0_53, %c64], %51 {strides = array<i32>} : memref<1x8x1024xbf16, #tpu.memory_space<vmem>>, vector<1x8x32xbf16>,
    %52 = arith.truncf %47 : vector<8x32xf32> to vector<8x32xbf16>
    %c0_54 = arith.constant 0 : index
    %c0_55 = arith.constant 0 : index
    %c96 = arith.constant 96 : index
    %53 = vector.load %arg4[%c0_54, %c0_55, %c96] : memref<1x8x1024xbf16, #tpu.memory_space<vmem>>, vector<1x8x32xbf16>
    %54 = vector.shape_cast %53 : vector<1x8x32xbf16> to vector<8x32xbf16>
    %55 = vector.shape_cast %52 : vector<8x32xbf16> to vector<1x8x32xbf16>
    tpu.vector_store %arg4[%c0_54, %c0_55, %c96], %55 {strides = array<i32>} : memref<1x8x1024xbf16, #tpu.memory_space<vmem>>, vector<1x8x32xbf16>,
    %56 = arith.addf %31, %44 : vector<8x32xf32>
    %57 = arith.addf %56, %47 : vector<8x32xf32>
    %58 = arith.mulf %44, %44 : vector<8x32xf32>
    %59 = arith.addf %35, %58 : vector<8x32xf32>
    %60 = arith.mulf %47, %47 : vector<8x32xf32>
    %61 = arith.addf %59, %60 : vector<8x32xf32>
    %c0_56 = arith.constant 0 : index
    %c0_57 = arith.constant 0 : index
    %c2_58 = arith.constant 2 : index
    %c0_59 = arith.constant 0 : index
    %c0_60 = arith.constant 0 : index
    %62 = vector.load %arg2[%c0_56, %c0_57, %c2_58, %c0_59, %c0_60] : memref<1x1x18x12x32xbf16, #tpu.memory_space<vmem>>, vector<1x1x1x12x32xbf16>
    %63 = vector.shape_cast %62 : vector<1x1x1x12x32xbf16> to vector<12x32xbf16>
    %c0_61 = arith.constant 0 : index
    %c0_62 = arith.constant 0 : index
    %c3_63 = arith.constant 3 : index
    %c0_64 = arith.constant 0 : index
    %c0_65 = arith.constant 0 : index
    %64 = vector.load %arg2[%c0_61, %c0_62, %c3_63, %c0_64, %c0_65] : memref<1x1x18x12x32xbf16, #tpu.memory_space<vmem>>, vector<1x1x1x12x32xbf16>
    %65 = vector.shape_cast %64 : vector<1x1x1x12x32xbf16> to vector<12x32xbf16>
    %c0_66 = arith.constant 0 : index
    %c0_67 = arith.constant 0 : index
    %c4 = arith.constant 4 : index
    %c0_68 = arith.constant 0 : index
    %c0_69 = arith.constant 0 : index
    %66 = vector.load %arg2[%c0_66, %c0_67, %c4, %c0_68, %c0_69] : memref<1x1x18x12x32xbf16, #tpu.memory_space<vmem>>, vector<1x1x1x12x32xbf16>
    %67 = vector.shape_cast %66 : vector<1x1x1x12x32xbf16> to vector<12x32xbf16>
    %cst_70 = arith.constant dense<0.000000e+00> : vector<8x32xf32>
    %68 = tpu.matmul %1, %63, %cst_70 {dimension_numbers = #tpu.dot_dimension_numbers<[1], [0], [0], [1], [0, 0, 1, 1], [], []>} : vector<8x12xbf16>, vector<12x32xbf16>, vector<8x32xf32> -> vector<8x32xf32>
    %cst_71 = arith.constant dense<0.000000e+00> : vector<8x32xf32>
    %69 = tpu.matmul %3, %65, %cst_71 {dimension_numbers = #tpu.dot_dimension_numbers<[1], [0], [0], [1], [0, 0, 1, 1], [], []>} : vector<8x12xbf16>, vector<12x32xbf16>, vector<8x32xf32> -> vector<8x32xf32>
    %70 = arith.addf %68, %69 : vector<8x32xf32>
    %cst_72 = arith.constant dense<0.000000e+00> : vector<8x32xf32>
    %71 = tpu.matmul %5, %65, %cst_72 {dimension_numbers = #tpu.dot_dimension_numbers<[1], [0], [0], [1], [0, 0, 1, 1], [], []>} : vector<8x12xbf16>, vector<12x32xbf16>, vector<8x32xf32> -> vector<8x32xf32>
    %cst_73 = arith.constant dense<0.000000e+00> : vector<8x32xf32>
    %72 = tpu.matmul %7, %67, %cst_73 {dimension_numbers = #tpu.dot_dimension_numbers<[1], [0], [0], [1], [0, 0, 1, 1], [], []>} : vector<8x12xbf16>, vector<12x32xbf16>, vector<8x32xf32> -> vector<8x32xf32>
    %73 = arith.addf %71, %72 : vector<8x32xf32>
    %74 = arith.truncf %70 : vector<8x32xf32> to vector<8x32xbf16>
    %c0_74 = arith.constant 0 : index
    %c0_75 = arith.constant 0 : index
    %c128 = arith.constant 128 : index
    %75 = vector.load %arg4[%c0_74, %c0_75, %c128] : memref<1x8x1024xbf16, #tpu.memory_space<vmem>>, vector<1x8x32xbf16>
    %76 = vector.shape_cast %75 : vector<1x8x32xbf16> to vector<8x32xbf16>
    %77 = vector.shape_cast %74 : vector<8x32xbf16> to vector<1x8x32xbf16>
    tpu.vector_store %arg4[%c0_74, %c0_75, %c128], %77 {strides = array<i32>} : memref<1x8x1024xbf16, #tpu.memory_space<vmem>>, vector<1x8x32xbf16>,
    %78 = arith.truncf %73 : vector<8x32xf32> to vector<8x32xbf16>
    %c0_76 = arith.constant 0 : index
    %c0_77 = arith.constant 0 : index
    %c160 = arith.constant 160 : index
    %79 = vector.load %arg4[%c0_76, %c0_77, %c160] : memref<1x8x1024xbf16, #tpu.memory_space<vmem>>, vector<1x8x32xbf16>
    %80 = vector.shape_cast %79 : vector<1x8x32xbf16> to vector<8x32xbf16>
    %81 = vector.shape_cast %78 : vector<8x32xbf16> to vector<1x8x32xbf16>
    tpu.vector_store %arg4[%c0_76, %c0_77, %c160], %81 {strides = array<i32>} : memref<1x8x1024xbf16, #tpu.memory_space<vmem>>, vector<1x8x32xbf16>,
    %82 = arith.addf %57, %70 : vector<8x32xf32>
    %83 = arith.addf %82, %73 : vector<8x32xf32>
    %84 = arith.mulf %70, %70 : vector<8x32xf32>
    %85 = arith.addf %61, %84 : vector<8x32xf32>
    %86 = arith.mulf %73, %73 : vector<8x32xf32>
    %87 = arith.addf %85, %86 : vector<8x32xf32>
    %c0_78 = arith.constant 0 : index
    %c0_79 = arith.constant 0 : index
    %c3_80 = arith.constant 3 : index
    %c0_81 = arith.constant 0 : index
    %c0_82 = arith.constant 0 : index
    %88 = vector.load %arg2[%c0_78, %c0_79, %c3_80, %c0_81, %c0_82] : memref<1x1x18x12x32xbf16, #tpu.memory_space<vmem>>, vector<1x1x1x12x32xbf16>
    %89 = vector.shape_cast %88 : vector<1x1x1x12x32xbf16> to vector<12x32xbf16>
    %c0_83 = arith.constant 0 : index
    %c0_84 = arith.constant 0 : index
    %c4_85 = arith.constant 4 : index
    %c0_86 = arith.constant 0 : index
    %c0_87 = arith.constant 0 : index
    %90 = vector.load %arg2[%c0_83, %c0_84, %c4_85, %c0_86, %c0_87] : memref<1x1x18x12x32xbf16, #tpu.memory_space<vmem>>, vector<1x1x1x12x32xbf16>
    %91 = vector.shape_cast %90 : vector<1x1x1x12x32xbf16> to vector<12x32xbf16>
    %c0_88 = arith.constant 0 : index
    %c0_89 = arith.constant 0 : index
    %c5 = arith.constant 5 : index
    %c0_90 = arith.constant 0 : index
    %c0_91 = arith.constant 0 : index
    %92 = vector.load %arg2[%c0_88, %c0_89, %c5, %c0_90, %c0_91] : memref<1x1x18x12x32xbf16, #tpu.memory_space<vmem>>, vector<1x1x1x12x32xbf16>
    %93 = vector.shape_cast %92 : vector<1x1x1x12x32xbf16> to vector<12x32xbf16>
    %cst_92 = arith.constant dense<0.000000e+00> : vector<8x32xf32>
    %94 = tpu.matmul %1, %89, %cst_92 {dimension_numbers = #tpu.dot_dimension_numbers<[1], [0], [0], [1], [0, 0, 1, 1], [], []>} : vector<8x12xbf16>, vector<12x32xbf16>, vector<8x32xf32> -> vector<8x32xf32>
    %cst_93 = arith.constant dense<0.000000e+00> : vector<8x32xf32>
    %95 = tpu.matmul %3, %91, %cst_93 {dimension_numbers = #tpu.dot_dimension_numbers<[1], [0], [0], [1], [0, 0, 1, 1], [], []>} : vector<8x12xbf16>, vector<12x32xbf16>, vector<8x32xf32> -> vector<8x32xf32>
    %96 = arith.addf %94, %95 : vector<8x32xf32>
    %cst_94 = arith.constant dense<0.000000e+00> : vector<8x32xf32>
    %97 = tpu.matmul %5, %91, %cst_94 {dimension_numbers = #tpu.dot_dimension_numbers<[1], [0], [0], [1], [0, 0, 1, 1], [], []>} : vector<8x12xbf16>, vector<12x32xbf16>, vector<8x32xf32> -> vector<8x32xf32>
    %cst_95 = arith.constant dense<0.000000e+00> : vector<8x32xf32>
    %98 = tpu.matmul %7, %93, %cst_95 {dimension_numbers = #tpu.dot_dimension_numbers<[1], [0], [0], [1], [0, 0, 1, 1], [], []>} : vector<8x12xbf16>, vector<12x32xbf16>, vector<8x32xf32> -> vector<8x32xf32>
    %99 = arith.addf %97, %98 : vector<8x32xf32>
    %100 = arith.truncf %96 : vector<8x32xf32> to vector<8x32xbf16>
    %c0_96 = arith.constant 0 : index
    %c0_97 = arith.constant 0 : index
    %c192 = arith.constant 192 : index
    %101 = vector.load %arg4[%c0_96, %c0_97, %c192] : memref<1x8x1024xbf16, #tpu.memory_space<vmem>>, vector<1x8x32xbf16>
    %102 = vector.shape_cast %101 : vector<1x8x32xbf16> to vector<8x32xbf16>
    %103 = vector.shape_cast %100 : vector<8x32xbf16> to vector<1x8x32xbf16>
    tpu.vector_store %arg4[%c0_96, %c0_97, %c192], %103 {strides = array<i32>} : memref<1x8x1024xbf16, #tpu.memory_space<vmem>>, vector<1x8x32xbf16>,
    %104 = arith.truncf %99 : vector<8x32xf32> to vector<8x32xbf16>
    %c0_98 = arith.constant 0 : index
    %c0_99 = arith.constant 0 : index
    %c224 = arith.constant 224 : index
    %105 = vector.load %arg4[%c0_98, %c0_99, %c224] : memref<1x8x1024xbf16, #tpu.memory_space<vmem>>, vector<1x8x32xbf16>
    %106 = vector.shape_cast %105 : vector<1x8x32xbf16> to vector<8x32xbf16>
    %107 = vector.shape_cast %104 : vector<8x32xbf16> to vector<1x8x32xbf16>
    tpu.vector_store %arg4[%c0_98, %c0_99, %c224], %107 {strides = array<i32>} : memref<1x8x1024xbf16, #tpu.memory_space<vmem>>, vector<1x8x32xbf16>,
    %108 = arith.addf %83, %96 : vector<8x32xf32>
    %109 = arith.addf %108, %99 : vector<8x32xf32>
    %110 = arith.mulf %96, %96 : vector<8x32xf32>
    %111 = arith.addf %87, %110 : vector<8x32xf32>
    %112 = arith.mulf %99, %99 : vector<8x32xf32>
    %113 = arith.addf %111, %112 : vector<8x32xf32>
    %c0_100 = arith.constant 0 : index
    %c0_101 = arith.constant 0 : index
    %c4_102 = arith.constant 4 : index
    %c0_103 = arith.constant 0 : index
    %c0_104 = arith.constant 0 : index
    %114 = vector.load %arg2[%c0_100, %c0_101, %c4_102, %c0_103, %c0_104] : memref<1x1x18x12x32xbf16, #tpu.memory_space<vmem>>, vector<1x1x1x12x32xbf16>
    %115 = vector.shape_cast %114 : vector<1x1x1x12x32xbf16> to vector<12x32xbf16>
    %c0_105 = arith.constant 0 : index
    %c0_106 = arith.constant 0 : index
    %c5_107 = arith.constant 5 : index
    %c0_108 = arith.constant 0 : index
    %c0_109 = arith.constant 0 : index
    %116 = vector.load %arg2[%c0_105, %c0_106, %c5_107, %c0_108, %c0_109] : memref<1x1x18x12x32xbf16, #tpu.memory_space<vmem>>, vector<1x1x1x12x32xbf16>
    %117 = vector.shape_cast %116 : vector<1x1x1x12x32xbf16> to vector<12x32xbf16>
    %c0_110 = arith.constant 0 : index
    %c0_111 = arith.constant 0 : index
    %c6 = arith.constant 6 : index
    %c0_112 = arith.constant 0 : index
    %c0_113 = arith.constant 0 : index
    %118 = vector.load %arg2[%c0_110, %c0_111, %c6, %c0_112, %c0_113] : memref<1x1x18x12x32xbf16, #tpu.memory_space<vmem>>, vector<1x1x1x12x32xbf16>
    %119 = vector.shape_cast %118 : vector<1x1x1x12x32xbf16> to vector<12x32xbf16>
    %cst_114 = arith.constant dense<0.000000e+00> : vector<8x32xf32>
    %120 = tpu.matmul %1, %115, %cst_114 {dimension_numbers = #tpu.dot_dimension_numbers<[1], [0], [0], [1], [0, 0, 1, 1], [], []>} : vector<8x12xbf16>, vector<12x32xbf16>, vector<8x32xf32> -> vector<8x32xf32>
    %cst_115 = arith.constant dense<0.000000e+00> : vector<8x32xf32>
    %121 = tpu.matmul %3, %117, %cst_115 {dimension_numbers = #tpu.dot_dimension_numbers<[1], [0], [0], [1], [0, 0, 1, 1], [], []>} : vector<8x12xbf16>, vector<12x32xbf16>, vector<8x32xf32> -> vector<8x32xf32>
    %122 = arith.addf %120, %121 : vector<8x32xf32>
    %cst_116 = arith.constant dense<0.000000e+00> : vector<8x32xf32>
    %123 = tpu.matmul %5, %117, %cst_116 {dimension_numbers = #tpu.dot_dimension_numbers<[1], [0], [0], [1], [0, 0, 1, 1], [], []>} : vector<8x12xbf16>, vector<12x32xbf16>, vector<8x32xf32> -> vector<8x32xf32>
    %cst_117 = arith.constant dense<0.000000e+00> : vector<8x32xf32>
    %124 = tpu.matmul %7, %119, %cst_117 {dimension_numbers = #tpu.dot_dimension_numbers<[1], [0], [0], [1], [0, 0, 1, 1], [], []>} : vector<8x12xbf16>, vector<12x32xbf16>, vector<8x32xf32> -> vector<8x32xf32>
    %125 = arith.addf %123, %124 : vector<8x32xf32>
    %126 = arith.truncf %122 : vector<8x32xf32> to vector<8x32xbf16>
    %c0_118 = arith.constant 0 : index
    %c0_119 = arith.constant 0 : index
    %c256 = arith.constant 256 : index
    %127 = vector.load %arg4[%c0_118, %c0_119, %c256] : memref<1x8x1024xbf16, #tpu.memory_space<vmem>>, vector<1x8x32xbf16>
    %128 = vector.shape_cast %127 : vector<1x8x32xbf16> to vector<8x32xbf16>
    %129 = vector.shape_cast %126 : vector<8x32xbf16> to vector<1x8x32xbf16>
    tpu.vector_store %arg4[%c0_118, %c0_119, %c256], %129 {strides = array<i32>} : memref<1x8x1024xbf16, #tpu.memory_space<vmem>>, vector<1x8x32xbf16>,
    %130 = arith.truncf %125 : vector<8x32xf32> to vector<8x32xbf16>
    %c0_120 = arith.constant 0 : index
    %c0_121 = arith.constant 0 : index
    %c288 = arith.constant 288 : index
    %131 = vector.load %arg4[%c0_120, %c0_121, %c288] : memref<1x8x1024xbf16, #tpu.memory_space<vmem>>, vector<1x8x32xbf16>
    %132 = vector.shape_cast %131 : vector<1x8x32xbf16> to vector<8x32xbf16>
    %133 = vector.shape_cast %130 : vector<8x32xbf16> to vector<1x8x32xbf16>
    tpu.vector_store %arg4[%c0_120, %c0_121, %c288], %133 {strides = array<i32>} : memref<1x8x1024xbf16, #tpu.memory_space<vmem>>, vector<1x8x32xbf16>,
    %134 = arith.addf %109, %122 : vector<8x32xf32>
    %135 = arith.addf %134, %125 : vector<8x32xf32>
    %136 = arith.mulf %122, %122 : vector<8x32xf32>
    %137 = arith.addf %113, %136 : vector<8x32xf32>
    %138 = arith.mulf %125, %125 : vector<8x32xf32>
    %139 = arith.addf %137, %138 : vector<8x32xf32>
    %c0_122 = arith.constant 0 : index
    %c0_123 = arith.constant 0 : index
    %c5_124 = arith.constant 5 : index
    %c0_125 = arith.constant 0 : index
    %c0_126 = arith.constant 0 : index
    %140 = vector.load %arg2[%c0_122, %c0_123, %c5_124, %c0_125, %c0_126] : memref<1x1x18x12x32xbf16, #tpu.memory_space<vmem>>, vector<1x1x1x12x32xbf16>
    %141 = vector.shape_cast %140 : vector<1x1x1x12x32xbf16> to vector<12x32xbf16>
    %c0_127 = arith.constant 0 : index
    %c0_128 = arith.constant 0 : index
    %c6_129 = arith.constant 6 : index
    %c0_130 = arith.constant 0 : index
    %c0_131 = arith.constant 0 : index
    %142 = vector.load %arg2[%c0_127, %c0_128, %c6_129, %c0_130, %c0_131] : memref<1x1x18x12x32xbf16, #tpu.memory_space<vmem>>, vector<1x1x1x12x32xbf16>
    %143 = vector.shape_cast %142 : vector<1x1x1x12x32xbf16> to vector<12x32xbf16>
    %c0_132 = arith.constant 0 : index
    %c0_133 = arith.constant 0 : index
    %c7 = arith.constant 7 : index
    %c0_134 = arith.constant 0 : index
    %c0_135 = arith.constant 0 : index
    %144 = vector.load %arg2[%c0_132, %c0_133, %c7, %c0_134, %c0_135] : memref<1x1x18x12x32xbf16, #tpu.memory_space<vmem>>, vector<1x1x1x12x32xbf16>
    %145 = vector.shape_cast %144 : vector<1x1x1x12x32xbf16> to vector<12x32xbf16>
    %cst_136 = arith.constant dense<0.000000e+00> : vector<8x32xf32>
    %146 = tpu.matmul %1, %141, %cst_136 {dimension_numbers = #tpu.dot_dimension_numbers<[1], [0], [0], [1], [0, 0, 1, 1], [], []>} : vector<8x12xbf16>, vector<12x32xbf16>, vector<8x32xf32> -> vector<8x32xf32>
    %cst_137 = arith.constant dense<0.000000e+00> : vector<8x32xf32>
    %147 = tpu.matmul %3, %143, %cst_137 {dimension_numbers = #tpu.dot_dimension_numbers<[1], [0], [0], [1], [0, 0, 1, 1], [], []>} : vector<8x12xbf16>, vector<12x32xbf16>, vector<8x32xf32> -> vector<8x32xf32>
    %148 = arith.addf %146, %147 : vector<8x32xf32>
    %cst_138 = arith.constant dense<0.000000e+00> : vector<8x32xf32>
    %149 = tpu.matmul %5, %143, %cst_138 {dimension_numbers = #tpu.dot_dimension_numbers<[1], [0], [0], [1], [0, 0, 1, 1], [], []>} : vector<8x12xbf16>, vector<12x32xbf16>, vector<8x32xf32> -> vector<8x32xf32>
    %cst_139 = arith.constant dense<0.000000e+00> : vector<8x32xf32>
    %150 = tpu.matmul %7, %145, %cst_139 {dimension_numbers = #tpu.dot_dimension_numbers<[1], [0], [0], [1], [0, 0, 1, 1], [], []>} : vector<8x12xbf16>, vector<12x32xbf16>, vector<8x32xf32> -> vector<8x32xf32>
    %151 = arith.addf %149, %150 : vector<8x32xf32>
    %152 = arith.truncf %148 : vector<8x32xf32> to vector<8x32xbf16>
    %c0_140 = arith.constant 0 : index
    %c0_141 = arith.constant 0 : index
    %c320 = arith.constant 320 : index
    %153 = vector.load %arg4[%c0_140, %c0_141, %c320] : memref<1x8x1024xbf16, #tpu.memory_space<vmem>>, vector<1x8x32xbf16>
    %154 = vector.shape_cast %153 : vector<1x8x32xbf16> to vector<8x32xbf16>
    %155 = vector.shape_cast %152 : vector<8x32xbf16> to vector<1x8x32xbf16>
    tpu.vector_store %arg4[%c0_140, %c0_141, %c320], %155 {strides = array<i32>} : memref<1x8x1024xbf16, #tpu.memory_space<vmem>>, vector<1x8x32xbf16>,
    %156 = arith.truncf %151 : vector<8x32xf32> to vector<8x32xbf16>
    %c0_142 = arith.constant 0 : index
    %c0_143 = arith.constant 0 : index
    %c352 = arith.constant 352 : index
    %157 = vector.load %arg4[%c0_142, %c0_143, %c352] : memref<1x8x1024xbf16, #tpu.memory_space<vmem>>, vector<1x8x32xbf16>
    %158 = vector.shape_cast %157 : vector<1x8x32xbf16> to vector<8x32xbf16>
    %159 = vector.shape_cast %156 : vector<8x32xbf16> to vector<1x8x32xbf16>
    tpu.vector_store %arg4[%c0_142, %c0_143, %c352], %159 {strides = array<i32>} : memref<1x8x1024xbf16, #tpu.memory_space<vmem>>, vector<1x8x32xbf16>,
    %160 = arith.addf %135, %148 : vector<8x32xf32>
    %161 = arith.addf %160, %151 : vector<8x32xf32>
    %162 = arith.mulf %148, %148 : vector<8x32xf32>
    %163 = arith.addf %139, %162 : vector<8x32xf32>
    %164 = arith.mulf %151, %151 : vector<8x32xf32>
    %165 = arith.addf %163, %164 : vector<8x32xf32>
    %c0_144 = arith.constant 0 : index
    %c0_145 = arith.constant 0 : index
    %c6_146 = arith.constant 6 : index
    %c0_147 = arith.constant 0 : index
    %c0_148 = arith.constant 0 : index
    %166 = vector.load %arg2[%c0_144, %c0_145, %c6_146, %c0_147, %c0_148] : memref<1x1x18x12x32xbf16, #tpu.memory_space<vmem>>, vector<1x1x1x12x32xbf16>
    %167 = vector.shape_cast %166 : vector<1x1x1x12x32xbf16> to vector<12x32xbf16>
    %c0_149 = arith.constant 0 : index
    %c0_150 = arith.constant 0 : index
    %c7_151 = arith.constant 7 : index
    %c0_152 = arith.constant 0 : index
    %c0_153 = arith.constant 0 : index
    %168 = vector.load %arg2[%c0_149, %c0_150, %c7_151, %c0_152, %c0_153] : memref<1x1x18x12x32xbf16, #tpu.memory_space<vmem>>, vector<1x1x1x12x32xbf16>
    %169 = vector.shape_cast %168 : vector<1x1x1x12x32xbf16> to vector<12x32xbf16>
    %c0_154 = arith.constant 0 : index
    %c0_155 = arith.constant 0 : index
    %c8 = arith.constant 8 : index
    %c0_156 = arith.constant 0 : index
    %c0_157 = arith.constant 0 : index
    %170 = vector.load %arg2[%c0_154, %c0_155, %c8, %c0_156, %c0_157] : memref<1x1x18x12x32xbf16, #tpu.memory_space<vmem>>, vector<1x1x1x12x32xbf16>
    %171 = vector.shape_cast %170 : vector<1x1x1x12x32xbf16> to vector<12x32xbf16>
    %cst_158 = arith.constant dense<0.000000e+00> : vector<8x32xf32>
    %172 = tpu.matmul %1, %167, %cst_158 {dimension_numbers = #tpu.dot_dimension_numbers<[1], [0], [0], [1], [0, 0, 1, 1], [], []>} : vector<8x12xbf16>, vector<12x32xbf16>, vector<8x32xf32> -> vector<8x32xf32>
    %cst_159 = arith.constant dense<0.000000e+00> : vector<8x32xf32>
    %173 = tpu.matmul %3, %169, %cst_159 {dimension_numbers = #tpu.dot_dimension_numbers<[1], [0], [0], [1], [0, 0, 1, 1], [], []>} : vector<8x12xbf16>, vector<12x32xbf16>, vector<8x32xf32> -> vector<8x32xf32>
    %174 = arith.addf %172, %173 : vector<8x32xf32>
    %cst_160 = arith.constant dense<0.000000e+00> : vector<8x32xf32>
    %175 = tpu.matmul %5, %169, %cst_160 {dimension_numbers = #tpu.dot_dimension_numbers<[1], [0], [0], [1], [0, 0, 1, 1], [], []>} : vector<8x12xbf16>, vector<12x32xbf16>, vector<8x32xf32> -> vector<8x32xf32>
    %cst_161 = arith.constant dense<0.000000e+00> : vector<8x32xf32>
    %176 = tpu.matmul %7, %171, %cst_161 {dimension_numbers = #tpu.dot_dimension_numbers<[1], [0], [0], [1], [0, 0, 1, 1], [], []>} : vector<8x12xbf16>, vector<12x32xbf16>, vector<8x32xf32> -> vector<8x32xf32>
    %177 = arith.addf %175, %176 : vector<8x32xf32>
    %178 = arith.truncf %174 : vector<8x32xf32> to vector<8x32xbf16>
    %c0_162 = arith.constant 0 : index
    %c0_163 = arith.constant 0 : index
    %c384 = arith.constant 384 : index
    %179 = vector.load %arg4[%c0_162, %c0_163, %c384] : memref<1x8x1024xbf16, #tpu.memory_space<vmem>>, vector<1x8x32xbf16>
    %180 = vector.shape_cast %179 : vector<1x8x32xbf16> to vector<8x32xbf16>
    %181 = vector.shape_cast %178 : vector<8x32xbf16> to vector<1x8x32xbf16>
    tpu.vector_store %arg4[%c0_162, %c0_163, %c384], %181 {strides = array<i32>} : memref<1x8x1024xbf16, #tpu.memory_space<vmem>>, vector<1x8x32xbf16>,
    %182 = arith.truncf %177 : vector<8x32xf32> to vector<8x32xbf16>
    %c0_164 = arith.constant 0 : index
    %c0_165 = arith.constant 0 : index
    %c416 = arith.constant 416 : index
    %183 = vector.load %arg4[%c0_164, %c0_165, %c416] : memref<1x8x1024xbf16, #tpu.memory_space<vmem>>, vector<1x8x32xbf16>
    %184 = vector.shape_cast %183 : vector<1x8x32xbf16> to vector<8x32xbf16>
    %185 = vector.shape_cast %182 : vector<8x32xbf16> to vector<1x8x32xbf16>
    tpu.vector_store %arg4[%c0_164, %c0_165, %c416], %185 {strides = array<i32>} : memref<1x8x1024xbf16, #tpu.memory_space<vmem>>, vector<1x8x32xbf16>,
    %186 = arith.addf %161, %174 : vector<8x32xf32>
    %187 = arith.addf %186, %177 : vector<8x32xf32>
    %188 = arith.mulf %174, %174 : vector<8x32xf32>
    %189 = arith.addf %165, %188 : vector<8x32xf32>
    %190 = arith.mulf %177, %177 : vector<8x32xf32>
    %191 = arith.addf %189, %190 : vector<8x32xf32>
    %c0_166 = arith.constant 0 : index
    %c0_167 = arith.constant 0 : index
    %c7_168 = arith.constant 7 : index
    %c0_169 = arith.constant 0 : index
    %c0_170 = arith.constant 0 : index
    %192 = vector.load %arg2[%c0_166, %c0_167, %c7_168, %c0_169, %c0_170] : memref<1x1x18x12x32xbf16, #tpu.memory_space<vmem>>, vector<1x1x1x12x32xbf16>
    %193 = vector.shape_cast %192 : vector<1x1x1x12x32xbf16> to vector<12x32xbf16>
    %c0_171 = arith.constant 0 : index
    %c0_172 = arith.constant 0 : index
    %c8_173 = arith.constant 8 : index
    %c0_174 = arith.constant 0 : index
    %c0_175 = arith.constant 0 : index
    %194 = vector.load %arg2[%c0_171, %c0_172, %c8_173, %c0_174, %c0_175] : memref<1x1x18x12x32xbf16, #tpu.memory_space<vmem>>, vector<1x1x1x12x32xbf16>
    %195 = vector.shape_cast %194 : vector<1x1x1x12x32xbf16> to vector<12x32xbf16>
    %c0_176 = arith.constant 0 : index
    %c0_177 = arith.constant 0 : index
    %c9 = arith.constant 9 : index
    %c0_178 = arith.constant 0 : index
    %c0_179 = arith.constant 0 : index
    %196 = vector.load %arg2[%c0_176, %c0_177, %c9, %c0_178, %c0_179] : memref<1x1x18x12x32xbf16, #tpu.memory_space<vmem>>, vector<1x1x1x12x32xbf16>
    %197 = vector.shape_cast %196 : vector<1x1x1x12x32xbf16> to vector<12x32xbf16>
    %cst_180 = arith.constant dense<0.000000e+00> : vector<8x32xf32>
    %198 = tpu.matmul %1, %193, %cst_180 {dimension_numbers = #tpu.dot_dimension_numbers<[1], [0], [0], [1], [0, 0, 1, 1], [], []>} : vector<8x12xbf16>, vector<12x32xbf16>, vector<8x32xf32> -> vector<8x32xf32>
    %cst_181 = arith.constant dense<0.000000e+00> : vector<8x32xf32>
    %199 = tpu.matmul %3, %195, %cst_181 {dimension_numbers = #tpu.dot_dimension_numbers<[1], [0], [0], [1], [0, 0, 1, 1], [], []>} : vector<8x12xbf16>, vector<12x32xbf16>, vector<8x32xf32> -> vector<8x32xf32>
    %200 = arith.addf %198, %199 : vector<8x32xf32>
    %cst_182 = arith.constant dense<0.000000e+00> : vector<8x32xf32>
    %201 = tpu.matmul %5, %195, %cst_182 {dimension_numbers = #tpu.dot_dimension_numbers<[1], [0], [0], [1], [0, 0, 1, 1], [], []>} : vector<8x12xbf16>, vector<12x32xbf16>, vector<8x32xf32> -> vector<8x32xf32>
    %cst_183 = arith.constant dense<0.000000e+00> : vector<8x32xf32>
    %202 = tpu.matmul %7, %197, %cst_183 {dimension_numbers = #tpu.dot_dimension_numbers<[1], [0], [0], [1], [0, 0, 1, 1], [], []>} : vector<8x12xbf16>, vector<12x32xbf16>, vector<8x32xf32> -> vector<8x32xf32>
    %203 = arith.addf %201, %202 : vector<8x32xf32>
    %204 = arith.truncf %200 : vector<8x32xf32> to vector<8x32xbf16>
    %c0_184 = arith.constant 0 : index
    %c0_185 = arith.constant 0 : index
    %c448 = arith.constant 448 : index
    %205 = vector.load %arg4[%c0_184, %c0_185, %c448] : memref<1x8x1024xbf16, #tpu.memory_space<vmem>>, vector<1x8x32xbf16>
    %206 = vector.shape_cast %205 : vector<1x8x32xbf16> to vector<8x32xbf16>
    %207 = vector.shape_cast %204 : vector<8x32xbf16> to vector<1x8x32xbf16>
    tpu.vector_store %arg4[%c0_184, %c0_185, %c448], %207 {strides = array<i32>} : memref<1x8x1024xbf16, #tpu.memory_space<vmem>>, vector<1x8x32xbf16>,
    %208 = arith.truncf %203 : vector<8x32xf32> to vector<8x32xbf16>
    %c0_186 = arith.constant 0 : index
    %c0_187 = arith.constant 0 : index
    %c480 = arith.constant 480 : index
    %209 = vector.load %arg4[%c0_186, %c0_187, %c480] : memref<1x8x1024xbf16, #tpu.memory_space<vmem>>, vector<1x8x32xbf16>
    %210 = vector.shape_cast %209 : vector<1x8x32xbf16> to vector<8x32xbf16>
    %211 = vector.shape_cast %208 : vector<8x32xbf16> to vector<1x8x32xbf16>
    tpu.vector_store %arg4[%c0_186, %c0_187, %c480], %211 {strides = array<i32>} : memref<1x8x1024xbf16, #tpu.memory_space<vmem>>, vector<1x8x32xbf16>,
    %212 = arith.addf %187, %200 : vector<8x32xf32>
    %213 = arith.addf %212, %203 : vector<8x32xf32>
    %214 = arith.mulf %200, %200 : vector<8x32xf32>
    %215 = arith.addf %191, %214 : vector<8x32xf32>
    %216 = arith.mulf %203, %203 : vector<8x32xf32>
    %217 = arith.addf %215, %216 : vector<8x32xf32>
    %c0_188 = arith.constant 0 : index
    %c0_189 = arith.constant 0 : index
    %c8_190 = arith.constant 8 : index
    %c0_191 = arith.constant 0 : index
    %c0_192 = arith.constant 0 : index
    %218 = vector.load %arg2[%c0_188, %c0_189, %c8_190, %c0_191, %c0_192] : memref<1x1x18x12x32xbf16, #tpu.memory_space<vmem>>, vector<1x1x1x12x32xbf16>
    %219 = vector.shape_cast %218 : vector<1x1x1x12x32xbf16> to vector<12x32xbf16>
    %c0_193 = arith.constant 0 : index
    %c0_194 = arith.constant 0 : index
    %c9_195 = arith.constant 9 : index
    %c0_196 = arith.constant 0 : index
    %c0_197 = arith.constant 0 : index
    %220 = vector.load %arg2[%c0_193, %c0_194, %c9_195, %c0_196, %c0_197] : memref<1x1x18x12x32xbf16, #tpu.memory_space<vmem>>, vector<1x1x1x12x32xbf16>
    %221 = vector.shape_cast %220 : vector<1x1x1x12x32xbf16> to vector<12x32xbf16>
    %c0_198 = arith.constant 0 : index
    %c0_199 = arith.constant 0 : index
    %c10 = arith.constant 10 : index
    %c0_200 = arith.constant 0 : index
    %c0_201 = arith.constant 0 : index
    %222 = vector.load %arg2[%c0_198, %c0_199, %c10, %c0_200, %c0_201] : memref<1x1x18x12x32xbf16, #tpu.memory_space<vmem>>, vector<1x1x1x12x32xbf16>
    %223 = vector.shape_cast %222 : vector<1x1x1x12x32xbf16> to vector<12x32xbf16>
    %cst_202 = arith.constant dense<0.000000e+00> : vector<8x32xf32>
    %224 = tpu.matmul %1, %219, %cst_202 {dimension_numbers = #tpu.dot_dimension_numbers<[1], [0], [0], [1], [0, 0, 1, 1], [], []>} : vector<8x12xbf16>, vector<12x32xbf16>, vector<8x32xf32> -> vector<8x32xf32>
    %cst_203 = arith.constant dense<0.000000e+00> : vector<8x32xf32>
    %225 = tpu.matmul %3, %221, %cst_203 {dimension_numbers = #tpu.dot_dimension_numbers<[1], [0], [0], [1], [0, 0, 1, 1], [], []>} : vector<8x12xbf16>, vector<12x32xbf16>, vector<8x32xf32> -> vector<8x32xf32>
    %226 = arith.addf %224, %225 : vector<8x32xf32>
    %cst_204 = arith.constant dense<0.000000e+00> : vector<8x32xf32>
    %227 = tpu.matmul %5, %221, %cst_204 {dimension_numbers = #tpu.dot_dimension_numbers<[1], [0], [0], [1], [0, 0, 1, 1], [], []>} : vector<8x12xbf16>, vector<12x32xbf16>, vector<8x32xf32> -> vector<8x32xf32>
    %cst_205 = arith.constant dense<0.000000e+00> : vector<8x32xf32>
    %228 = tpu.matmul %7, %223, %cst_205 {dimension_numbers = #tpu.dot_dimension_numbers<[1], [0], [0], [1], [0, 0, 1, 1], [], []>} : vector<8x12xbf16>, vector<12x32xbf16>, vector<8x32xf32> -> vector<8x32xf32>
    %229 = arith.addf %227, %228 : vector<8x32xf32>
    %230 = arith.truncf %226 : vector<8x32xf32> to vector<8x32xbf16>
    %c0_206 = arith.constant 0 : index
    %c0_207 = arith.constant 0 : index
    %c512 = arith.constant 512 : index
    %231 = vector.load %arg4[%c0_206, %c0_207, %c512] : memref<1x8x1024xbf16, #tpu.memory_space<vmem>>, vector<1x8x32xbf16>
    %232 = vector.shape_cast %231 : vector<1x8x32xbf16> to vector<8x32xbf16>
    %233 = vector.shape_cast %230 : vector<8x32xbf16> to vector<1x8x32xbf16>
    tpu.vector_store %arg4[%c0_206, %c0_207, %c512], %233 {strides = array<i32>} : memref<1x8x1024xbf16, #tpu.memory_space<vmem>>, vector<1x8x32xbf16>,
    %234 = arith.truncf %229 : vector<8x32xf32> to vector<8x32xbf16>
    %c0_208 = arith.constant 0 : index
    %c0_209 = arith.constant 0 : index
    %c544 = arith.constant 544 : index
    %235 = vector.load %arg4[%c0_208, %c0_209, %c544] : memref<1x8x1024xbf16, #tpu.memory_space<vmem>>, vector<1x8x32xbf16>
    %236 = vector.shape_cast %235 : vector<1x8x32xbf16> to vector<8x32xbf16>
    %237 = vector.shape_cast %234 : vector<8x32xbf16> to vector<1x8x32xbf16>
    tpu.vector_store %arg4[%c0_208, %c0_209, %c544], %237 {strides = array<i32>} : memref<1x8x1024xbf16, #tpu.memory_space<vmem>>, vector<1x8x32xbf16>,
    %238 = arith.addf %213, %226 : vector<8x32xf32>
    %239 = arith.addf %238, %229 : vector<8x32xf32>
    %240 = arith.mulf %226, %226 : vector<8x32xf32>
    %241 = arith.addf %217, %240 : vector<8x32xf32>
    %242 = arith.mulf %229, %229 : vector<8x32xf32>
    %243 = arith.addf %241, %242 : vector<8x32xf32>
    %c0_210 = arith.constant 0 : index
    %c0_211 = arith.constant 0 : index
    %c9_212 = arith.constant 9 : index
    %c0_213 = arith.constant 0 : index
    %c0_214 = arith.constant 0 : index
    %244 = vector.load %arg2[%c0_210, %c0_211, %c9_212, %c0_213, %c0_214] : memref<1x1x18x12x32xbf16, #tpu.memory_space<vmem>>, vector<1x1x1x12x32xbf16>
    %245 = vector.shape_cast %244 : vector<1x1x1x12x32xbf16> to vector<12x32xbf16>
    %c0_215 = arith.constant 0 : index
    %c0_216 = arith.constant 0 : index
    %c10_217 = arith.constant 10 : index
    %c0_218 = arith.constant 0 : index
    %c0_219 = arith.constant 0 : index
    %246 = vector.load %arg2[%c0_215, %c0_216, %c10_217, %c0_218, %c0_219] : memref<1x1x18x12x32xbf16, #tpu.memory_space<vmem>>, vector<1x1x1x12x32xbf16>
    %247 = vector.shape_cast %246 : vector<1x1x1x12x32xbf16> to vector<12x32xbf16>
    %c0_220 = arith.constant 0 : index
    %c0_221 = arith.constant 0 : index
    %c11 = arith.constant 11 : index
    %c0_222 = arith.constant 0 : index
    %c0_223 = arith.constant 0 : index
    %248 = vector.load %arg2[%c0_220, %c0_221, %c11, %c0_222, %c0_223] : memref<1x1x18x12x32xbf16, #tpu.memory_space<vmem>>, vector<1x1x1x12x32xbf16>
    %249 = vector.shape_cast %248 : vector<1x1x1x12x32xbf16> to vector<12x32xbf16>
    %cst_224 = arith.constant dense<0.000000e+00> : vector<8x32xf32>
    %250 = tpu.matmul %1, %245, %cst_224 {dimension_numbers = #tpu.dot_dimension_numbers<[1], [0], [0], [1], [0, 0, 1, 1], [], []>} : vector<8x12xbf16>, vector<12x32xbf16>, vector<8x32xf32> -> vector<8x32xf32>
    %cst_225 = arith.constant dense<0.000000e+00> : vector<8x32xf32>
    %251 = tpu.matmul %3, %247, %cst_225 {dimension_numbers = #tpu.dot_dimension_numbers<[1], [0], [0], [1], [0, 0, 1, 1], [], []>} : vector<8x12xbf16>, vector<12x32xbf16>, vector<8x32xf32> -> vector<8x32xf32>
    %252 = arith.addf %250, %251 : vector<8x32xf32>
    %cst_226 = arith.constant dense<0.000000e+00> : vector<8x32xf32>
    %253 = tpu.matmul %5, %247, %cst_226 {dimension_numbers = #tpu.dot_dimension_numbers<[1], [0], [0], [1], [0, 0, 1, 1], [], []>} : vector<8x12xbf16>, vector<12x32xbf16>, vector<8x32xf32> -> vector<8x32xf32>
    %cst_227 = arith.constant dense<0.000000e+00> : vector<8x32xf32>
    %254 = tpu.matmul %7, %249, %cst_227 {dimension_numbers = #tpu.dot_dimension_numbers<[1], [0], [0], [1], [0, 0, 1, 1], [], []>} : vector<8x12xbf16>, vector<12x32xbf16>, vector<8x32xf32> -> vector<8x32xf32>
    %255 = arith.addf %253, %254 : vector<8x32xf32>
    %256 = arith.truncf %252 : vector<8x32xf32> to vector<8x32xbf16>
    %c0_228 = arith.constant 0 : index
    %c0_229 = arith.constant 0 : index
    %c576 = arith.constant 576 : index
    %257 = vector.load %arg4[%c0_228, %c0_229, %c576] : memref<1x8x1024xbf16, #tpu.memory_space<vmem>>, vector<1x8x32xbf16>
    %258 = vector.shape_cast %257 : vector<1x8x32xbf16> to vector<8x32xbf16>
    %259 = vector.shape_cast %256 : vector<8x32xbf16> to vector<1x8x32xbf16>
    tpu.vector_store %arg4[%c0_228, %c0_229, %c576], %259 {strides = array<i32>} : memref<1x8x1024xbf16, #tpu.memory_space<vmem>>, vector<1x8x32xbf16>,
    %260 = arith.truncf %255 : vector<8x32xf32> to vector<8x32xbf16>
    %c0_230 = arith.constant 0 : index
    %c0_231 = arith.constant 0 : index
    %c608 = arith.constant 608 : index
    %261 = vector.load %arg4[%c0_230, %c0_231, %c608] : memref<1x8x1024xbf16, #tpu.memory_space<vmem>>, vector<1x8x32xbf16>
    %262 = vector.shape_cast %261 : vector<1x8x32xbf16> to vector<8x32xbf16>
    %263 = vector.shape_cast %260 : vector<8x32xbf16> to vector<1x8x32xbf16>
    tpu.vector_store %arg4[%c0_230, %c0_231, %c608], %263 {strides = array<i32>} : memref<1x8x1024xbf16, #tpu.memory_space<vmem>>, vector<1x8x32xbf16>,
    %264 = arith.addf %239, %252 : vector<8x32xf32>
    %265 = arith.addf %264, %255 : vector<8x32xf32>
    %266 = arith.mulf %252, %252 : vector<8x32xf32>
    %267 = arith.addf %243, %266 : vector<8x32xf32>
    %268 = arith.mulf %255, %255 : vector<8x32xf32>
    %269 = arith.addf %267, %268 : vector<8x32xf32>
    %c0_232 = arith.constant 0 : index
    %c0_233 = arith.constant 0 : index
    %c10_234 = arith.constant 10 : index
    %c0_235 = arith.constant 0 : index
    %c0_236 = arith.constant 0 : index
    %270 = vector.load %arg2[%c0_232, %c0_233, %c10_234, %c0_235, %c0_236] : memref<1x1x18x12x32xbf16, #tpu.memory_space<vmem>>, vector<1x1x1x12x32xbf16>
    %271 = vector.shape_cast %270 : vector<1x1x1x12x32xbf16> to vector<12x32xbf16>
    %c0_237 = arith.constant 0 : index
    %c0_238 = arith.constant 0 : index
    %c11_239 = arith.constant 11 : index
    %c0_240 = arith.constant 0 : index
    %c0_241 = arith.constant 0 : index
    %272 = vector.load %arg2[%c0_237, %c0_238, %c11_239, %c0_240, %c0_241] : memref<1x1x18x12x32xbf16, #tpu.memory_space<vmem>>, vector<1x1x1x12x32xbf16>
    %273 = vector.shape_cast %272 : vector<1x1x1x12x32xbf16> to vector<12x32xbf16>
    %c0_242 = arith.constant 0 : index
    %c0_243 = arith.constant 0 : index
    %c12 = arith.constant 12 : index
    %c0_244 = arith.constant 0 : index
    %c0_245 = arith.constant 0 : index
    %274 = vector.load %arg2[%c0_242, %c0_243, %c12, %c0_244, %c0_245] : memref<1x1x18x12x32xbf16, #tpu.memory_space<vmem>>, vector<1x1x1x12x32xbf16>
    %275 = vector.shape_cast %274 : vector<1x1x1x12x32xbf16> to vector<12x32xbf16>
    %cst_246 = arith.constant dense<0.000000e+00> : vector<8x32xf32>
    %276 = tpu.matmul %1, %271, %cst_246 {dimension_numbers = #tpu.dot_dimension_numbers<[1], [0], [0], [1], [0, 0, 1, 1], [], []>} : vector<8x12xbf16>, vector<12x32xbf16>, vector<8x32xf32> -> vector<8x32xf32>
    %cst_247 = arith.constant dense<0.000000e+00> : vector<8x32xf32>
    %277 = tpu.matmul %3, %273, %cst_247 {dimension_numbers = #tpu.dot_dimension_numbers<[1], [0], [0], [1], [0, 0, 1, 1], [], []>} : vector<8x12xbf16>, vector<12x32xbf16>, vector<8x32xf32> -> vector<8x32xf32>
    %278 = arith.addf %276, %277 : vector<8x32xf32>
    %cst_248 = arith.constant dense<0.000000e+00> : vector<8x32xf32>
    %279 = tpu.matmul %5, %273, %cst_248 {dimension_numbers = #tpu.dot_dimension_numbers<[1], [0], [0], [1], [0, 0, 1, 1], [], []>} : vector<8x12xbf16>, vector<12x32xbf16>, vector<8x32xf32> -> vector<8x32xf32>
    %cst_249 = arith.constant dense<0.000000e+00> : vector<8x32xf32>
    %280 = tpu.matmul %7, %275, %cst_249 {dimension_numbers = #tpu.dot_dimension_numbers<[1], [0], [0], [1], [0, 0, 1, 1], [], []>} : vector<8x12xbf16>, vector<12x32xbf16>, vector<8x32xf32> -> vector<8x32xf32>
    %281 = arith.addf %279, %280 : vector<8x32xf32>
    %282 = arith.truncf %278 : vector<8x32xf32> to vector<8x32xbf16>
    %c0_250 = arith.constant 0 : index
    %c0_251 = arith.constant 0 : index
    %c640 = arith.constant 640 : index
    %283 = vector.load %arg4[%c0_250, %c0_251, %c640] : memref<1x8x1024xbf16, #tpu.memory_space<vmem>>, vector<1x8x32xbf16>
    %284 = vector.shape_cast %283 : vector<1x8x32xbf16> to vector<8x32xbf16>
    %285 = vector.shape_cast %282 : vector<8x32xbf16> to vector<1x8x32xbf16>
    tpu.vector_store %arg4[%c0_250, %c0_251, %c640], %285 {strides = array<i32>} : memref<1x8x1024xbf16, #tpu.memory_space<vmem>>, vector<1x8x32xbf16>,
    %286 = arith.truncf %281 : vector<8x32xf32> to vector<8x32xbf16>
    %c0_252 = arith.constant 0 : index
    %c0_253 = arith.constant 0 : index
    %c672 = arith.constant 672 : index
    %287 = vector.load %arg4[%c0_252, %c0_253, %c672] : memref<1x8x1024xbf16, #tpu.memory_space<vmem>>, vector<1x8x32xbf16>
    %288 = vector.shape_cast %287 : vector<1x8x32xbf16> to vector<8x32xbf16>
    %289 = vector.shape_cast %286 : vector<8x32xbf16> to vector<1x8x32xbf16>
    tpu.vector_store %arg4[%c0_252, %c0_253, %c672], %289 {strides = array<i32>} : memref<1x8x1024xbf16, #tpu.memory_space<vmem>>, vector<1x8x32xbf16>,
    %290 = arith.addf %265, %278 : vector<8x32xf32>
    %291 = arith.addf %290, %281 : vector<8x32xf32>
    %292 = arith.mulf %278, %278 : vector<8x32xf32>
    %293 = arith.addf %269, %292 : vector<8x32xf32>
    %294 = arith.mulf %281, %281 : vector<8x32xf32>
    %295 = arith.addf %293, %294 : vector<8x32xf32>
    %c0_254 = arith.constant 0 : index
    %c0_255 = arith.constant 0 : index
    %c11_256 = arith.constant 11 : index
    %c0_257 = arith.constant 0 : index
    %c0_258 = arith.constant 0 : index
    %296 = vector.load %arg2[%c0_254, %c0_255, %c11_256, %c0_257, %c0_258] : memref<1x1x18x12x32xbf16, #tpu.memory_space<vmem>>, vector<1x1x1x12x32xbf16>
    %297 = vector.shape_cast %296 : vector<1x1x1x12x32xbf16> to vector<12x32xbf16>
    %c0_259 = arith.constant 0 : index
    %c0_260 = arith.constant 0 : index
    %c12_261 = arith.constant 12 : index
    %c0_262 = arith.constant 0 : index
    %c0_263 = arith.constant 0 : index
    %298 = vector.load %arg2[%c0_259, %c0_260, %c12_261, %c0_262, %c0_263] : memref<1x1x18x12x32xbf16, #tpu.memory_space<vmem>>, vector<1x1x1x12x32xbf16>
    %299 = vector.shape_cast %298 : vector<1x1x1x12x32xbf16> to vector<12x32xbf16>
    %c0_264 = arith.constant 0 : index
    %c0_265 = arith.constant 0 : index
    %c13 = arith.constant 13 : index
    %c0_266 = arith.constant 0 : index
    %c0_267 = arith.constant 0 : index
    %300 = vector.load %arg2[%c0_264, %c0_265, %c13, %c0_266, %c0_267] : memref<1x1x18x12x32xbf16, #tpu.memory_space<vmem>>, vector<1x1x1x12x32xbf16>
    %301 = vector.shape_cast %300 : vector<1x1x1x12x32xbf16> to vector<12x32xbf16>
    %cst_268 = arith.constant dense<0.000000e+00> : vector<8x32xf32>
    %302 = tpu.matmul %1, %297, %cst_268 {dimension_numbers = #tpu.dot_dimension_numbers<[1], [0], [0], [1], [0, 0, 1, 1], [], []>} : vector<8x12xbf16>, vector<12x32xbf16>, vector<8x32xf32> -> vector<8x32xf32>
    %cst_269 = arith.constant dense<0.000000e+00> : vector<8x32xf32>
    %303 = tpu.matmul %3, %299, %cst_269 {dimension_numbers = #tpu.dot_dimension_numbers<[1], [0], [0], [1], [0, 0, 1, 1], [], []>} : vector<8x12xbf16>, vector<12x32xbf16>, vector<8x32xf32> -> vector<8x32xf32>
    %304 = arith.addf %302, %303 : vector<8x32xf32>
    %cst_270 = arith.constant dense<0.000000e+00> : vector<8x32xf32>
    %305 = tpu.matmul %5, %299, %cst_270 {dimension_numbers = #tpu.dot_dimension_numbers<[1], [0], [0], [1], [0, 0, 1, 1], [], []>} : vector<8x12xbf16>, vector<12x32xbf16>, vector<8x32xf32> -> vector<8x32xf32>
    %cst_271 = arith.constant dense<0.000000e+00> : vector<8x32xf32>
    %306 = tpu.matmul %7, %301, %cst_271 {dimension_numbers = #tpu.dot_dimension_numbers<[1], [0], [0], [1], [0, 0, 1, 1], [], []>} : vector<8x12xbf16>, vector<12x32xbf16>, vector<8x32xf32> -> vector<8x32xf32>
    %307 = arith.addf %305, %306 : vector<8x32xf32>
    %308 = arith.truncf %304 : vector<8x32xf32> to vector<8x32xbf16>
    %c0_272 = arith.constant 0 : index
    %c0_273 = arith.constant 0 : index
    %c704 = arith.constant 704 : index
    %309 = vector.load %arg4[%c0_272, %c0_273, %c704] : memref<1x8x1024xbf16, #tpu.memory_space<vmem>>, vector<1x8x32xbf16>
    %310 = vector.shape_cast %309 : vector<1x8x32xbf16> to vector<8x32xbf16>
    %311 = vector.shape_cast %308 : vector<8x32xbf16> to vector<1x8x32xbf16>
    tpu.vector_store %arg4[%c0_272, %c0_273, %c704], %311 {strides = array<i32>} : memref<1x8x1024xbf16, #tpu.memory_space<vmem>>, vector<1x8x32xbf16>,
    %312 = arith.truncf %307 : vector<8x32xf32> to vector<8x32xbf16>
    %c0_274 = arith.constant 0 : index
    %c0_275 = arith.constant 0 : index
    %c736 = arith.constant 736 : index
    %313 = vector.load %arg4[%c0_274, %c0_275, %c736] : memref<1x8x1024xbf16, #tpu.memory_space<vmem>>, vector<1x8x32xbf16>
    %314 = vector.shape_cast %313 : vector<1x8x32xbf16> to vector<8x32xbf16>
    %315 = vector.shape_cast %312 : vector<8x32xbf16> to vector<1x8x32xbf16>
    tpu.vector_store %arg4[%c0_274, %c0_275, %c736], %315 {strides = array<i32>} : memref<1x8x1024xbf16, #tpu.memory_space<vmem>>, vector<1x8x32xbf16>,
    %316 = arith.addf %291, %304 : vector<8x32xf32>
    %317 = arith.addf %316, %307 : vector<8x32xf32>
    %318 = arith.mulf %304, %304 : vector<8x32xf32>
    %319 = arith.addf %295, %318 : vector<8x32xf32>
    %320 = arith.mulf %307, %307 : vector<8x32xf32>
    %321 = arith.addf %319, %320 : vector<8x32xf32>
    %c0_276 = arith.constant 0 : index
    %c0_277 = arith.constant 0 : index
    %c12_278 = arith.constant 12 : index
    %c0_279 = arith.constant 0 : index
    %c0_280 = arith.constant 0 : index
    %322 = vector.load %arg2[%c0_276, %c0_277, %c12_278, %c0_279, %c0_280] : memref<1x1x18x12x32xbf16, #tpu.memory_space<vmem>>, vector<1x1x1x12x32xbf16>
    %323 = vector.shape_cast %322 : vector<1x1x1x12x32xbf16> to vector<12x32xbf16>
    %c0_281 = arith.constant 0 : index
    %c0_282 = arith.constant 0 : index
    %c13_283 = arith.constant 13 : index
    %c0_284 = arith.constant 0 : index
    %c0_285 = arith.constant 0 : index
    %324 = vector.load %arg2[%c0_281, %c0_282, %c13_283, %c0_284, %c0_285] : memref<1x1x18x12x32xbf16, #tpu.memory_space<vmem>>, vector<1x1x1x12x32xbf16>
    %325 = vector.shape_cast %324 : vector<1x1x1x12x32xbf16> to vector<12x32xbf16>
    %c0_286 = arith.constant 0 : index
    %c0_287 = arith.constant 0 : index
    %c14 = arith.constant 14 : index
    %c0_288 = arith.constant 0 : index
    %c0_289 = arith.constant 0 : index
    %326 = vector.load %arg2[%c0_286, %c0_287, %c14, %c0_288, %c0_289] : memref<1x1x18x12x32xbf16, #tpu.memory_space<vmem>>, vector<1x1x1x12x32xbf16>
    %327 = vector.shape_cast %326 : vector<1x1x1x12x32xbf16> to vector<12x32xbf16>
    %cst_290 = arith.constant dense<0.000000e+00> : vector<8x32xf32>
    %328 = tpu.matmul %1, %323, %cst_290 {dimension_numbers = #tpu.dot_dimension_numbers<[1], [0], [0], [1], [0, 0, 1, 1], [], []>} : vector<8x12xbf16>, vector<12x32xbf16>, vector<8x32xf32> -> vector<8x32xf32>
    %cst_291 = arith.constant dense<0.000000e+00> : vector<8x32xf32>
    %329 = tpu.matmul %3, %325, %cst_291 {dimension_numbers = #tpu.dot_dimension_numbers<[1], [0], [0], [1], [0, 0, 1, 1], [], []>} : vector<8x12xbf16>, vector<12x32xbf16>, vector<8x32xf32> -> vector<8x32xf32>
    %330 = arith.addf %328, %329 : vector<8x32xf32>
    %cst_292 = arith.constant dense<0.000000e+00> : vector<8x32xf32>
    %331 = tpu.matmul %5, %325, %cst_292 {dimension_numbers = #tpu.dot_dimension_numbers<[1], [0], [0], [1], [0, 0, 1, 1], [], []>} : vector<8x12xbf16>, vector<12x32xbf16>, vector<8x32xf32> -> vector<8x32xf32>
    %cst_293 = arith.constant dense<0.000000e+00> : vector<8x32xf32>
    %332 = tpu.matmul %7, %327, %cst_293 {dimension_numbers = #tpu.dot_dimension_numbers<[1], [0], [0], [1], [0, 0, 1, 1], [], []>} : vector<8x12xbf16>, vector<12x32xbf16>, vector<8x32xf32> -> vector<8x32xf32>
    %333 = arith.addf %331, %332 : vector<8x32xf32>
    %334 = arith.truncf %330 : vector<8x32xf32> to vector<8x32xbf16>
    %c0_294 = arith.constant 0 : index
    %c0_295 = arith.constant 0 : index
    %c768 = arith.constant 768 : index
    %335 = vector.load %arg4[%c0_294, %c0_295, %c768] : memref<1x8x1024xbf16, #tpu.memory_space<vmem>>, vector<1x8x32xbf16>
    %336 = vector.shape_cast %335 : vector<1x8x32xbf16> to vector<8x32xbf16>
    %337 = vector.shape_cast %334 : vector<8x32xbf16> to vector<1x8x32xbf16>
    tpu.vector_store %arg4[%c0_294, %c0_295, %c768], %337 {strides = array<i32>} : memref<1x8x1024xbf16, #tpu.memory_space<vmem>>, vector<1x8x32xbf16>,
    %338 = arith.truncf %333 : vector<8x32xf32> to vector<8x32xbf16>
    %c0_296 = arith.constant 0 : index
    %c0_297 = arith.constant 0 : index
    %c800 = arith.constant 800 : index
    %339 = vector.load %arg4[%c0_296, %c0_297, %c800] : memref<1x8x1024xbf16, #tpu.memory_space<vmem>>, vector<1x8x32xbf16>
    %340 = vector.shape_cast %339 : vector<1x8x32xbf16> to vector<8x32xbf16>
    %341 = vector.shape_cast %338 : vector<8x32xbf16> to vector<1x8x32xbf16>
    tpu.vector_store %arg4[%c0_296, %c0_297, %c800], %341 {strides = array<i32>} : memref<1x8x1024xbf16, #tpu.memory_space<vmem>>, vector<1x8x32xbf16>,
    %342 = arith.addf %317, %330 : vector<8x32xf32>
    %343 = arith.addf %342, %333 : vector<8x32xf32>
    %344 = arith.mulf %330, %330 : vector<8x32xf32>
    %345 = arith.addf %321, %344 : vector<8x32xf32>
    %346 = arith.mulf %333, %333 : vector<8x32xf32>
    %347 = arith.addf %345, %346 : vector<8x32xf32>
    %c0_298 = arith.constant 0 : index
    %c0_299 = arith.constant 0 : index
    %c13_300 = arith.constant 13 : index
    %c0_301 = arith.constant 0 : index
    %c0_302 = arith.constant 0 : index
    %348 = vector.load %arg2[%c0_298, %c0_299, %c13_300, %c0_301, %c0_302] : memref<1x1x18x12x32xbf16, #tpu.memory_space<vmem>>, vector<1x1x1x12x32xbf16>
    %349 = vector.shape_cast %348 : vector<1x1x1x12x32xbf16> to vector<12x32xbf16>
    %c0_303 = arith.constant 0 : index
    %c0_304 = arith.constant 0 : index
    %c14_305 = arith.constant 14 : index
    %c0_306 = arith.constant 0 : index
    %c0_307 = arith.constant 0 : index
    %350 = vector.load %arg2[%c0_303, %c0_304, %c14_305, %c0_306, %c0_307] : memref<1x1x18x12x32xbf16, #tpu.memory_space<vmem>>, vector<1x1x1x12x32xbf16>
    %351 = vector.shape_cast %350 : vector<1x1x1x12x32xbf16> to vector<12x32xbf16>
    %c0_308 = arith.constant 0 : index
    %c0_309 = arith.constant 0 : index
    %c15 = arith.constant 15 : index
    %c0_310 = arith.constant 0 : index
    %c0_311 = arith.constant 0 : index
    %352 = vector.load %arg2[%c0_308, %c0_309, %c15, %c0_310, %c0_311] : memref<1x1x18x12x32xbf16, #tpu.memory_space<vmem>>, vector<1x1x1x12x32xbf16>
    %353 = vector.shape_cast %352 : vector<1x1x1x12x32xbf16> to vector<12x32xbf16>
    %cst_312 = arith.constant dense<0.000000e+00> : vector<8x32xf32>
    %354 = tpu.matmul %1, %349, %cst_312 {dimension_numbers = #tpu.dot_dimension_numbers<[1], [0], [0], [1], [0, 0, 1, 1], [], []>} : vector<8x12xbf16>, vector<12x32xbf16>, vector<8x32xf32> -> vector<8x32xf32>
    %cst_313 = arith.constant dense<0.000000e+00> : vector<8x32xf32>
    %355 = tpu.matmul %3, %351, %cst_313 {dimension_numbers = #tpu.dot_dimension_numbers<[1], [0], [0], [1], [0, 0, 1, 1], [], []>} : vector<8x12xbf16>, vector<12x32xbf16>, vector<8x32xf32> -> vector<8x32xf32>
    %356 = arith.addf %354, %355 : vector<8x32xf32>
    %cst_314 = arith.constant dense<0.000000e+00> : vector<8x32xf32>
    %357 = tpu.matmul %5, %351, %cst_314 {dimension_numbers = #tpu.dot_dimension_numbers<[1], [0], [0], [1], [0, 0, 1, 1], [], []>} : vector<8x12xbf16>, vector<12x32xbf16>, vector<8x32xf32> -> vector<8x32xf32>
    %cst_315 = arith.constant dense<0.000000e+00> : vector<8x32xf32>
    %358 = tpu.matmul %7, %353, %cst_315 {dimension_numbers = #tpu.dot_dimension_numbers<[1], [0], [0], [1], [0, 0, 1, 1], [], []>} : vector<8x12xbf16>, vector<12x32xbf16>, vector<8x32xf32> -> vector<8x32xf32>
    %359 = arith.addf %357, %358 : vector<8x32xf32>
    %360 = arith.truncf %356 : vector<8x32xf32> to vector<8x32xbf16>
    %c0_316 = arith.constant 0 : index
    %c0_317 = arith.constant 0 : index
    %c832 = arith.constant 832 : index
    %361 = vector.load %arg4[%c0_316, %c0_317, %c832] : memref<1x8x1024xbf16, #tpu.memory_space<vmem>>, vector<1x8x32xbf16>
    %362 = vector.shape_cast %361 : vector<1x8x32xbf16> to vector<8x32xbf16>
    %363 = vector.shape_cast %360 : vector<8x32xbf16> to vector<1x8x32xbf16>
    tpu.vector_store %arg4[%c0_316, %c0_317, %c832], %363 {strides = array<i32>} : memref<1x8x1024xbf16, #tpu.memory_space<vmem>>, vector<1x8x32xbf16>,
    %364 = arith.truncf %359 : vector<8x32xf32> to vector<8x32xbf16>
    %c0_318 = arith.constant 0 : index
    %c0_319 = arith.constant 0 : index
    %c864 = arith.constant 864 : index
    %365 = vector.load %arg4[%c0_318, %c0_319, %c864] : memref<1x8x1024xbf16, #tpu.memory_space<vmem>>, vector<1x8x32xbf16>
    %366 = vector.shape_cast %365 : vector<1x8x32xbf16> to vector<8x32xbf16>
    %367 = vector.shape_cast %364 : vector<8x32xbf16> to vector<1x8x32xbf16>
    tpu.vector_store %arg4[%c0_318, %c0_319, %c864], %367 {strides = array<i32>} : memref<1x8x1024xbf16, #tpu.memory_space<vmem>>, vector<1x8x32xbf16>,
    %368 = arith.addf %343, %356 : vector<8x32xf32>
    %369 = arith.addf %368, %359 : vector<8x32xf32>
    %370 = arith.mulf %356, %356 : vector<8x32xf32>
    %371 = arith.addf %347, %370 : vector<8x32xf32>
    %372 = arith.mulf %359, %359 : vector<8x32xf32>
    %373 = arith.addf %371, %372 : vector<8x32xf32>
    %c0_320 = arith.constant 0 : index
    %c0_321 = arith.constant 0 : index
    %c14_322 = arith.constant 14 : index
    %c0_323 = arith.constant 0 : index
    %c0_324 = arith.constant 0 : index
    %374 = vector.load %arg2[%c0_320, %c0_321, %c14_322, %c0_323, %c0_324] : memref<1x1x18x12x32xbf16, #tpu.memory_space<vmem>>, vector<1x1x1x12x32xbf16>
    %375 = vector.shape_cast %374 : vector<1x1x1x12x32xbf16> to vector<12x32xbf16>
    %c0_325 = arith.constant 0 : index
    %c0_326 = arith.constant 0 : index
    %c15_327 = arith.constant 15 : index
    %c0_328 = arith.constant 0 : index
    %c0_329 = arith.constant 0 : index
    %376 = vector.load %arg2[%c0_325, %c0_326, %c15_327, %c0_328, %c0_329] : memref<1x1x18x12x32xbf16, #tpu.memory_space<vmem>>, vector<1x1x1x12x32xbf16>
    %377 = vector.shape_cast %376 : vector<1x1x1x12x32xbf16> to vector<12x32xbf16>
    %c0_330 = arith.constant 0 : index
    %c0_331 = arith.constant 0 : index
    %c16 = arith.constant 16 : index
    %c0_332 = arith.constant 0 : index
    %c0_333 = arith.constant 0 : index
    %378 = vector.load %arg2[%c0_330, %c0_331, %c16, %c0_332, %c0_333] : memref<1x1x18x12x32xbf16, #tpu.memory_space<vmem>>, vector<1x1x1x12x32xbf16>
    %379 = vector.shape_cast %378 : vector<1x1x1x12x32xbf16> to vector<12x32xbf16>
    %cst_334 = arith.constant dense<0.000000e+00> : vector<8x32xf32>
    %380 = tpu.matmul %1, %375, %cst_334 {dimension_numbers = #tpu.dot_dimension_numbers<[1], [0], [0], [1], [0, 0, 1, 1], [], []>} : vector<8x12xbf16>, vector<12x32xbf16>, vector<8x32xf32> -> vector<8x32xf32>
    %cst_335 = arith.constant dense<0.000000e+00> : vector<8x32xf32>
    %381 = tpu.matmul %3, %377, %cst_335 {dimension_numbers = #tpu.dot_dimension_numbers<[1], [0], [0], [1], [0, 0, 1, 1], [], []>} : vector<8x12xbf16>, vector<12x32xbf16>, vector<8x32xf32> -> vector<8x32xf32>
    %382 = arith.addf %380, %381 : vector<8x32xf32>
    %cst_336 = arith.constant dense<0.000000e+00> : vector<8x32xf32>
    %383 = tpu.matmul %5, %377, %cst_336 {dimension_numbers = #tpu.dot_dimension_numbers<[1], [0], [0], [1], [0, 0, 1, 1], [], []>} : vector<8x12xbf16>, vector<12x32xbf16>, vector<8x32xf32> -> vector<8x32xf32>
    %cst_337 = arith.constant dense<0.000000e+00> : vector<8x32xf32>
    %384 = tpu.matmul %7, %379, %cst_337 {dimension_numbers = #tpu.dot_dimension_numbers<[1], [0], [0], [1], [0, 0, 1, 1], [], []>} : vector<8x12xbf16>, vector<12x32xbf16>, vector<8x32xf32> -> vector<8x32xf32>
    %385 = arith.addf %383, %384 : vector<8x32xf32>
    %386 = arith.truncf %382 : vector<8x32xf32> to vector<8x32xbf16>
    %c0_338 = arith.constant 0 : index
    %c0_339 = arith.constant 0 : index
    %c896 = arith.constant 896 : index
    %387 = vector.load %arg4[%c0_338, %c0_339, %c896] : memref<1x8x1024xbf16, #tpu.memory_space<vmem>>, vector<1x8x32xbf16>
    %388 = vector.shape_cast %387 : vector<1x8x32xbf16> to vector<8x32xbf16>
    %389 = vector.shape_cast %386 : vector<8x32xbf16> to vector<1x8x32xbf16>
    tpu.vector_store %arg4[%c0_338, %c0_339, %c896], %389 {strides = array<i32>} : memref<1x8x1024xbf16, #tpu.memory_space<vmem>>, vector<1x8x32xbf16>,
    %390 = arith.truncf %385 : vector<8x32xf32> to vector<8x32xbf16>
    %c0_340 = arith.constant 0 : index
    %c0_341 = arith.constant 0 : index
    %c928 = arith.constant 928 : index
    %391 = vector.load %arg4[%c0_340, %c0_341, %c928] : memref<1x8x1024xbf16, #tpu.memory_space<vmem>>, vector<1x8x32xbf16>
    %392 = vector.shape_cast %391 : vector<1x8x32xbf16> to vector<8x32xbf16>
    %393 = vector.shape_cast %390 : vector<8x32xbf16> to vector<1x8x32xbf16>
    tpu.vector_store %arg4[%c0_340, %c0_341, %c928], %393 {strides = array<i32>} : memref<1x8x1024xbf16, #tpu.memory_space<vmem>>, vector<1x8x32xbf16>,
    %394 = arith.addf %369, %382 : vector<8x32xf32>
    %395 = arith.addf %394, %385 : vector<8x32xf32>
    %396 = arith.mulf %382, %382 : vector<8x32xf32>
    %397 = arith.addf %373, %396 : vector<8x32xf32>
    %398 = arith.mulf %385, %385 : vector<8x32xf32>
    %399 = arith.addf %397, %398 : vector<8x32xf32>
    %c0_342 = arith.constant 0 : index
    %c0_343 = arith.constant 0 : index
    %c15_344 = arith.constant 15 : index
    %c0_345 = arith.constant 0 : index
    %c0_346 = arith.constant 0 : index
    %400 = vector.load %arg2[%c0_342, %c0_343, %c15_344, %c0_345, %c0_346] : memref<1x1x18x12x32xbf16, #tpu.memory_space<vmem>>, vector<1x1x1x12x32xbf16>
    %401 = vector.shape_cast %400 : vector<1x1x1x12x32xbf16> to vector<12x32xbf16>
    %c0_347 = arith.constant 0 : index
    %c0_348 = arith.constant 0 : index
    %c16_349 = arith.constant 16 : index
    %c0_350 = arith.constant 0 : index
    %c0_351 = arith.constant 0 : index
    %402 = vector.load %arg2[%c0_347, %c0_348, %c16_349, %c0_350, %c0_351] : memref<1x1x18x12x32xbf16, #tpu.memory_space<vmem>>, vector<1x1x1x12x32xbf16>
    %403 = vector.shape_cast %402 : vector<1x1x1x12x32xbf16> to vector<12x32xbf16>
    %c0_352 = arith.constant 0 : index
    %c0_353 = arith.constant 0 : index
    %c17 = arith.constant 17 : index
    %c0_354 = arith.constant 0 : index
    %c0_355 = arith.constant 0 : index
    %404 = vector.load %arg2[%c0_352, %c0_353, %c17, %c0_354, %c0_355] : memref<1x1x18x12x32xbf16, #tpu.memory_space<vmem>>, vector<1x1x1x12x32xbf16>
    %405 = vector.shape_cast %404 : vector<1x1x1x12x32xbf16> to vector<12x32xbf16>
    %cst_356 = arith.constant dense<0.000000e+00> : vector<8x32xf32>
    %406 = tpu.matmul %1, %401, %cst_356 {dimension_numbers = #tpu.dot_dimension_numbers<[1], [0], [0], [1], [0, 0, 1, 1], [], []>} : vector<8x12xbf16>, vector<12x32xbf16>, vector<8x32xf32> -> vector<8x32xf32>
    %cst_357 = arith.constant dense<0.000000e+00> : vector<8x32xf32>
    %407 = tpu.matmul %3, %403, %cst_357 {dimension_numbers = #tpu.dot_dimension_numbers<[1], [0], [0], [1], [0, 0, 1, 1], [], []>} : vector<8x12xbf16>, vector<12x32xbf16>, vector<8x32xf32> -> vector<8x32xf32>
    %408 = arith.addf %406, %407 : vector<8x32xf32>
    %cst_358 = arith.constant dense<0.000000e+00> : vector<8x32xf32>
    %409 = tpu.matmul %5, %403, %cst_358 {dimension_numbers = #tpu.dot_dimension_numbers<[1], [0], [0], [1], [0, 0, 1, 1], [], []>} : vector<8x12xbf16>, vector<12x32xbf16>, vector<8x32xf32> -> vector<8x32xf32>
    %cst_359 = arith.constant dense<0.000000e+00> : vector<8x32xf32>
    %410 = tpu.matmul %7, %405, %cst_359 {dimension_numbers = #tpu.dot_dimension_numbers<[1], [0], [0], [1], [0, 0, 1, 1], [], []>} : vector<8x12xbf16>, vector<12x32xbf16>, vector<8x32xf32> -> vector<8x32xf32>
    %411 = arith.addf %409, %410 : vector<8x32xf32>
    %412 = arith.truncf %408 : vector<8x32xf32> to vector<8x32xbf16>
    %c0_360 = arith.constant 0 : index
    %c0_361 = arith.constant 0 : index
    %c960 = arith.constant 960 : index
    %413 = vector.load %arg4[%c0_360, %c0_361, %c960] : memref<1x8x1024xbf16, #tpu.memory_space<vmem>>, vector<1x8x32xbf16>
    %414 = vector.shape_cast %413 : vector<1x8x32xbf16> to vector<8x32xbf16>
    %415 = vector.shape_cast %412 : vector<8x32xbf16> to vector<1x8x32xbf16>
    tpu.vector_store %arg4[%c0_360, %c0_361, %c960], %415 {strides = array<i32>} : memref<1x8x1024xbf16, #tpu.memory_space<vmem>>, vector<1x8x32xbf16>,
    %416 = arith.truncf %411 : vector<8x32xf32> to vector<8x32xbf16>
    %c0_362 = arith.constant 0 : index
    %c0_363 = arith.constant 0 : index
    %c992 = arith.constant 992 : index
    %417 = vector.load %arg4[%c0_362, %c0_363, %c992] : memref<1x8x1024xbf16, #tpu.memory_space<vmem>>, vector<1x8x32xbf16>
    %418 = vector.shape_cast %417 : vector<1x8x32xbf16> to vector<8x32xbf16>
    %419 = vector.shape_cast %416 : vector<8x32xbf16> to vector<1x8x32xbf16>
    tpu.vector_store %arg4[%c0_362, %c0_363, %c992], %419 {strides = array<i32>} : memref<1x8x1024xbf16, #tpu.memory_space<vmem>>, vector<1x8x32xbf16>,
    %420 = arith.addf %395, %408 : vector<8x32xf32>
    %421 = arith.addf %420, %411 : vector<8x32xf32>
    %422 = arith.mulf %408, %408 : vector<8x32xf32>
    %423 = arith.addf %399, %422 : vector<8x32xf32>
    %424 = arith.mulf %411, %411 : vector<8x32xf32>
    %425 = arith.addf %423, %424 : vector<8x32xf32>
    %426 = vector.shape_cast %421 : vector<8x32xf32> to vector<1x8x32xf32>
    %427 = vector.shape_cast %425 : vector<8x32xf32> to vector<1x8x32xf32>
    %428 = tpu.concatenate %426, %427 in 0 : vector<1x8x32xf32>, vector<1x8x32xf32> -> vector<2x8x32xf32>
    %cst_364 = arith.constant dense<0.000000e+00> : vector<2x8xf32>
    %429 = vector.multi_reduction <add>, %428, %cst_364 [2] : vector<2x8x32xf32> to vector<2x8xf32>
    %c0_365 = arith.constant 0 : index
    %c0_366 = arith.constant 0 : index
    %c0_367 = arith.constant 0 : index
    %c0_368 = arith.constant 0 : index
    %430 = vector.load %arg5[%c0_365, %c0_366, %c0_367, %c0_368] : memref<1x1x2x8xf32, #tpu.memory_space<vmem>>, vector<1x1x2x8xf32>
    %431 = vector.shape_cast %430 : vector<1x1x2x8xf32> to vector<2x8xf32>
    %432 = vector.shape_cast %429 : vector<2x8xf32> to vector<1x1x2x8xf32>
    tpu.vector_store %arg5[%c0_365, %c0_366, %c0_367, %c0_368], %432 {strides = array<i32>} : memref<1x1x2x8xf32, #tpu.memory_space<vmem>>, vector<1x1x2x8xf32>,
    return
  }
  func.func @transform_0(%arg0: i32, %arg1: i32) -> (i32, i32, i32, i32, i32) {
    %c0_i32 = arith.constant 0 : i32
    %c0_i32_0 = arith.constant 0 : i32
    %c0_i32_1 = arith.constant 0 : i32
    %c0_i32_2 = arith.constant 0 : i32
    return %arg0, %arg1, %c0_i32, %c0_i32_0, %c0_i32_1 : i32, i32, i32, i32, i32
  }
  func.func @transform_1(%arg0: i32, %arg1: i32) -> (i32, i32, i32) {
    %c0_i32 = arith.constant 0 : i32
    %c0_i32_0 = arith.constant 0 : i32
    %c0_i32_1 = arith.constant 0 : i32
    %c0_i32_2 = arith.constant 0 : i32
    return %c0_i32, %c0_i32_0, %c0_i32_1 : i32, i32, i32
  }
  func.func @transform_2(%arg0: i32, %arg1: i32) -> (i32, i32, i32) {
    %c0_i32 = arith.constant 0 : i32
    %c0_i32_0 = arith.constant 0 : i32
    return %arg0, %c0_i32, %arg1 : i32, i32, i32
  }
  func.func @transform_3(%arg0: i32, %arg1: i32) -> (i32, i32, i32, i32) {
    %c0_i32 = arith.constant 0 : i32
    %c0_i32_0 = arith.constant 0 : i32
    %c0_i32_1 = arith.constant 0 : i32
    return %arg0, %arg1, %c0_i32, %c0_i32_0 : i32, i32, i32, i32
  }
}

</mosaic_0001>

<llo_original>
// kernel: tpu_custom_call.1
$region0: #{tpu_custom_call.1}
  #allocation0 [shape = 'u32[]', space=smem, size = 0x4, offset = 0x4, fixed_abs, tag = 'smem constant byte address 0x4 - core index']
  #allocation1 [shape = 'u32[144,128]{1,0:T(1,128)}', space=vmem, size = 0x12000, scoped, tag = 'internal scratch']
  %s0 = inlined_call_operand.vmem [shape: bf16[2,1,18,12,32], index: 0, kind: input, shape index: {}]
  %s1 = inlined_call_operand.vmem [shape: bf16[4,8,12], index: 1, kind: input, shape index: {}]
  %s2 = inlined_call_operand.hbm [shape: bf16[2,8,1024], index: 2, kind: output, shape index: {0}]
  %s3 = inlined_call_operand.hbm [shape: f32[2,1,2,8], index: 3, kind: output, shape index: {1}]
  %4 = xla_tuple %s2, %s3
  %s5 = sld [smem:[#allocation0]]
  $region49: #{tpu_custom_call.1} parent=0
    _
  %s7 = ssub.s32 1, %s5
  %s8 = scalar_select 0, %s7, %s5
  $region1: #{tpu_custom_call.1} parent=0
    #allocation2 [shape = 'u8[32768]{0}', space=vmem, size = 0x8000, scoped, tag = 'output window, operand 0']
    #allocation3 [shape = 's32[2]{0}', space=sflag, size = 0x8, scoped, tag = 'scoped memory for tpu_custom_call.1']
    #allocation4 [shape = 'u8[2048]{0}', space=vmem, size = 0x800, scoped, tag = 'output window, operand 1']
    #allocation5 [shape = 's32[2]{0}', space=sflag, size = 0x8, scoped, tag = 'scoped memory for tpu_custom_call.1']
    %9 = vsyncpa [#allocation3], 0
    %s10 = scalar_lea.sflag [#allocation3], 1
    %11 = vsyncpa %s10, 0
    %12 = vsyncpa [#allocation5], 0
    %s13 = scalar_lea.sflag [#allocation5], 1
    %14 = vsyncpa %s13, 0
    loop: start=0, step=1, limit=4
    $region2: #{tpu_custom_call.1} parent=1 // loop_pre_header
      _
    $region3: #{tpu_custom_call.1} parent=1 // loop_header
      %s16 = sphi 0, %s20
      %p17 = scmp.ge.s32.totalorder %s16, 4
      %s23 = sphi 0, %s35
      %s24 = sphi 0, %s31
      %s25 = sphi 0, %s23
      %s26 = sphi 0, %s24
      %s27 = sphi 0, %s25
      %s28 = sphi 0, %s26
      %s40 = sphi 0, %s42
      %s43 = sphi 0, %s40
      %s44 = sphi 0, %s43
      %s60 = sphi 0, %s44
      %s64 = sphi 0, %s64
      %s66 = sphi 0, %s64
      %s67 = sphi 0, %s66
      %s81 = sphi 0, %s67
      %s89 = sphi 0, %s91
      %s92 = sphi 0, %s89
      %s93 = sphi 0, %s92
      %s109 = sphi 0, %s93
      %s117 = sphi 0, %s119
      %s120 = sphi 0, %s117
      %s121 = sphi 0, %s120
      %s137 = sphi 0, %s121
    $region4: #{tpu_custom_call.1} parent=1 // loop_header_branch
      %19 = sbr.rel (%p17) target = $region8
    $region5: #{tpu_custom_call.1} parent=1 // loop_body
      %s21 = ssub.s32 %s16, 1
      %s22 = ssub.s32 %s16, 2
      %s29 = sadd.s32 1, %s24
      %p30 = scmp.ge.s32.totalorder %s29, 1
      %s31 = scalar_select %p30, 0, %s29
      %s32 = sadd.s32 1, %s23
      %s33 = scalar_select %p30, %s32, %s23
      %p34 = scmp.ge.s32.totalorder %s33, 2
      %s35 = scalar_select %p34, 0, %s33
      %s36 = ssub.s32 %s23, %s35
      %s37 = ssub.s32 %s24, %s31
      %s38 = sor.u32 %s36, %s37
      %p39 = scmp.eq.s32.totalorder %s38, 0
      %s41 = sadd.s32 %s40, 1
      %s42 = scalar_select %p39, %s40, %s41
      %p45 = pneg %p39
      %p46 = scmp.eq.s32.totalorder %s16, 1
      %p47 = por %p45, %p46
      %p48 = scmp.ne.s32.totalorder %s40, %s43
      %p49 = scmp.eq.s32.totalorder %s16, 0
      %p50 = por %p48, %p49
      %p51 = scmp.ne.s32.totalorder %s40, %s43
      %p52 = scmp.eq.s32.totalorder %s21, 1
      %p53 = por %p51, %p52
      %p54 = scmp.ne.s32.totalorder %s43, %s44
      %p55 = scmp.eq.s32.totalorder %s21, 0
      %p56 = por %p54, %p55
      %p57 = scmp.ne.s32.totalorder %s43, %s44
      %p58 = scmp.eq.s32.totalorder %s22, 1
      %p59 = por %p57, %p58
      %p61 = scmp.ne.s32.totalorder %s44, %s60
      %p62 = scmp.eq.s32.totalorder %s22, 0
      %p63 = por %p61, %p62
      %s65 = sadd.s32 %s64, 1
      %p68 = scmp.eq.s32.totalorder %s16, 1
      %p69 = scmp.ne.s32.totalorder %s64, %s66
      %p70 = scmp.eq.s32.totalorder %s16, 0
      %p71 = por %p69, %p70
      %p72 = scmp.ne.s32.totalorder %s64, %s66
      %p73 = scmp.eq.s32.totalorder %s21, 1
      %p74 = por %p72, %p73
      %p75 = scmp.ne.s32.totalorder %s66, %s67
      %p76 = scmp.eq.s32.totalorder %s21, 0
      %p77 = por %p75, %p76
      %p78 = scmp.ne.s32.totalorder %s66, %s67
      %p79 = scmp.eq.s32.totalorder %s22, 1
      %p80 = por %p78, %p79
      %p82 = scmp.ne.s32.totalorder %s67, %s81
      %p83 = scmp.eq.s32.totalorder %s22, 0
      %p84 = por %p82, %p83
      %s85 = ssub.s32 %s23, %s35
      %s86 = ssub.s32 %s24, %s31
      %s87 = sor.u32 %s85, %s86
      %p88 = scmp.eq.s32.totalorder %s87, 0
      %s90 = sadd.s32 %s89, 1
      %s91 = scalar_select %p88, %s89, %s90
      %p94 = pneg %p88
      %p95 = scmp.eq.s32.totalorder %s16, 1
      %p96 = por %p94, %p95
      %p97 = scmp.ne.s32.totalorder %s89, %s92
      %p98 = scmp.eq.s32.totalorder %s16, 0
      %p99 = por %p97, %p98
      %p100 = scmp.ne.s32.totalorder %s89, %s92
      %p101 = scmp.eq.s32.totalorder %s21, 1
      %p102 = por %p100, %p101
      %p103 = scmp.ne.s32.totalorder %s92, %s93
      %p104 = scmp.eq.s32.totalorder %s21, 0
      %p105 = por %p103, %p104
      %p106 = scmp.ne.s32.totalorder %s92, %s93
      %p107 = scmp.eq.s32.totalorder %s22, 1
      %p108 = por %p106, %p107
      %p110 = scmp.ne.s32.totalorder %s93, %s109
      %p111 = scmp.eq.s32.totalorder %s22, 0
      %p112 = por %p110, %p111
      %s113 = ssub.s32 %s23, %s35
      %s114 = ssub.s32 %s24, %s31
      %s115 = sor.u32 %s113, %s114
      %p116 = scmp.eq.s32.totalorder %s115, 0
      %s118 = sadd.s32 %s117, 1
      %s119 = scalar_select %p116, %s117, %s118
      %p122 = pneg %p116
      %p123 = scmp.eq.s32.totalorder %s16, 1
      %p124 = por %p122, %p123
      %p125 = scmp.ne.s32.totalorder %s117, %s120
      %p126 = scmp.eq.s32.totalorder %s16, 0
      %p127 = por %p125, %p126
      %p128 = scmp.ne.s32.totalorder %s117, %s120
      %p129 = scmp.eq.s32.totalorder %s21, 1
      %p130 = por %p128, %p129
      %p131 = scmp.ne.s32.totalorder %s120, %s121
      %p132 = scmp.eq.s32.totalorder %s21, 0
      %p133 = por %p131, %p132
      %p134 = scmp.ne.s32.totalorder %s120, %s121
      %p135 = scmp.eq.s32.totalorder %s22, 1
      %p136 = por %p134, %p135
      %p138 = scmp.ne.s32.totalorder %s121, %s137
      %p139 = scmp.eq.s32.totalorder %s22, 0
      %p140 = por %p138, %p139
      %p141 = scmp.le.s32.totalorder 1, %s16
      %p142 = scmp.lt.s32.totalorder %s16, 3
      %p143 = pnand %p141, %p142
      %p144 = pneg %p143
      // Predicated region
      $region9: #{tpu_custom_call.1} parent=5 // pred_check
        _
      $region10: #{tpu_custom_call.1} parent=5 // pred_check_branch
        %146 = sbr.rel (%p143) target = $region12
      $region11: #{tpu_custom_call.1} parent=5 // pred_region
        %s147 = ssub.s32 %s16, 1
        // Predicated region
        $region13: #{tpu_custom_call.1} parent=11 // pred_check
          %p148 = pneg %p77
        $region14: #{tpu_custom_call.1} parent=11 // pred_check_branch
          %150 = sbr.rel (%p148) target = $region16
        $region15: #{tpu_custom_call.1} parent=11 // pred_region
          _
        $region16: #{tpu_custom_call.1} parent=11 // pred_fallthru
          _
      $region12: #{tpu_custom_call.1} parent=5 // pred_fallthru
        _
      %p151 = scmp.lt.s32.totalorder %s16, 2
      // Predicated region
      $region17: #{tpu_custom_call.1} parent=5 // pred_check
        %p152 = pneg %p151
      $region18: #{tpu_custom_call.1} parent=5 // pred_check_branch
        %154 = sbr.rel (%p152) target = $region20
      $region19: #{tpu_custom_call.1} parent=5 // pred_region
        // Predicated region
        $region21: #{tpu_custom_call.1} parent=19 // pred_check
          %p155 = pneg %p50
        $region22: #{tpu_custom_call.1} parent=19 // pred_check_branch
          %157 = sbr.rel (%p155) target = $region24
        $region23: #{tpu_custom_call.1} parent=19 // pred_region
          %p158 = scmp.lt.s32.totalorder %s23, 1
          %s159 = scalar_select %p158, %s23, 1
          %p160 = scmp.lt.s32.totalorder %s24, 0
          %s161 = scalar_select %p160, %s24, 0
          %s162 = smul.addr %s161, 36
          %s163 = smul.addr %s159, 36
          %s164 = sadd.s32 %s162, %s163
          %s165 = smul.addr %s164, 4
          %s166 = scalar_lea.vmem %s0, %s165
        $region24: #{tpu_custom_call.1} parent=19 // pred_fallthru
          _
      $region20: #{tpu_custom_call.1} parent=5 // pred_fallthru
        _
      %p167 = scmp.le.s32.totalorder 1, %s16
      %p168 = scmp.lt.s32.totalorder %s16, 3
      %p169 = pnand %p167, %p168
      %p170 = pneg %p169
      // Predicated region
      $region25: #{tpu_custom_call.1} parent=5 // pred_check
        _
      $region26: #{tpu_custom_call.1} parent=5 // pred_check_branch
        %172 = sbr.rel (%p169) target = $region28
      $region27: #{tpu_custom_call.1} parent=5 // pred_region
        %s173 = ssub.s32 %s16, 1
        %p174 = scmp.lt.s32.totalorder %s25, 1
        %s175 = scalar_select %p174, %s25, 1
        %p176 = scmp.lt.s32.totalorder %s26, 0
        %s177 = scalar_select %p176, %s26, 0
        %s178 = smul.addr %s177, 36
        %s179 = smul.addr %s175, 36
        %s180 = sadd.s32 %s178, %s179
        %s181 = smul.addr %s180, 4
        %s182 = scalar_lea.vmem %s0, %s181
        %p183 = pneg %p56
        %p184 = pneg %p53
        %p185 = pneg %p77
        %p186 = pneg %p74
        %p187 = pneg %p105
        %p188 = pneg %p102
        %s189 = sand.u32 %s92, 1
        %s190 = scalar_lea.sflag [#allocation3], %s189
        %s191 = sand.u32 %s92, 1
        %s192 = smul.addr %s191, 32
        %s193 = scalar_lea.vmem [#allocation2], %s192
        %p194 = pneg %p133
        %p195 = pneg %p130
        %s196 = sand.u32 %s120, 1
        %s197 = scalar_lea.sflag [#allocation5], %s196
        %s198 = sand.u32 %s120, 1
        %s199 = smul.addr %s198, 2
        %s200 = scalar_lea.vmem [#allocation4], %s199
        %p201 = scmp.lt.s32.totalorder %s25, 1
        %s202 = scalar_select %p201, %s25, 1
        %p203 = scmp.lt.s32.totalorder %s26, 0
        %s204 = scalar_select %p203, %s26, 0
        %s205 = smul.addr %s204, 36
        %s206 = smul.addr %s202, 36
        %s207 = sadd.s32 %s205, %s206
        %s208 = smul.addr %s207, 4
        %s209 = scalar_lea.vmem %s0, %s208
        %s210 = smul.u32 8, %s26
        %v212 = vld [vmem:[%s1] sm:$0xf]
        %s213 = scalar_lea.vmem %s1, 4
        %v214 = vld [vmem:[%s213] sm:$0xf]
        %s215 = scalar_lea.vmem %s1, 8
        %v216 = vld [vmem:[%s215] sm:$0xf]
        %s217 = scalar_lea.vmem %s1, 12
        %v218 = vld [vmem:[%s217] sm:$0xf]
        %v219 = vld [vmem:[%s209] sm:$0xf]
        %v220 = vld [vmem:[%s209 + $0x4] sm:$0x3]
        %s221 = scalar_lea.vmem %s209, 8
        %v222 = vld [vmem:[%s221] sm:$0xf]
        %v223 = vld [vmem:[%s221 + $0x4] sm:$0x3]
        %s224 = scalar_lea.vmem %s209, 16
        %v225 = vld [vmem:[%s224] sm:$0xf]
        %v226 = vld [vmem:[%s224 + $0x4] sm:$0x3]
        %v229 = vunpack.c.l.b16 %v222
        %v230 = vunpack.c.l.b16 %v223
        %v231 = vpack.c.b16 %v230, %v229
        %vm232 = vcmask 97280
        %v234 = vsel %vm232, %v214, 0
        %vm236 = vcmask 1045504
        %v238 = vsel %vm236, %v231, 0
        %240 = vmatprep.subr.bf16.mxu0 0
        %241 = vmatpush1.bf16.msra.mxu0 %v238
        %242 = vmatprep.subr.bf16.mxu0 0
        %243 = vmatpush1.bf16.msra.mxu0 0
        %244 = vmatprep.subr.bf16.mxu0 0
        %245 = vmatpush1.bf16.msra.mxu0 0
        %246 = vmatprep.subr.bf16.mxu0 0
        %247 = vmatpush1.bf16.msra.mxu0 0
        %248 = vmatprep.subr.bf16.mxu0 0
        %249 = vmatpush1.bf16.msra.mxu0 0
        %250 = vmatprep.subr.bf16.mxu0 0
        %251 = vmatpush1.bf16.msra.mxu0 0
        %252 = vmatprep.subr.bf16.mxu0 0
        %253 = vmatpush1.bf16.msra.mxu0 0
        %254 = vmatprep.subr.bf16.mxu0 0
        %255 = vmatpush1.bf16.msra.mxu0 0
        %256 = vmatprep.subr.bf16.mxu0 0
        %257 = vmatpush1.bf16.msra.mxu0 0
        %258 = vmatprep.subr.bf16.mxu0 0
        %259 = vmatpush1.bf16.msra.mxu0 0
        %260 = vmatprep.subr.bf16.mxu0 0
        %261 = vmatpush1.bf16.msra.mxu0 0
        %262 = vmatprep.subr.bf16.mxu0 0
        %263 = vmatpush1.bf16.msra.mxu0 0
        %264 = vmatprep.subr.bf16.mxu0 0
        %265 = vmatpush1.bf16.msra.mxu0 0
        %266 = vmatprep.subr.bf16.mxu0 0
        %267 = vmatpush1.bf16.msra.mxu0 0
        %268 = vmatprep.subr.bf16.mxu0 0
        %269 = vmatpush1.bf16.msra.mxu0 0
        %270 = vmatprep.subr.bf16.mxu0 0
        %271 = vmatpush1.bf16.msra.mxu0 0
        %272 = vmatprep.mubr.bf16.mxu0 0
        %273 = vmatmul.mubr.bf16.gmra.mrb[0].mxu0 %v234
        %v274 = vpop.f32.mrb[0].mxu0
        %v275 = vadd.f32 0.0, %v274
        %v276 = vpop.f32.mrb[0].mxu0
        %v277 = vpop.f32.mrb[0].mxu0
        %v278 = vpop.f32.mrb[0].mxu0
        %279 = vdwg.mxu0
        %v282 = vunpack.c.l.b16 %v219
        %v283 = vunpack.c.l.b16 %v220
        %v284 = vpack.c.b16 %v283, %v282
        %v286 = vsel %vm232, %v212, 0
        %v289 = vsel %vm236, %v284, 0
        %291 = vmatprep.subr.bf16.mxu0 0
        %292 = vmatpush1.bf16.msra.mxu0 %v289
        %293 = vmatprep.subr.bf16.mxu0 0
        %294 = vmatpush1.bf16.msra.mxu0 0
        %295 = vmatprep.subr.bf16.mxu0 0
        %296 = vmatpush1.bf16.msra.mxu0 0
        %297 = vmatprep.subr.bf16.mxu0 0
        %298 = vmatpush1.bf16.msra.mxu0 0
        %299 = vmatprep.subr.bf16.mxu0 0
        %300 = vmatpush1.bf16.msra.mxu0 0
        %301 = vmatprep.subr.bf16.mxu0 0
        %302 = vmatpush1.bf16.msra.mxu0 0
        %303 = vmatprep.subr.bf16.mxu0 0
        %304 = vmatpush1.bf16.msra.mxu0 0
        %305 = vmatprep.subr.bf16.mxu0 0
        %306 = vmatpush1.bf16.msra.mxu0 0
        %307 = vmatprep.subr.bf16.mxu0 0
        %308 = vmatpush1.bf16.msra.mxu0 0
        %309 = vmatprep.subr.bf16.mxu0 0
        %310 = vmatpush1.bf16.msra.mxu0 0
        %311 = vmatprep.subr.bf16.mxu0 0
        %312 = vmatpush1.bf16.msra.mxu0 0
        %313 = vmatprep.subr.bf16.mxu0 0
        %314 = vmatpush1.bf16.msra.mxu0 0
        %315 = vmatprep.subr.bf16.mxu0 0
        %316 = vmatpush1.bf16.msra.mxu0 0
        %317 = vmatprep.subr.bf16.mxu0 0
        %318 = vmatpush1.bf16.msra.mxu0 0
        %319 = vmatprep.subr.bf16.mxu0 0
        %320 = vmatpush1.bf16.msra.mxu0 0
        %321 = vmatprep.subr.bf16.mxu0 0
        %322 = vmatpush1.bf16.msra.mxu0 0
        %323 = vmatprep.mubr.bf16.mxu0 0
        %324 = vmatmul.mubr.bf16.gmra.mrb[0].mxu0 %v286
        %v325 = vpop.f32.mrb[0].mxu0
        %v326 = vadd.f32 %v275, %v325
        %v327 = vpop.f32.mrb[0].mxu0
        %v328 = vpop.f32.mrb[0].mxu0
        %v329 = vpop.f32.mrb[0].mxu0
        %330 = vdwg.mxu0
        %v333 = vunpack.c.l.b16 %v225
        %v334 = vunpack.c.l.b16 %v226
        %v335 = vpack.c.b16 %v334, %v333
        %v337 = vsel %vm232, %v218, 0
        %v340 = vsel %vm236, %v335, 0
        %342 = vmatprep.subr.bf16.mxu0 0
        %343 = vmatpush1.bf16.msra.mxu0 %v340
        %344 = vmatprep.subr.bf16.mxu0 0
        %345 = vmatpush1.bf16.msra.mxu0 0
        %346 = vmatprep.subr.bf16.mxu0 0
        %347 = vmatpush1.bf16.msra.mxu0 0
        %348 = vmatprep.subr.bf16.mxu0 0
        %349 = vmatpush1.bf16.msra.mxu0 0
        %350 = vmatprep.subr.bf16.mxu0 0
        %351 = vmatpush1.bf16.msra.mxu0 0
        %352 = vmatprep.subr.bf16.mxu0 0
        %353 = vmatpush1.bf16.msra.mxu0 0
        %354 = vmatprep.subr.bf16.mxu0 0
        %355 = vmatpush1.bf16.msra.mxu0 0
        %356 = vmatprep.subr.bf16.mxu0 0
        %357 = vmatpush1.bf16.msra.mxu0 0
        %358 = vmatprep.subr.bf16.mxu0 0
        %359 = vmatpush1.bf16.msra.mxu0 0
        %360 = vmatprep.subr.bf16.mxu0 0
        %361 = vmatpush1.bf16.msra.mxu0 0
        %362 = vmatprep.subr.bf16.mxu0 0
        %363 = vmatpush1.bf16.msra.mxu0 0
        %364 = vmatprep.subr.bf16.mxu0 0
        %365 = vmatpush1.bf16.msra.mxu0 0
        %366 = vmatprep.subr.bf16.mxu0 0
        %367 = vmatpush1.bf16.msra.mxu0 0
        %368 = vmatprep.subr.bf16.mxu0 0
        %369 = vmatpush1.bf16.msra.mxu0 0
        %370 = vmatprep.subr.bf16.mxu0 0
        %371 = vmatpush1.bf16.msra.mxu0 0
        %372 = vmatprep.subr.bf16.mxu0 0
        %373 = vmatpush1.bf16.msra.mxu0 0
        %374 = vmatprep.mubr.bf16.mxu0 0
        %375 = vmatmul.mubr.bf16.gmra.mrb[0].mxu0 %v337
        %v376 = vpop.f32.mrb[0].mxu0
        %v377 = vadd.f32 0.0, %v376
        %v378 = vpop.f32.mrb[0].mxu0
        %v379 = vpop.f32.mrb[0].mxu0
        %v380 = vpop.f32.mrb[0].mxu0
        %381 = vdwg.mxu0
        %v383 = vsel %vm232, %v216, 0
        %385 = vmatprep.subr.bf16.mxu0 0
        %386 = vmatpush1.bf16.msra.mxu0 %v238
        %387 = vmatprep.subr.bf16.mxu0 0
        %388 = vmatpush1.bf16.msra.mxu0 0
        %389 = vmatprep.subr.bf16.mxu0 0
        %390 = vmatpush1.bf16.msra.mxu0 0
        %391 = vmatprep.subr.bf16.mxu0 0
        %392 = vmatpush1.bf16.msra.mxu0 0
        %393 = vmatprep.subr.bf16.mxu0 0
        %394 = vmatpush1.bf16.msra.mxu0 0
        %395 = vmatprep.subr.bf16.mxu0 0
        %396 = vmatpush1.bf16.msra.mxu0 0
        %397 = vmatprep.subr.bf16.mxu0 0
        %398 = vmatpush1.bf16.msra.mxu0 0
        %399 = vmatprep.subr.bf16.mxu0 0
        %400 = vmatpush1.bf16.msra.mxu0 0
        %401 = vmatprep.subr.bf16.mxu0 0
        %402 = vmatpush1.bf16.msra.mxu0 0
        %403 = vmatprep.subr.bf16.mxu0 0
        %404 = vmatpush1.bf16.msra.mxu0 0
        %405 = vmatprep.subr.bf16.mxu0 0
        %406 = vmatpush1.bf16.msra.mxu0 0
        %407 = vmatprep.subr.bf16.mxu0 0
        %408 = vmatpush1.bf16.msra.mxu0 0
        %409 = vmatprep.subr.bf16.mxu0 0
        %410 = vmatpush1.bf16.msra.mxu0 0
        %411 = vmatprep.subr.bf16.mxu0 0
        %412 = vmatpush1.bf16.msra.mxu0 0
        %413 = vmatprep.subr.bf16.mxu0 0
        %414 = vmatpush1.bf16.msra.mxu0 0
        %415 = vmatprep.subr.bf16.mxu0 0
        %416 = vmatpush1.bf16.msra.mxu0 0
        %417 = vmatprep.mubr.bf16.mxu0 0
        %418 = vmatmul.mubr.bf16.gmra.mrb[0].mxu0 %v383
        %v419 = vpop.f32.mrb[0].mxu0
        %v420 = vadd.f32 %v377, %v419
        %v421 = vpop.f32.mrb[0].mxu0
        %v422 = vpop.f32.mrb[0].mxu0
        %v423 = vpop.f32.mrb[0].mxu0
        %424 = vdwg.mxu0
        %v425 = vpack.c.bf16 %v326, %v326
        %vm426 = vcmask 257024
        %427 = vst.msk [vmem:[%s193] sm:$0xf] %vm426, %v425
        %v428 = vpack.c.bf16 %v420, %v420
        %v430 = vunpack.c.l.b16 %v428
        %v431 = vpack.c.b16 %v430, %v430
        %432 = vrot.lane.b32.xlu0 %v431, 32
        %v433 = vpop.permute.xlu0 %432
        %vm435 = vcmask 519424
        %436 = vst.msk [vmem:[%s193] sm:$0xf] %vm435, %v433
        %v437 = vadd.f32 %v326, 0.0
        %v438 = vadd.f32 %v437, %v420
        %v439 = vmul.f32 %v326, %v326
        %v440 = vadd.f32 %v439, 0.0
        %v441 = vmul.f32 %v420, %v420
        %v442 = vadd.f32 %v440, %v441
        %v443 = vld [vmem:[%s221] sm:$0xf]
        %v444 = vld [vmem:[%s221 + $0x4] sm:$0x3]
        %v445 = vld [vmem:[%s224] sm:$0xf]
        %v446 = vld [vmem:[%s224 + $0x4] sm:$0x3]
        %s447 = scalar_lea.vmem %s209, 24
        %v448 = vld [vmem:[%s447] sm:$0xf]
        %v449 = vld [vmem:[%s447 + $0x4] sm:$0x3]
        %v452 = vunpack.c.l.b16 %v445
        %v453 = vunpack.c.l.b16 %v446
        %v454 = vpack.c.b16 %v453, %v452
        %v456 = vsel %vm236, %v454, 0
        %458 = vmatprep.subr.bf16.mxu0 0
        %459 = vmatpush1.bf16.msra.mxu0 %v456
        %460 = vmatprep.subr.bf16.mxu0 0
        %461 = vmatpush1.bf16.msra.mxu0 0
        %462 = vmatprep.subr.bf16.mxu0 0
        %463 = vmatpush1.bf16.msra.mxu0 0
        %464 = vmatprep.subr.bf16.mxu0 0
        %465 = vmatpush1.bf16.msra.mxu0 0
        %466 = vmatprep.subr.bf16.mxu0 0
        %467 = vmatpush1.bf16.msra.mxu0 0
        %468 = vmatprep.subr.bf16.mxu0 0
        %469 = vmatpush1.bf16.msra.mxu0 0
        %470 = vmatprep.subr.bf16.mxu0 0
        %471 = vmatpush1.bf16.msra.mxu0 0
        %472 = vmatprep.subr.bf16.mxu0 0
        %473 = vmatpush1.bf16.msra.mxu0 0
        %474 = vmatprep.subr.bf16.mxu0 0
        %475 = vmatpush1.bf16.msra.mxu0 0
        %476 = vmatprep.subr.bf16.mxu0 0
        %477 = vmatpush1.bf16.msra.mxu0 0
        %478 = vmatprep.subr.bf16.mxu0 0
        %479 = vmatpush1.bf16.msra.mxu0 0
        %480 = vmatprep.subr.bf16.mxu0 0
        %481 = vmatpush1.bf16.msra.mxu0 0
        %482 = vmatprep.subr.bf16.mxu0 0
        %483 = vmatpush1.bf16.msra.mxu0 0
        %484 = vmatprep.subr.bf16.mxu0 0
        %485 = vmatpush1.bf16.msra.mxu0 0
        %486 = vmatprep.subr.bf16.mxu0 0
        %487 = vmatpush1.bf16.msra.mxu0 0
        %488 = vmatprep.subr.bf16.mxu0 0
        %489 = vmatpush1.bf16.msra.mxu0 0
        %490 = vmatprep.mubr.bf16.mxu0 0
        %491 = vmatmul.mubr.bf16.gmra.mrb[0].mxu0 %v234
        %v492 = vpop.f32.mrb[0].mxu0
        %v493 = vadd.f32 0.0, %v492
        %v494 = vpop.f32.mrb[0].mxu0
        %v495 = vpop.f32.mrb[0].mxu0
        %v496 = vpop.f32.mrb[0].mxu0
        %497 = vdwg.mxu0
        %v500 = vunpack.c.l.b16 %v443
        %v501 = vunpack.c.l.b16 %v444
        %v502 = vpack.c.b16 %v501, %v500
        %v504 = vsel %vm236, %v502, 0
        %506 = vmatprep.subr.bf16.mxu0 0
        %507 = vmatpush1.bf16.msra.mxu0 %v504
        %508 = vmatprep.subr.bf16.mxu0 0
        %509 = vmatpush1.bf16.msra.mxu0 0
        %510 = vmatprep.subr.bf16.mxu0 0
        %511 = vmatpush1.bf16.msra.mxu0 0
        %512 = vmatprep.subr.bf16.mxu0 0
        %513 = vmatpush1.bf16.msra.mxu0 0
        %514 = vmatprep.subr.bf16.mxu0 0
        %515 = vmatpush1.bf16.msra.mxu0 0
        %516 = vmatprep.subr.bf16.mxu0 0
        %517 = vmatpush1.bf16.msra.mxu0 0
        %518 = vmatprep.subr.bf16.mxu0 0
        %519 = vmatpush1.bf16.msra.mxu0 0
        %520 = vmatprep.subr.bf16.mxu0 0
        %521 = vmatpush1.bf16.msra.mxu0 0
        %522 = vmatprep.subr.bf16.mxu0 0
        %523 = vmatpush1.bf16.msra.mxu0 0
        %524 = vmatprep.subr.bf16.mxu0 0
        %525 = vmatpush1.bf16.msra.mxu0 0
        %526 = vmatprep.subr.bf16.mxu0 0
        %527 = vmatpush1.bf16.msra.mxu0 0
        %528 = vmatprep.subr.bf16.mxu0 0
        %529 = vmatpush1.bf16.msra.mxu0 0
        %530 = vmatprep.subr.bf16.mxu0 0
        %531 = vmatpush1.bf16.msra.mxu0 0
        %532 = vmatprep.subr.bf16.mxu0 0
        %533 = vmatpush1.bf16.msra.mxu0 0
        %534 = vmatprep.subr.bf16.mxu0 0
        %535 = vmatpush1.bf16.msra.mxu0 0
        %536 = vmatprep.subr.bf16.mxu0 0
        %537 = vmatpush1.bf16.msra.mxu0 0
        %538 = vmatprep.mubr.bf16.mxu0 0
        %539 = vmatmul.mubr.bf16.gmra.mrb[0].mxu0 %v286
        %v540 = vpop.f32.mrb[0].mxu0
        %v541 = vadd.f32 %v493, %v540
        %v542 = vpop.f32.mrb[0].mxu0
        %v543 = vpop.f32.mrb[0].mxu0
        %v544 = vpop.f32.mrb[0].mxu0
        %545 = vdwg.mxu0
        %v548 = vunpack.c.l.b16 %v448
        %v549 = vunpack.c.l.b16 %v449
        %v550 = vpack.c.b16 %v549, %v548
        %v552 = vsel %vm236, %v550, 0
        %554 = vmatprep.subr.bf16.mxu0 0
        %555 = vmatpush1.bf16.msra.mxu0 %v552
        %556 = vmatprep.subr.bf16.mxu0 0
        %557 = vmatpush1.bf16.msra.mxu0 0
        %558 = vmatprep.subr.bf16.mxu0 0
        %559 = vmatpush1.bf16.msra.mxu0 0
        %560 = vmatprep.subr.bf16.mxu0 0
        %561 = vmatpush1.bf16.msra.mxu0 0
        %562 = vmatprep.subr.bf16.mxu0 0
        %563 = vmatpush1.bf16.msra.mxu0 0
        %564 = vmatprep.subr.bf16.mxu0 0
        %565 = vmatpush1.bf16.msra.mxu0 0
        %566 = vmatprep.subr.bf16.mxu0 0
        %567 = vmatpush1.bf16.msra.mxu0 0
        %568 = vmatprep.subr.bf16.mxu0 0
        %569 = vmatpush1.bf16.msra.mxu0 0
        %570 = vmatprep.subr.bf16.mxu0 0
        %571 = vmatpush1.bf16.msra.mxu0 0
        %572 = vmatprep.subr.bf16.mxu0 0
        %573 = vmatpush1.bf16.msra.mxu0 0
        %574 = vmatprep.subr.bf16.mxu0 0
        %575 = vmatpush1.bf16.msra.mxu0 0
        %576 = vmatprep.subr.bf16.mxu0 0
        %577 = vmatpush1.bf16.msra.mxu0 0
        %578 = vmatprep.subr.bf16.mxu0 0
        %579 = vmatpush1.bf16.msra.mxu0 0
        %580 = vmatprep.subr.bf16.mxu0 0
        %581 = vmatpush1.bf16.msra.mxu0 0
        %582 = vmatprep.subr.bf16.mxu0 0
        %583 = vmatpush1.bf16.msra.mxu0 0
        %584 = vmatprep.subr.bf16.mxu0 0
        %585 = vmatpush1.bf16.msra.mxu0 0
        %586 = vmatprep.mubr.bf16.mxu0 0
        %587 = vmatmul.mubr.bf16.gmra.mrb[0].mxu0 %v337
        %v588 = vpop.f32.mrb[0].mxu0
        %v589 = vadd.f32 0.0, %v588
        %v590 = vpop.f32.mrb[0].mxu0
        %v591 = vpop.f32.mrb[0].mxu0
        %v592 = vpop.f32.mrb[0].mxu0
        %593 = vdwg.mxu0
        %594 = vmatprep.subr.bf16.mxu0 0
        %595 = vmatpush1.bf16.msra.mxu0 %v456
        %596 = vmatprep.subr.bf16.mxu0 0
        %597 = vmatpush1.bf16.msra.mxu0 0
        %598 = vmatprep.subr.bf16.mxu0 0
        %599 = vmatpush1.bf16.msra.mxu0 0
        %600 = vmatprep.subr.bf16.mxu0 0
        %601 = vmatpush1.bf16.msra.mxu0 0
        %602 = vmatprep.subr.bf16.mxu0 0
        %603 = vmatpush1.bf16.msra.mxu0 0
        %604 = vmatprep.subr.bf16.mxu0 0
        %605 = vmatpush1.bf16.msra.mxu0 0
        %606 = vmatprep.subr.bf16.mxu0 0
        %607 = vmatpush1.bf16.msra.mxu0 0
        %608 = vmatprep.subr.bf16.mxu0 0
        %609 = vmatpush1.bf16.msra.mxu0 0
        %610 = vmatprep.subr.bf16.mxu0 0
        %611 = vmatpush1.bf16.msra.mxu0 0
        %612 = vmatprep.subr.bf16.mxu0 0
        %613 = vmatpush1.bf16.msra.mxu0 0
        %614 = vmatprep.subr.bf16.mxu0 0
        %615 = vmatpush1.bf16.msra.mxu0 0
        %616 = vmatprep.subr.bf16.mxu0 0
        %617 = vmatpush1.bf16.msra.mxu0 0
        %618 = vmatprep.subr.bf16.mxu0 0
        %619 = vmatpush1.bf16.msra.mxu0 0
        %620 = vmatprep.subr.bf16.mxu0 0
        %621 = vmatpush1.bf16.msra.mxu0 0
        %622 = vmatprep.subr.bf16.mxu0 0
        %623 = vmatpush1.bf16.msra.mxu0 0
        %624 = vmatprep.subr.bf16.mxu0 0
        %625 = vmatpush1.bf16.msra.mxu0 0
        %626 = vmatprep.mubr.bf16.mxu0 0
        %627 = vmatmul.mubr.bf16.gmra.mrb[0].mxu0 %v383
        %v628 = vpop.f32.mrb[0].mxu0
        %v629 = vadd.f32 %v589, %v628
        %v630 = vpop.f32.mrb[0].mxu0
        %v631 = vpop.f32.mrb[0].mxu0
        %v632 = vpop.f32.mrb[0].mxu0
        %633 = vdwg.mxu0
        %v634 = vpack.c.bf16 %v541, %v541
        %v636 = vunpack.c.l.b16 %v634
        %v637 = vpack.c.b16 %v636, %v636
        %638 = vrot.lane.b32.xlu0 %v637, 64
        %v639 = vpop.permute.xlu0 %638
        %vm641 = vcmask 781824
        %642 = vst.msk [vmem:[%s193] sm:$0xf] %vm641, %v639
        %v643 = vpack.c.bf16 %v629, %v629
        %v645 = vunpack.c.l.b16 %v643
        %v646 = vpack.c.b16 %v645, %v645
        %647 = vrot.lane.b32.xlu0 %v646, 96
        %v648 = vpop.permute.xlu0 %647
        %vm650 = vcmask 1044224
        %651 = vst.msk [vmem:[%s193] sm:$0xf] %vm650, %v648
        %v652 = vadd.f32 %v438, %v541
        %v653 = vadd.f32 %v652, %v629
        %v654 = vmul.f32 %v541, %v541
        %v655 = vadd.f32 %v442, %v654
        %v656 = vmul.f32 %v629, %v629
        %v657 = vadd.f32 %v655, %v656
        %v658 = vld [vmem:[%s224] sm:$0xf]
        %v659 = vld [vmem:[%s224 + $0x4] sm:$0x3]
        %v660 = vld [vmem:[%s447] sm:$0xf]
        %v661 = vld [vmem:[%s447 + $0x4] sm:$0x3]
        %s662 = scalar_lea.vmem %s209, 32
        %v663 = vld [vmem:[%s662] sm:$0xf]
        %v664 = vld [vmem:[%s662 + $0x4] sm:$0x3]
        %v667 = vunpack.c.l.b16 %v660
        %v668 = vunpack.c.l.b16 %v661
        %v669 = vpack.c.b16 %v668, %v667
        %v671 = vsel %vm236, %v669, 0
        %673 = vmatprep.subr.bf16.mxu0 0
        %674 = vmatpush1.bf16.msra.mxu0 %v671
        %675 = vmatprep.subr.bf16.mxu0 0
        %676 = vmatpush1.bf16.msra.mxu0 0
        %677 = vmatprep.subr.bf16.mxu0 0
        %678 = vmatpush1.bf16.msra.mxu0 0
        %679 = vmatprep.subr.bf16.mxu0 0
        %680 = vmatpush1.bf16.msra.mxu0 0
        %681 = vmatprep.subr.bf16.mxu0 0
        %682 = vmatpush1.bf16.msra.mxu0 0
        %683 = vmatprep.subr.bf16.mxu0 0
        %684 = vmatpush1.bf16.msra.mxu0 0
        %685 = vmatprep.subr.bf16.mxu0 0
        %686 = vmatpush1.bf16.msra.mxu0 0
        %687 = vmatprep.subr.bf16.mxu0 0
        %688 = vmatpush1.bf16.msra.mxu0 0
        %689 = vmatprep.subr.bf16.mxu0 0
        %690 = vmatpush1.bf16.msra.mxu0 0
        %691 = vmatprep.subr.bf16.mxu0 0
        %692 = vmatpush1.bf16.msra.mxu0 0
        %693 = vmatprep.subr.bf16.mxu0 0
        %694 = vmatpush1.bf16.msra.mxu0 0
        %695 = vmatprep.subr.bf16.mxu0 0
        %696 = vmatpush1.bf16.msra.mxu0 0
        %697 = vmatprep.subr.bf16.mxu0 0
        %698 = vmatpush1.bf16.msra.mxu0 0
        %699 = vmatprep.subr.bf16.mxu0 0
        %700 = vmatpush1.bf16.msra.mxu0 0
        %701 = vmatprep.subr.bf16.mxu0 0
        %702 = vmatpush1.bf16.msra.mxu0 0
        %703 = vmatprep.subr.bf16.mxu0 0
        %704 = vmatpush1.bf16.msra.mxu0 0
        %705 = vmatprep.mubr.bf16.mxu0 0
        %706 = vmatmul.mubr.bf16.gmra.mrb[0].mxu0 %v234
        %v707 = vpop.f32.mrb[0].mxu0
        %v708 = vadd.f32 0.0, %v707
        %v709 = vpop.f32.mrb[0].mxu0
        %v710 = vpop.f32.mrb[0].mxu0
        %v711 = vpop.f32.mrb[0].mxu0
        %712 = vdwg.mxu0
        %v715 = vunpack.c.l.b16 %v658
        %v716 = vunpack.c.l.b16 %v659
        %v717 = vpack.c.b16 %v716, %v715
        %v719 = vsel %vm236, %v717, 0
        %721 = vmatprep.subr.bf16.mxu0 0
        %722 = vmatpush1.bf16.msra.mxu0 %v719
        %723 = vmatprep.subr.bf16.mxu0 0
        %724 = vmatpush1.bf16.msra.mxu0 0
        %725 = vmatprep.subr.bf16.mxu0 0
        %726 = vmatpush1.bf16.msra.mxu0 0
        %727 = vmatprep.subr.bf16.mxu0 0
        %728 = vmatpush1.bf16.msra.mxu0 0
        %729 = vmatprep.subr.bf16.mxu0 0
        %730 = vmatpush1.bf16.msra.mxu0 0
        %731 = vmatprep.subr.bf16.mxu0 0
        %732 = vmatpush1.bf16.msra.mxu0 0
        %733 = vmatprep.subr.bf16.mxu0 0
        %734 = vmatpush1.bf16.msra.mxu0 0
        %735 = vmatprep.subr.bf16.mxu0 0
        %736 = vmatpush1.bf16.msra.mxu0 0
        %737 = vmatprep.subr.bf16.mxu0 0
        %738 = vmatpush1.bf16.msra.mxu0 0
        %739 = vmatprep.subr.bf16.mxu0 0
        %740 = vmatpush1.bf16.msra.mxu0 0
        %741 = vmatprep.subr.bf16.mxu0 0
        %742 = vmatpush1.bf16.msra.mxu0 0
        %743 = vmatprep.subr.bf16.mxu0 0
        %744 = vmatpush1.bf16.msra.mxu0 0
        %745 = vmatprep.subr.bf16.mxu0 0
        %746 = vmatpush1.bf16.msra.mxu0 0
        %747 = vmatprep.subr.bf16.mxu0 0
        %748 = vmatpush1.bf16.msra.mxu0 0
        %749 = vmatprep.subr.bf16.mxu0 0
        %750 = vmatpush1.bf16.msra.mxu0 0
        %751 = vmatprep.subr.bf16.mxu0 0
        %752 = vmatpush1.bf16.msra.mxu0 0
        %753 = vmatprep.mubr.bf16.mxu0 0
        %754 = vmatmul.mubr.bf16.gmra.mrb[0].mxu0 %v286
        %v755 = vpop.f32.mrb[0].mxu0
        %v756 = vadd.f32 %v708, %v755
        %v757 = vpop.f32.mrb[0].mxu0
        %v758 = vpop.f32.mrb[0].mxu0
        %v759 = vpop.f32.mrb[0].mxu0
        %760 = vdwg.mxu0
        %v763 = vunpack.c.l.b16 %v663
        %v764 = vunpack.c.l.b16 %v664
        %v765 = vpack.c.b16 %v764, %v763
        %v767 = vsel %vm236, %v765, 0
        %769 = vmatprep.subr.bf16.mxu0 0
        %770 = vmatpush1.bf16.msra.mxu0 %v767
        %771 = vmatprep.subr.bf16.mxu0 0
        %772 = vmatpush1.bf16.msra.mxu0 0
        %773 = vmatprep.subr.bf16.mxu0 0
        %774 = vmatpush1.bf16.msra.mxu0 0
        %775 = vmatprep.subr.bf16.mxu0 0
        %776 = vmatpush1.bf16.msra.mxu0 0
        %777 = vmatprep.subr.bf16.mxu0 0
        %778 = vmatpush1.bf16.msra.mxu0 0
        %779 = vmatprep.subr.bf16.mxu0 0
        %780 = vmatpush1.bf16.msra.mxu0 0
        %781 = vmatprep.subr.bf16.mxu0 0
        %782 = vmatpush1.bf16.msra.mxu0 0
        %783 = vmatprep.subr.bf16.mxu0 0
        %784 = vmatpush1.bf16.msra.mxu0 0
        %785 = vmatprep.subr.bf16.mxu0 0
        %786 = vmatpush1.bf16.msra.mxu0 0
        %787 = vmatprep.subr.bf16.mxu0 0
        %788 = vmatpush1.bf16.msra.mxu0 0
        %789 = vmatprep.subr.bf16.mxu0 0
        %790 = vmatpush1.bf16.msra.mxu0 0
        %791 = vmatprep.subr.bf16.mxu0 0
        %792 = vmatpush1.bf16.msra.mxu0 0
        %793 = vmatprep.subr.bf16.mxu0 0
        %794 = vmatpush1.bf16.msra.mxu0 0
        %795 = vmatprep.subr.bf16.mxu0 0
        %796 = vmatpush1.bf16.msra.mxu0 0
        %797 = vmatprep.subr.bf16.mxu0 0
        %798 = vmatpush1.bf16.msra.mxu0 0
        %799 = vmatprep.subr.bf16.mxu0 0
        %800 = vmatpush1.bf16.msra.mxu0 0
        %801 = vmatprep.mubr.bf16.mxu0 0
        %802 = vmatmul.mubr.bf16.gmra.mrb[0].mxu0 %v337
        %v803 = vpop.f32.mrb[0].mxu0
        %v804 = vadd.f32 0.0, %v803
        %v805 = vpop.f32.mrb[0].mxu0
        %v806 = vpop.f32.mrb[0].mxu0
        %v807 = vpop.f32.mrb[0].mxu0
        %808 = vdwg.mxu0
        %809 = vmatprep.subr.bf16.mxu0 0
        %810 = vmatpush1.bf16.msra.mxu0 %v671
        %811 = vmatprep.subr.bf16.mxu0 0
        %812 = vmatpush1.bf16.msra.mxu0 0
        %813 = vmatprep.subr.bf16.mxu0 0
        %814 = vmatpush1.bf16.msra.mxu0 0
        %815 = vmatprep.subr.bf16.mxu0 0
        %816 = vmatpush1.bf16.msra.mxu0 0
        %817 = vmatprep.subr.bf16.mxu0 0
        %818 = vmatpush1.bf16.msra.mxu0 0
        %819 = vmatprep.subr.bf16.mxu0 0
        %820 = vmatpush1.bf16.msra.mxu0 0
        %821 = vmatprep.subr.bf16.mxu0 0
        %822 = vmatpush1.bf16.msra.mxu0 0
        %823 = vmatprep.subr.bf16.mxu0 0
        %824 = vmatpush1.bf16.msra.mxu0 0
        %825 = vmatprep.subr.bf16.mxu0 0
        %826 = vmatpush1.bf16.msra.mxu0 0
        %827 = vmatprep.subr.bf16.mxu0 0
        %828 = vmatpush1.bf16.msra.mxu0 0
        %829 = vmatprep.subr.bf16.mxu0 0
        %830 = vmatpush1.bf16.msra.mxu0 0
        %831 = vmatprep.subr.bf16.mxu0 0
        %832 = vmatpush1.bf16.msra.mxu0 0
        %833 = vmatprep.subr.bf16.mxu0 0
        %834 = vmatpush1.bf16.msra.mxu0 0
        %835 = vmatprep.subr.bf16.mxu0 0
        %836 = vmatpush1.bf16.msra.mxu0 0
        %837 = vmatprep.subr.bf16.mxu0 0
        %838 = vmatpush1.bf16.msra.mxu0 0
        %839 = vmatprep.subr.bf16.mxu0 0
        %840 = vmatpush1.bf16.msra.mxu0 0
        %841 = vmatprep.mubr.bf16.mxu0 0
        %842 = vmatmul.mubr.bf16.gmra.mrb[0].mxu0 %v383
        %v843 = vpop.f32.mrb[0].mxu0
        %v844 = vadd.f32 %v804, %v843
        %v845 = vpop.f32.mrb[0].mxu0
        %v846 = vpop.f32.mrb[0].mxu0
        %v847 = vpop.f32.mrb[0].mxu0
        %848 = vdwg.mxu0
        %v849 = vpack.c.bf16 %v756, %v756
        %850 = vst.msk [vmem:[%s193 + $0x4] sm:$0xf] %vm426, %v849
        %v851 = vpack.c.bf16 %v844, %v844
        %v853 = vunpack.c.l.b16 %v851
        %v854 = vpack.c.b16 %v853, %v853
        %855 = vrot.lane.b32.xlu0 %v854, 32
        %v856 = vpop.permute.xlu0 %855
        %858 = vst.msk [vmem:[%s193 + $0x4] sm:$0xf] %vm435, %v856
        %v859 = vadd.f32 %v653, %v756
        %v860 = vadd.f32 %v859, %v844
        %v861 = vmul.f32 %v756, %v756
        %v862 = vadd.f32 %v657, %v861
        %v863 = vmul.f32 %v844, %v844
        %v864 = vadd.f32 %v862, %v863
        %v865 = vld [vmem:[%s447] sm:$0xf]
        %v866 = vld [vmem:[%s447 + $0x4] sm:$0x3]
        %v867 = vld [vmem:[%s662] sm:$0xf]
        %v868 = vld [vmem:[%s662 + $0x4] sm:$0x3]
        %s869 = scalar_lea.vmem %s209, 40
        %v870 = vld [vmem:[%s869] sm:$0xf]
        %v871 = vld [vmem:[%s869 + $0x4] sm:$0x3]
        %v874 = vunpack.c.l.b16 %v867
        %v875 = vunpack.c.l.b16 %v868
        %v876 = vpack.c.b16 %v875, %v874
        %v878 = vsel %vm236, %v876, 0
        %880 = vmatprep.subr.bf16.mxu0 0
        %881 = vmatpush1.bf16.msra.mxu0 %v878
        %882 = vmatprep.subr.bf16.mxu0 0
        %883 = vmatpush1.bf16.msra.mxu0 0
        %884 = vmatprep.subr.bf16.mxu0 0
        %885 = vmatpush1.bf16.msra.mxu0 0
        %886 = vmatprep.subr.bf16.mxu0 0
        %887 = vmatpush1.bf16.msra.mxu0 0
        %888 = vmatprep.subr.bf16.mxu0 0
        %889 = vmatpush1.bf16.msra.mxu0 0
        %890 = vmatprep.subr.bf16.mxu0 0
        %891 = vmatpush1.bf16.msra.mxu0 0
        %892 = vmatprep.subr.bf16.mxu0 0
        %893 = vmatpush1.bf16.msra.mxu0 0
        %894 = vmatprep.subr.bf16.mxu0 0
        %895 = vmatpush1.bf16.msra.mxu0 0
        %896 = vmatprep.subr.bf16.mxu0 0
        %897 = vmatpush1.bf16.msra.mxu0 0
        %898 = vmatprep.subr.bf16.mxu0 0
        %899 = vmatpush1.bf16.msra.mxu0 0
        %900 = vmatprep.subr.bf16.mxu0 0
        %901 = vmatpush1.bf16.msra.mxu0 0
        %902 = vmatprep.subr.bf16.mxu0 0
        %903 = vmatpush1.bf16.msra.mxu0 0
        %904 = vmatprep.subr.bf16.mxu0 0
        %905 = vmatpush1.bf16.msra.mxu0 0
        %906 = vmatprep.subr.bf16.mxu0 0
        %907 = vmatpush1.bf16.msra.mxu0 0
        %908 = vmatprep.subr.bf16.mxu0 0
        %909 = vmatpush1.bf16.msra.mxu0 0
        %910 = vmatprep.subr.bf16.mxu0 0
        %911 = vmatpush1.bf16.msra.mxu0 0
        %912 = vmatprep.mubr.bf16.mxu0 0
        %913 = vmatmul.mubr.bf16.gmra.mrb[0].mxu0 %v234
        %v914 = vpop.f32.mrb[0].mxu0
        %v915 = vadd.f32 0.0, %v914
        %v916 = vpop.f32.mrb[0].mxu0
        %v917 = vpop.f32.mrb[0].mxu0
        %v918 = vpop.f32.mrb[0].mxu0
        %919 = vdwg.mxu0
        %v922 = vunpack.c.l.b16 %v865
        %v923 = vunpack.c.l.b16 %v866
        %v924 = vpack.c.b16 %v923, %v922
        %v926 = vsel %vm236, %v924, 0
        %928 = vmatprep.subr.bf16.mxu0 0
        %929 = vmatpush1.bf16.msra.mxu0 %v926
        %930 = vmatprep.subr.bf16.mxu0 0
        %931 = vmatpush1.bf16.msra.mxu0 0
        %932 = vmatprep.subr.bf16.mxu0 0
        %933 = vmatpush1.bf16.msra.mxu0 0
        %934 = vmatprep.subr.bf16.mxu0 0
        %935 = vmatpush1.bf16.msra.mxu0 0
        %936 = vmatprep.subr.bf16.mxu0 0
        %937 = vmatpush1.bf16.msra.mxu0 0
        %938 = vmatprep.subr.bf16.mxu0 0
        %939 = vmatpush1.bf16.msra.mxu0 0
        %940 = vmatprep.subr.bf16.mxu0 0
        %941 = vmatpush1.bf16.msra.mxu0 0
        %942 = vmatprep.subr.bf16.mxu0 0
        %943 = vmatpush1.bf16.msra.mxu0 0
        %944 = vmatprep.subr.bf16.mxu0 0
        %945 = vmatpush1.bf16.msra.mxu0 0
        %946 = vmatprep.subr.bf16.mxu0 0
        %947 = vmatpush1.bf16.msra.mxu0 0
        %948 = vmatprep.subr.bf16.mxu0 0
        %949 = vmatpush1.bf16.msra.mxu0 0
        %950 = vmatprep.subr.bf16.mxu0 0
        %951 = vmatpush1.bf16.msra.mxu0 0
        %952 = vmatprep.subr.bf16.mxu0 0
        %953 = vmatpush1.bf16.msra.mxu0 0
        %954 = vmatprep.subr.bf16.mxu0 0
        %955 = vmatpush1.bf16.msra.mxu0 0
        %956 = vmatprep.subr.bf16.mxu0 0
        %957 = vmatpush1.bf16.msra.mxu0 0
        %958 = vmatprep.subr.bf16.mxu0 0
        %959 = vmatpush1.bf16.msra.mxu0 0
        %960 = vmatprep.mubr.bf16.mxu0 0
        %961 = vmatmul.mubr.bf16.gmra.mrb[0].mxu0 %v286
        %v962 = vpop.f32.mrb[0].mxu0
        %v963 = vadd.f32 %v915, %v962
        %v964 = vpop.f32.mrb[0].mxu0
        %v965 = vpop.f32.mrb[0].mxu0
        %v966 = vpop.f32.mrb[0].mxu0
        %967 = vdwg.mxu0
        %v970 = vunpack.c.l.b16 %v870
        %v971 = vunpack.c.l.b16 %v871
        %v972 = vpack.c.b16 %v971, %v970
        %v974 = vsel %vm236, %v972, 0
        %976 = vmatprep.subr.bf16.mxu0 0
        %977 = vmatpush1.bf16.msra.mxu0 %v974
        %978 = vmatprep.subr.bf16.mxu0 0
        %979 = vmatpush1.bf16.msra.mxu0 0
        %980 = vmatprep.subr.bf16.mxu0 0
        %981 = vmatpush1.bf16.msra.mxu0 0
        %982 = vmatprep.subr.bf16.mxu0 0
        %983 = vmatpush1.bf16.msra.mxu0 0
        %984 = vmatprep.subr.bf16.mxu0 0
        %985 = vmatpush1.bf16.msra.mxu0 0
        %986 = vmatprep.subr.bf16.mxu0 0
        %987 = vmatpush1.bf16.msra.mxu0 0
        %988 = vmatprep.subr.bf16.mxu0 0
        %989 = vmatpush1.bf16.msra.mxu0 0
        %990 = vmatprep.subr.bf16.mxu0 0
        %991 = vmatpush1.bf16.msra.mxu0 0
        %992 = vmatprep.subr.bf16.mxu0 0
        %993 = vmatpush1.bf16.msra.mxu0 0
        %994 = vmatprep.subr.bf16.mxu0 0
        %995 = vmatpush1.bf16.msra.mxu0 0
        %996 = vmatprep.subr.bf16.mxu0 0
        %997 = vmatpush1.bf16.msra.mxu0 0
        %998 = vmatprep.subr.bf16.mxu0 0
        %999 = vmatpush1.bf16.msra.mxu0 0
        %1000 = vmatprep.subr.bf16.mxu0 0
        %1001 = vmatpush1.bf16.msra.mxu0 0
        %1002 = vmatprep.subr.bf16.mxu0 0
        %1003 = vmatpush1.bf16.msra.mxu0 0
        %1004 = vmatprep.subr.bf16.mxu0 0
        %1005 = vmatpush1.bf16.msra.mxu0 0
        %1006 = vmatprep.subr.bf16.mxu0 0
        %1007 = vmatpush1.bf16.msra.mxu0 0
        %1008 = vmatprep.mubr.bf16.mxu0 0
        %1009 = vmatmul.mubr.bf16.gmra.mrb[0].mxu0 %v337
        %v1010 = vpop.f32.mrb[0].mxu0
        %v1011 = vadd.f32 0.0, %v1010
        %v1012 = vpop.f32.mrb[0].mxu0
        %v1013 = vpop.f32.mrb[0].mxu0
        %v1014 = vpop.f32.mrb[0].mxu0
        %1015 = vdwg.mxu0
        %1016 = vmatprep.subr.bf16.mxu0 0
        %1017 = vmatpush1.bf16.msra.mxu0 %v878
        %1018 = vmatprep.subr.bf16.mxu0 0
        %1019 = vmatpush1.bf16.msra.mxu0 0
        %1020 = vmatprep.subr.bf16.mxu0 0
        %1021 = vmatpush1.bf16.msra.mxu0 0
        %1022 = vmatprep.subr.bf16.mxu0 0
        %1023 = vmatpush1.bf16.msra.mxu0 0
        %1024 = vmatprep.subr.bf16.mxu0 0
        %1025 = vmatpush1.bf16.msra.mxu0 0
        %1026 = vmatprep.subr.bf16.mxu0 0
        %1027 = vmatpush1.bf16.msra.mxu0 0
        %1028 = vmatprep.subr.bf16.mxu0 0
        %1029 = vmatpush1.bf16.msra.mxu0 0
        %1030 = vmatprep.subr.bf16.mxu0 0
        %1031 = vmatpush1.bf16.msra.mxu0 0
        %1032 = vmatprep.subr.bf16.mxu0 0
        %1033 = vmatpush1.bf16.msra.mxu0 0
        %1034 = vmatprep.subr.bf16.mxu0 0
        %1035 = vmatpush1.bf16.msra.mxu0 0
        %1036 = vmatprep.subr.bf16.mxu0 0
        %1037 = vmatpush1.bf16.msra.mxu0 0
        %1038 = vmatprep.subr.bf16.mxu0 0
        %1039 = vmatpush1.bf16.msra.mxu0 0
        %1040 = vmatprep.subr.bf16.mxu0 0
        %1041 = vmatpush1.bf16.msra.mxu0 0
        %1042 = vmatprep.subr.bf16.mxu0 0
        %1043 = vmatpush1.bf16.msra.mxu0 0
        %1044 = vmatprep.subr.bf16.mxu0 0
        %1045 = vmatpush1.bf16.msra.mxu0 0
        %1046 = vmatprep.subr.bf16.mxu0 0
        %1047 = vmatpush1.bf16.msra.mxu0 0
        %1048 = vmatprep.mubr.bf16.mxu0 0
        %1049 = vmatmul.mubr.bf16.gmra.mrb[0].mxu0 %v383
        %v1050 = vpop.f32.mrb[0].mxu0
        %v1051 = vadd.f32 %v1011, %v1050
        %v1052 = vpop.f32.mrb[0].mxu0
        %v1053 = vpop.f32.mrb[0].mxu0
        %v1054 = vpop.f32.mrb[0].mxu0
        %1055 = vdwg.mxu0
        %v1056 = vpack.c.bf16 %v963, %v963
        %v1058 = vunpack.c.l.b16 %v1056
        %v1059 = vpack.c.b16 %v1058, %v1058
        %1060 = vrot.lane.b32.xlu0 %v1059, 64
        %v1061 = vpop.permute.xlu0 %1060
        %1063 = vst.msk [vmem:[%s193 + $0x4] sm:$0xf] %vm641, %v1061
        %v1064 = vpack.c.bf16 %v1051, %v1051
        %v1066 = vunpack.c.l.b16 %v1064
        %v1067 = vpack.c.b16 %v1066, %v1066
        %1068 = vrot.lane.b32.xlu0 %v1067, 96
        %v1069 = vpop.permute.xlu0 %1068
        %1071 = vst.msk [vmem:[%s193 + $0x4] sm:$0xf] %vm650, %v1069
        %v1072 = vadd.f32 %v860, %v963
        %v1073 = vadd.f32 %v1072, %v1051
        %v1074 = vmul.f32 %v963, %v963
        %v1075 = vadd.f32 %v864, %v1074
        %v1076 = vmul.f32 %v1051, %v1051
        %v1077 = vadd.f32 %v1075, %v1076
        %v1078 = vld [vmem:[%s662] sm:$0xf]
        %v1079 = vld [vmem:[%s662 + $0x4] sm:$0x3]
        %v1080 = vld [vmem:[%s869] sm:$0xf]
        %v1081 = vld [vmem:[%s869 + $0x4] sm:$0x3]
        %s1082 = scalar_lea.vmem %s209, 48
        %v1083 = vld [vmem:[%s1082] sm:$0xf]
        %v1084 = vld [vmem:[%s1082 + $0x4] sm:$0x3]
        %v1087 = vunpack.c.l.b16 %v1080
        %v1088 = vunpack.c.l.b16 %v1081
        %v1089 = vpack.c.b16 %v1088, %v1087
        %v1091 = vsel %vm236, %v1089, 0
        %1093 = vmatprep.subr.bf16.mxu0 0
        %1094 = vmatpush1.bf16.msra.mxu0 %v1091
        %1095 = vmatprep.subr.bf16.mxu0 0
        %1096 = vmatpush1.bf16.msra.mxu0 0
        %1097 = vmatprep.subr.bf16.mxu0 0
        %1098 = vmatpush1.bf16.msra.mxu0 0
        %1099 = vmatprep.subr.bf16.mxu0 0
        %1100 = vmatpush1.bf16.msra.mxu0 0
        %1101 = vmatprep.subr.bf16.mxu0 0
        %1102 = vmatpush1.bf16.msra.mxu0 0
        %1103 = vmatprep.subr.bf16.mxu0 0
        %1104 = vmatpush1.bf16.msra.mxu0 0
        %1105 = vmatprep.subr.bf16.mxu0 0
        %1106 = vmatpush1.bf16.msra.mxu0 0
        %1107 = vmatprep.subr.bf16.mxu0 0
        %1108 = vmatpush1.bf16.msra.mxu0 0
        %1109 = vmatprep.subr.bf16.mxu0 0
        %1110 = vmatpush1.bf16.msra.mxu0 0
        %1111 = vmatprep.subr.bf16.mxu0 0
        %1112 = vmatpush1.bf16.msra.mxu0 0
        %1113 = vmatprep.subr.bf16.mxu0 0
        %1114 = vmatpush1.bf16.msra.mxu0 0
        %1115 = vmatprep.subr.bf16.mxu0 0
        %1116 = vmatpush1.bf16.msra.mxu0 0
        %1117 = vmatprep.subr.bf16.mxu0 0
        %1118 = vmatpush1.bf16.msra.mxu0 0
        %1119 = vmatprep.subr.bf16.mxu0 0
        %1120 = vmatpush1.bf16.msra.mxu0 0
        %1121 = vmatprep.subr.bf16.mxu0 0
        %1122 = vmatpush1.bf16.msra.mxu0 0
        %1123 = vmatprep.subr.bf16.mxu0 0
        %1124 = vmatpush1.bf16.msra.mxu0 0
        %1125 = vmatprep.mubr.bf16.mxu0 0
        %1126 = vmatmul.mubr.bf16.gmra.mrb[0].mxu0 %v234
        %v1127 = vpop.f32.mrb[0].mxu0
        %v1128 = vadd.f32 0.0, %v1127
        %v1129 = vpop.f32.mrb[0].mxu0
        %v1130 = vpop.f32.mrb[0].mxu0
        %v1131 = vpop.f32.mrb[0].mxu0
        %1132 = vdwg.mxu0
        %v1135 = vunpack.c.l.b16 %v1078
        %v1136 = vunpack.c.l.b16 %v1079
        %v1137 = vpack.c.b16 %v1136, %v1135
        %v1139 = vsel %vm236, %v1137, 0
        %1141 = vmatprep.subr.bf16.mxu0 0
        %1142 = vmatpush1.bf16.msra.mxu0 %v1139
        %1143 = vmatprep.subr.bf16.mxu0 0
        %1144 = vmatpush1.bf16.msra.mxu0 0
        %1145 = vmatprep.subr.bf16.mxu0 0
        %1146 = vmatpush1.bf16.msra.mxu0 0
        %1147 = vmatprep.subr.bf16.mxu0 0
        %1148 = vmatpush1.bf16.msra.mxu0 0
        %1149 = vmatprep.subr.bf16.mxu0 0
        %1150 = vmatpush1.bf16.msra.mxu0 0
        %1151 = vmatprep.subr.bf16.mxu0 0
        %1152 = vmatpush1.bf16.msra.mxu0 0
        %1153 = vmatprep.subr.bf16.mxu0 0
        %1154 = vmatpush1.bf16.msra.mxu0 0
        %1155 = vmatprep.subr.bf16.mxu0 0
        %1156 = vmatpush1.bf16.msra.mxu0 0
        %1157 = vmatprep.subr.bf16.mxu0 0
        %1158 = vmatpush1.bf16.msra.mxu0 0
        %1159 = vmatprep.subr.bf16.mxu0 0
        %1160 = vmatpush1.bf16.msra.mxu0 0
        %1161 = vmatprep.subr.bf16.mxu0 0
        %1162 = vmatpush1.bf16.msra.mxu0 0
        %1163 = vmatprep.subr.bf16.mxu0 0
        %1164 = vmatpush1.bf16.msra.mxu0 0
        %1165 = vmatprep.subr.bf16.mxu0 0
        %1166 = vmatpush1.bf16.msra.mxu0 0
        %1167 = vmatprep.subr.bf16.mxu0 0
        %1168 = vmatpush1.bf16.msra.mxu0 0
        %1169 = vmatprep.subr.bf16.mxu0 0
        %1170 = vmatpush1.bf16.msra.mxu0 0
        %1171 = vmatprep.subr.bf16.mxu0 0
        %1172 = vmatpush1.bf16.msra.mxu0 0
        %1173 = vmatprep.mubr.bf16.mxu0 0
        %1174 = vmatmul.mubr.bf16.gmra.mrb[0].mxu0 %v286
        %v1175 = vpop.f32.mrb[0].mxu0
        %v1176 = vadd.f32 %v1128, %v1175
        %v1177 = vpop.f32.mrb[0].mxu0
        %v1178 = vpop.f32.mrb[0].mxu0
        %v1179 = vpop.f32.mrb[0].mxu0
        %1180 = vdwg.mxu0
        %v1183 = vunpack.c.l.b16 %v1083
        %v1184 = vunpack.c.l.b16 %v1084
        %v1185 = vpack.c.b16 %v1184, %v1183
        %v1187 = vsel %vm236, %v1185, 0
        %1189 = vmatprep.subr.bf16.mxu0 0
        %1190 = vmatpush1.bf16.msra.mxu0 %v1187
        %1191 = vmatprep.subr.bf16.mxu0 0
        %1192 = vmatpush1.bf16.msra.mxu0 0
        %1193 = vmatprep.subr.bf16.mxu0 0
        %1194 = vmatpush1.bf16.msra.mxu0 0
        %1195 = vmatprep.subr.bf16.mxu0 0
        %1196 = vmatpush1.bf16.msra.mxu0 0
        %1197 = vmatprep.subr.bf16.mxu0 0
        %1198 = vmatpush1.bf16.msra.mxu0 0
        %1199 = vmatprep.subr.bf16.mxu0 0
        %1200 = vmatpush1.bf16.msra.mxu0 0
        %1201 = vmatprep.subr.bf16.mxu0 0
        %1202 = vmatpush1.bf16.msra.mxu0 0
        %1203 = vmatprep.subr.bf16.mxu0 0
        %1204 = vmatpush1.bf16.msra.mxu0 0
        %1205 = vmatprep.subr.bf16.mxu0 0
        %1206 = vmatpush1.bf16.msra.mxu0 0
        %1207 = vmatprep.subr.bf16.mxu0 0
        %1208 = vmatpush1.bf16.msra.mxu0 0
        %1209 = vmatprep.subr.bf16.mxu0 0
        %1210 = vmatpush1.bf16.msra.mxu0 0
        %1211 = vmatprep.subr.bf16.mxu0 0
        %1212 = vmatpush1.bf16.msra.mxu0 0
        %1213 = vmatprep.subr.bf16.mxu0 0
        %1214 = vmatpush1.bf16.msra.mxu0 0
        %1215 = vmatprep.subr.bf16.mxu0 0
        %1216 = vmatpush1.bf16.msra.mxu0 0
        %1217 = vmatprep.subr.bf16.mxu0 0
        %1218 = vmatpush1.bf16.msra.mxu0 0
        %1219 = vmatprep.subr.bf16.mxu0 0
        %1220 = vmatpush1.bf16.msra.mxu0 0
        %1221 = vmatprep.mubr.bf16.mxu0 0
        %1222 = vmatmul.mubr.bf16.gmra.mrb[0].mxu0 %v337
        %v1223 = vpop.f32.mrb[0].mxu0
        %v1224 = vadd.f32 0.0, %v1223
        %v1225 = vpop.f32.mrb[0].mxu0
        %v1226 = vpop.f32.mrb[0].mxu0
        %v1227 = vpop.f32.mrb[0].mxu0
        %1228 = vdwg.mxu0
        %1229 = vmatprep.subr.bf16.mxu0 0
        %1230 = vmatpush1.bf16.msra.mxu0 %v1091
        %1231 = vmatprep.subr.bf16.mxu0 0
        %1232 = vmatpush1.bf16.msra.mxu0 0
        %1233 = vmatprep.subr.bf16.mxu0 0
        %1234 = vmatpush1.bf16.msra.mxu0 0
        %1235 = vmatprep.subr.bf16.mxu0 0
        %1236 = vmatpush1.bf16.msra.mxu0 0
        %1237 = vmatprep.subr.bf16.mxu0 0
        %1238 = vmatpush1.bf16.msra.mxu0 0
        %1239 = vmatprep.subr.bf16.mxu0 0
        %1240 = vmatpush1.bf16.msra.mxu0 0
        %1241 = vmatprep.subr.bf16.mxu0 0
        %1242 = vmatpush1.bf16.msra.mxu0 0
        %1243 = vmatprep.subr.bf16.mxu0 0
        %1244 = vmatpush1.bf16.msra.mxu0 0
        %1245 = vmatprep.subr.bf16.mxu0 0
        %1246 = vmatpush1.bf16.msra.mxu0 0
        %1247 = vmatprep.subr.bf16.mxu0 0
        %1248 = vmatpush1.bf16.msra.mxu0 0
        %1249 = vmatprep.subr.bf16.mxu0 0
        %1250 = vmatpush1.bf16.msra.mxu0 0
        %1251 = vmatprep.subr.bf16.mxu0 0
        %1252 = vmatpush1.bf16.msra.mxu0 0
        %1253 = vmatprep.subr.bf16.mxu0 0
        %1254 = vmatpush1.bf16.msra.mxu0 0
        %1255 = vmatprep.subr.bf16.mxu0 0
        %1256 = vmatpush1.bf16.msra.mxu0 0
        %1257 = vmatprep.subr.bf16.mxu0 0
        %1258 = vmatpush1.bf16.msra.mxu0 0
        %1259 = vmatprep.subr.bf16.mxu0 0
        %1260 = vmatpush1.bf16.msra.mxu0 0
        %1261 = vmatprep.mubr.bf16.mxu0 0
        %1262 = vmatmul.mubr.bf16.gmra.mrb[0].mxu0 %v383
        %v1263 = vpop.f32.mrb[0].mxu0
        %v1264 = vadd.f32 %v1224, %v1263
        %v1265 = vpop.f32.mrb[0].mxu0
        %v1266 = vpop.f32.mrb[0].mxu0
        %v1267 = vpop.f32.mrb[0].mxu0
        %1268 = vdwg.mxu0
        %v1269 = vpack.c.bf16 %v1176, %v1176
        %1270 = vst.msk [vmem:[%s193 + $0x8] sm:$0xf] %vm426, %v1269
        %v1271 = vpack.c.bf16 %v1264, %v1264
        %v1273 = vunpack.c.l.b16 %v1271
        %v1274 = vpack.c.b16 %v1273, %v1273
        %1275 = vrot.lane.b32.xlu0 %v1274, 32
        %v1276 = vpop.permute.xlu0 %1275
        %1278 = vst.msk [vmem:[%s193 + $0x8] sm:$0xf] %vm435, %v1276
        %v1279 = vadd.f32 %v1073, %v1176
        %v1280 = vadd.f32 %v1279, %v1264
        %v1281 = vmul.f32 %v1176, %v1176
        %v1282 = vadd.f32 %v1077, %v1281
        %v1283 = vmul.f32 %v1264, %v1264
        %v1284 = vadd.f32 %v1282, %v1283
        %v1285 = vld [vmem:[%s869] sm:$0xf]
        %v1286 = vld [vmem:[%s869 + $0x4] sm:$0x3]
        %v1287 = vld [vmem:[%s1082] sm:$0xf]
        %v1288 = vld [vmem:[%s1082 + $0x4] sm:$0x3]
        %s1289 = scalar_lea.vmem %s209, 56
        %v1290 = vld [vmem:[%s1289] sm:$0xf]
        %v1291 = vld [vmem:[%s1289 + $0x4] sm:$0x3]
        %v1294 = vunpack.c.l.b16 %v1287
        %v1295 = vunpack.c.l.b16 %v1288
        %v1296 = vpack.c.b16 %v1295, %v1294
        %v1298 = vsel %vm236, %v1296, 0
        %1300 = vmatprep.subr.bf16.mxu0 0
        %1301 = vmatpush1.bf16.msra.mxu0 %v1298
        %1302 = vmatprep.subr.bf16.mxu0 0
        %1303 = vmatpush1.bf16.msra.mxu0 0
        %1304 = vmatprep.subr.bf16.mxu0 0
        %1305 = vmatpush1.bf16.msra.mxu0 0
        %1306 = vmatprep.subr.bf16.mxu0 0
        %1307 = vmatpush1.bf16.msra.mxu0 0
        %1308 = vmatprep.subr.bf16.mxu0 0
        %1309 = vmatpush1.bf16.msra.mxu0 0
        %1310 = vmatprep.subr.bf16.mxu0 0
        %1311 = vmatpush1.bf16.msra.mxu0 0
        %1312 = vmatprep.subr.bf16.mxu0 0
        %1313 = vmatpush1.bf16.msra.mxu0 0
        %1314 = vmatprep.subr.bf16.mxu0 0
        %1315 = vmatpush1.bf16.msra.mxu0 0
        %1316 = vmatprep.subr.bf16.mxu0 0
        %1317 = vmatpush1.bf16.msra.mxu0 0
        %1318 = vmatprep.subr.bf16.mxu0 0
        %1319 = vmatpush1.bf16.msra.mxu0 0
        %1320 = vmatprep.subr.bf16.mxu0 0
        %1321 = vmatpush1.bf16.msra.mxu0 0
        %1322 = vmatprep.subr.bf16.mxu0 0
        %1323 = vmatpush1.bf16.msra.mxu0 0
        %1324 = vmatprep.subr.bf16.mxu0 0
        %1325 = vmatpush1.bf16.msra.mxu0 0
        %1326 = vmatprep.subr.bf16.mxu0 0
        %1327 = vmatpush1.bf16.msra.mxu0 0
        %1328 = vmatprep.subr.bf16.mxu0 0
        %1329 = vmatpush1.bf16.msra.mxu0 0
        %1330 = vmatprep.subr.bf16.mxu0 0
        %1331 = vmatpush1.bf16.msra.mxu0 0
        %1332 = vmatprep.mubr.bf16.mxu0 0
        %1333 = vmatmul.mubr.bf16.gmra.mrb[0].mxu0 %v234
        %v1334 = vpop.f32.mrb[0].mxu0
        %v1335 = vadd.f32 0.0, %v1334
        %v1336 = vpop.f32.mrb[0].mxu0
        %v1337 = vpop.f32.mrb[0].mxu0
        %v1338 = vpop.f32.mrb[0].mxu0
        %1339 = vdwg.mxu0
        %v1342 = vunpack.c.l.b16 %v1285
        %v1343 = vunpack.c.l.b16 %v1286
        %v1344 = vpack.c.b16 %v1343, %v1342
        %v1346 = vsel %vm236, %v1344, 0
        %1348 = vmatprep.subr.bf16.mxu0 0
        %1349 = vmatpush1.bf16.msra.mxu0 %v1346
        %1350 = vmatprep.subr.bf16.mxu0 0
        %1351 = vmatpush1.bf16.msra.mxu0 0
        %1352 = vmatprep.subr.bf16.mxu0 0
        %1353 = vmatpush1.bf16.msra.mxu0 0
        %1354 = vmatprep.subr.bf16.mxu0 0
        %1355 = vmatpush1.bf16.msra.mxu0 0
        %1356 = vmatprep.subr.bf16.mxu0 0
        %1357 = vmatpush1.bf16.msra.mxu0 0
        %1358 = vmatprep.subr.bf16.mxu0 0
        %1359 = vmatpush1.bf16.msra.mxu0 0
        %1360 = vmatprep.subr.bf16.mxu0 0
        %1361 = vmatpush1.bf16.msra.mxu0 0
        %1362 = vmatprep.subr.bf16.mxu0 0
        %1363 = vmatpush1.bf16.msra.mxu0 0
        %1364 = vmatprep.subr.bf16.mxu0 0
        %1365 = vmatpush1.bf16.msra.mxu0 0
        %1366 = vmatprep.subr.bf16.mxu0 0
        %1367 = vmatpush1.bf16.msra.mxu0 0
        %1368 = vmatprep.subr.bf16.mxu0 0
        %1369 = vmatpush1.bf16.msra.mxu0 0
        %1370 = vmatprep.subr.bf16.mxu0 0
        %1371 = vmatpush1.bf16.msra.mxu0 0
        %1372 = vmatprep.subr.bf16.mxu0 0
        %1373 = vmatpush1.bf16.msra.mxu0 0
        %1374 = vmatprep.subr.bf16.mxu0 0
        %1375 = vmatpush1.bf16.msra.mxu0 0
        %1376 = vmatprep.subr.bf16.mxu0 0
        %1377 = vmatpush1.bf16.msra.mxu0 0
        %1378 = vmatprep.subr.bf16.mxu0 0
        %1379 = vmatpush1.bf16.msra.mxu0 0
        %1380 = vmatprep.mubr.bf16.mxu0 0
        %1381 = vmatmul.mubr.bf16.gmra.mrb[0].mxu0 %v286
        %v1382 = vpop.f32.mrb[0].mxu0
        %v1383 = vadd.f32 %v1335, %v1382
        %v1384 = vpop.f32.mrb[0].mxu0
        %v1385 = vpop.f32.mrb[0].mxu0
        %v1386 = vpop.f32.mrb[0].mxu0
        %1387 = vdwg.mxu0
        %v1390 = vunpack.c.l.b16 %v1290
        %v1391 = vunpack.c.l.b16 %v1291
        %v1392 = vpack.c.b16 %v1391, %v1390
        %v1394 = vsel %vm236, %v1392, 0
        %1396 = vmatprep.subr.bf16.mxu0 0
        %1397 = vmatpush1.bf16.msra.mxu0 %v1394
        %1398 = vmatprep.subr.bf16.mxu0 0
        %1399 = vmatpush1.bf16.msra.mxu0 0
        %1400 = vmatprep.subr.bf16.mxu0 0
        %1401 = vmatpush1.bf16.msra.mxu0 0
        %1402 = vmatprep.subr.bf16.mxu0 0
        %1403 = vmatpush1.bf16.msra.mxu0 0
        %1404 = vmatprep.subr.bf16.mxu0 0
        %1405 = vmatpush1.bf16.msra.mxu0 0
        %1406 = vmatprep.subr.bf16.mxu0 0
        %1407 = vmatpush1.bf16.msra.mxu0 0
        %1408 = vmatprep.subr.bf16.mxu0 0
        %1409 = vmatpush1.bf16.msra.mxu0 0
        %1410 = vmatprep.subr.bf16.mxu0 0
        %1411 = vmatpush1.bf16.msra.mxu0 0
        %1412 = vmatprep.subr.bf16.mxu0 0
        %1413 = vmatpush1.bf16.msra.mxu0 0
        %1414 = vmatprep.subr.bf16.mxu0 0
        %1415 = vmatpush1.bf16.msra.mxu0 0
        %1416 = vmatprep.subr.bf16.mxu0 0
        %1417 = vmatpush1.bf16.msra.mxu0 0
        %1418 = vmatprep.subr.bf16.mxu0 0
        %1419 = vmatpush1.bf16.msra.mxu0 0
        %1420 = vmatprep.subr.bf16.mxu0 0
        %1421 = vmatpush1.bf16.msra.mxu0 0
        %1422 = vmatprep.subr.bf16.mxu0 0
        %1423 = vmatpush1.bf16.msra.mxu0 0
        %1424 = vmatprep.subr.bf16.mxu0 0
        %1425 = vmatpush1.bf16.msra.mxu0 0
        %1426 = vmatprep.subr.bf16.mxu0 0
        %1427 = vmatpush1.bf16.msra.mxu0 0
        %1428 = vmatprep.mubr.bf16.mxu0 0
        %1429 = vmatmul.mubr.bf16.gmra.mrb[0].mxu0 %v337
        %v1430 = vpop.f32.mrb[0].mxu0
        %v1431 = vadd.f32 0.0, %v1430
        %v1432 = vpop.f32.mrb[0].mxu0
        %v1433 = vpop.f32.mrb[0].mxu0
        %v1434 = vpop.f32.mrb[0].mxu0
        %1435 = vdwg.mxu0
        %1436 = vmatprep.subr.bf16.mxu0 0
        %1437 = vmatpush1.bf16.msra.mxu0 %v1298
        %1438 = vmatprep.subr.bf16.mxu0 0
        %1439 = vmatpush1.bf16.msra.mxu0 0
        %1440 = vmatprep.subr.bf16.mxu0 0
        %1441 = vmatpush1.bf16.msra.mxu0 0
        %1442 = vmatprep.subr.bf16.mxu0 0
        %1443 = vmatpush1.bf16.msra.mxu0 0
        %1444 = vmatprep.subr.bf16.mxu0 0
        %1445 = vmatpush1.bf16.msra.mxu0 0
        %1446 = vmatprep.subr.bf16.mxu0 0
        %1447 = vmatpush1.bf16.msra.mxu0 0
        %1448 = vmatprep.subr.bf16.mxu0 0
        %1449 = vmatpush1.bf16.msra.mxu0 0
        %1450 = vmatprep.subr.bf16.mxu0 0
        %1451 = vmatpush1.bf16.msra.mxu0 0
        %1452 = vmatprep.subr.bf16.mxu0 0
        %1453 = vmatpush1.bf16.msra.mxu0 0
        %1454 = vmatprep.subr.bf16.mxu0 0
        %1455 = vmatpush1.bf16.msra.mxu0 0
        %1456 = vmatprep.subr.bf16.mxu0 0
        %1457 = vmatpush1.bf16.msra.mxu0 0
        %1458 = vmatprep.subr.bf16.mxu0 0
        %1459 = vmatpush1.bf16.msra.mxu0 0
        %1460 = vmatprep.subr.bf16.mxu0 0
        %1461 = vmatpush1.bf16.msra.mxu0 0
        %1462 = vmatprep.subr.bf16.mxu0 0
        %1463 = vmatpush1.bf16.msra.mxu0 0
        %1464 = vmatprep.subr.bf16.mxu0 0
        %1465 = vmatpush1.bf16.msra.mxu0 0
        %1466 = vmatprep.subr.bf16.mxu0 0
        %1467 = vmatpush1.bf16.msra.mxu0 0
        %1468 = vmatprep.mubr.bf16.mxu0 0
        %1469 = vmatmul.mubr.bf16.gmra.mrb[0].mxu0 %v383
        %v1470 = vpop.f32.mrb[0].mxu0
        %v1471 = vadd.f32 %v1431, %v1470
        %v1472 = vpop.f32.mrb[0].mxu0
        %v1473 = vpop.f32.mrb[0].mxu0
        %v1474 = vpop.f32.mrb[0].mxu0
        %1475 = vdwg.mxu0
        %v1476 = vpack.c.bf16 %v1383, %v1383
        %v1478 = vunpack.c.l.b16 %v1476
        %v1479 = vpack.c.b16 %v1478, %v1478
        %1480 = vrot.lane.b32.xlu0 %v1479, 64
        %v1481 = vpop.permute.xlu0 %1480
        %1483 = vst.msk [vmem:[%s193 + $0x8] sm:$0xf] %vm641, %v1481
        %v1484 = vpack.c.bf16 %v1471, %v1471
        %v1486 = vunpack.c.l.b16 %v1484
        %v1487 = vpack.c.b16 %v1486, %v1486
        %1488 = vrot.lane.b32.xlu0 %v1487, 96
        %v1489 = vpop.permute.xlu0 %1488
        %1491 = vst.msk [vmem:[%s193 + $0x8] sm:$0xf] %vm650, %v1489
        %v1492 = vadd.f32 %v1280, %v1383
        %v1493 = vadd.f32 %v1492, %v1471
        %v1494 = vmul.f32 %v1383, %v1383
        %v1495 = vadd.f32 %v1284, %v1494
        %v1496 = vmul.f32 %v1471, %v1471
        %v1497 = vadd.f32 %v1495, %v1496
        %v1498 = vld [vmem:[%s1082] sm:$0xf]
        %v1499 = vld [vmem:[%s1082 + $0x4] sm:$0x3]
        %v1500 = vld [vmem:[%s1289] sm:$0xf]
        %v1501 = vld [vmem:[%s1289 + $0x4] sm:$0x3]
        %s1502 = scalar_lea.vmem %s209, 64
        %v1503 = vld [vmem:[%s1502] sm:$0xf]
        %v1504 = vld [vmem:[%s1502 + $0x4] sm:$0x3]
        %v1507 = vunpack.c.l.b16 %v1500
        %v1508 = vunpack.c.l.b16 %v1501
        %v1509 = vpack.c.b16 %v1508, %v1507
        %v1511 = vsel %vm236, %v1509, 0
        %1513 = vmatprep.subr.bf16.mxu0 0
        %1514 = vmatpush1.bf16.msra.mxu0 %v1511
        %1515 = vmatprep.subr.bf16.mxu0 0
        %1516 = vmatpush1.bf16.msra.mxu0 0
        %1517 = vmatprep.subr.bf16.mxu0 0
        %1518 = vmatpush1.bf16.msra.mxu0 0
        %1519 = vmatprep.subr.bf16.mxu0 0
        %1520 = vmatpush1.bf16.msra.mxu0 0
        %1521 = vmatprep.subr.bf16.mxu0 0
        %1522 = vmatpush1.bf16.msra.mxu0 0
        %1523 = vmatprep.subr.bf16.mxu0 0
        %1524 = vmatpush1.bf16.msra.mxu0 0
        %1525 = vmatprep.subr.bf16.mxu0 0
        %1526 = vmatpush1.bf16.msra.mxu0 0
        %1527 = vmatprep.subr.bf16.mxu0 0
        %1528 = vmatpush1.bf16.msra.mxu0 0
        %1529 = vmatprep.subr.bf16.mxu0 0
        %1530 = vmatpush1.bf16.msra.mxu0 0
        %1531 = vmatprep.subr.bf16.mxu0 0
        %1532 = vmatpush1.bf16.msra.mxu0 0
        %1533 = vmatprep.subr.bf16.mxu0 0
        %1534 = vmatpush1.bf16.msra.mxu0 0
        %1535 = vmatprep.subr.bf16.mxu0 0
        %1536 = vmatpush1.bf16.msra.mxu0 0
        %1537 = vmatprep.subr.bf16.mxu0 0
        %1538 = vmatpush1.bf16.msra.mxu0 0
        %1539 = vmatprep.subr.bf16.mxu0 0
        %1540 = vmatpush1.bf16.msra.mxu0 0
        %1541 = vmatprep.subr.bf16.mxu0 0
        %1542 = vmatpush1.bf16.msra.mxu0 0
        %1543 = vmatprep.subr.bf16.mxu0 0
        %1544 = vmatpush1.bf16.msra.mxu0 0
        %1545 = vmatprep.mubr.bf16.mxu0 0
        %1546 = vmatmul.mubr.bf16.gmra.mrb[0].mxu0 %v234
        %v1547 = vpop.f32.mrb[0].mxu0
        %v1548 = vadd.f32 0.0, %v1547
        %v1549 = vpop.f32.mrb[0].mxu0
        %v1550 = vpop.f32.mrb[0].mxu0
        %v1551 = vpop.f32.mrb[0].mxu0
        %1552 = vdwg.mxu0
        %v1555 = vunpack.c.l.b16 %v1498
        %v1556 = vunpack.c.l.b16 %v1499
        %v1557 = vpack.c.b16 %v1556, %v1555
        %v1559 = vsel %vm236, %v1557, 0
        %1561 = vmatprep.subr.bf16.mxu0 0
        %1562 = vmatpush1.bf16.msra.mxu0 %v1559
        %1563 = vmatprep.subr.bf16.mxu0 0
        %1564 = vmatpush1.bf16.msra.mxu0 0
        %1565 = vmatprep.subr.bf16.mxu0 0
        %1566 = vmatpush1.bf16.msra.mxu0 0
        %1567 = vmatprep.subr.bf16.mxu0 0
        %1568 = vmatpush1.bf16.msra.mxu0 0
        %1569 = vmatprep.subr.bf16.mxu0 0
        %1570 = vmatpush1.bf16.msra.mxu0 0
        %1571 = vmatprep.subr.bf16.mxu0 0
        %1572 = vmatpush1.bf16.msra.mxu0 0
        %1573 = vmatprep.subr.bf16.mxu0 0
        %1574 = vmatpush1.bf16.msra.mxu0 0
        %1575 = vmatprep.subr.bf16.mxu0 0
        %1576 = vmatpush1.bf16.msra.mxu0 0
        %1577 = vmatprep.subr.bf16.mxu0 0
        %1578 = vmatpush1.bf16.msra.mxu0 0
        %1579 = vmatprep.subr.bf16.mxu0 0
        %1580 = vmatpush1.bf16.msra.mxu0 0
        %1581 = vmatprep.subr.bf16.mxu0 0
        %1582 = vmatpush1.bf16.msra.mxu0 0
        %1583 = vmatprep.subr.bf16.mxu0 0
        %1584 = vmatpush1.bf16.msra.mxu0 0
        %1585 = vmatprep.subr.bf16.mxu0 0
        %1586 = vmatpush1.bf16.msra.mxu0 0
        %1587 = vmatprep.subr.bf16.mxu0 0
        %1588 = vmatpush1.bf16.msra.mxu0 0
        %1589 = vmatprep.subr.bf16.mxu0 0
        %1590 = vmatpush1.bf16.msra.mxu0 0
        %1591 = vmatprep.subr.bf16.mxu0 0
        %1592 = vmatpush1.bf16.msra.mxu0 0
        %1593 = vmatprep.mubr.bf16.mxu0 0
        %1594 = vmatmul.mubr.bf16.gmra.mrb[0].mxu0 %v286
        %v1595 = vpop.f32.mrb[0].mxu0
        %v1596 = vadd.f32 %v1548, %v1595
        %v1597 = vpop.f32.mrb[0].mxu0
        %v1598 = vpop.f32.mrb[0].mxu0
        %v1599 = vpop.f32.mrb[0].mxu0
        %1600 = vdwg.mxu0
        %v1603 = vunpack.c.l.b16 %v1503
        %v1604 = vunpack.c.l.b16 %v1504
        %v1605 = vpack.c.b16 %v1604, %v1603
        %v1607 = vsel %vm236, %v1605, 0
        %1609 = vmatprep.subr.bf16.mxu0 0
        %1610 = vmatpush1.bf16.msra.mxu0 %v1607
        %1611 = vmatprep.subr.bf16.mxu0 0
        %1612 = vmatpush1.bf16.msra.mxu0 0
        %1613 = vmatprep.subr.bf16.mxu0 0
        %1614 = vmatpush1.bf16.msra.mxu0 0
        %1615 = vmatprep.subr.bf16.mxu0 0
        %1616 = vmatpush1.bf16.msra.mxu0 0
        %1617 = vmatprep.subr.bf16.mxu0 0
        %1618 = vmatpush1.bf16.msra.mxu0 0
        %1619 = vmatprep.subr.bf16.mxu0 0
        %1620 = vmatpush1.bf16.msra.mxu0 0
        %1621 = vmatprep.subr.bf16.mxu0 0
        %1622 = vmatpush1.bf16.msra.mxu0 0
        %1623 = vmatprep.subr.bf16.mxu0 0
        %1624 = vmatpush1.bf16.msra.mxu0 0
        %1625 = vmatprep.subr.bf16.mxu0 0
        %1626 = vmatpush1.bf16.msra.mxu0 0
        %1627 = vmatprep.subr.bf16.mxu0 0
        %1628 = vmatpush1.bf16.msra.mxu0 0
        %1629 = vmatprep.subr.bf16.mxu0 0
        %1630 = vmatpush1.bf16.msra.mxu0 0
        %1631 = vmatprep.subr.bf16.mxu0 0
        %1632 = vmatpush1.bf16.msra.mxu0 0
        %1633 = vmatprep.subr.bf16.mxu0 0
        %1634 = vmatpush1.bf16.msra.mxu0 0
        %1635 = vmatprep.subr.bf16.mxu0 0
        %1636 = vmatpush1.bf16.msra.mxu0 0
        %1637 = vmatprep.subr.bf16.mxu0 0
        %1638 = vmatpush1.bf16.msra.mxu0 0
        %1639 = vmatprep.subr.bf16.mxu0 0
        %1640 = vmatpush1.bf16.msra.mxu0 0
        %1641 = vmatprep.mubr.bf16.mxu0 0
        %1642 = vmatmul.mubr.bf16.gmra.mrb[0].mxu0 %v337
        %v1643 = vpop.f32.mrb[0].mxu0
        %v1644 = vadd.f32 0.0, %v1643
        %v1645 = vpop.f32.mrb[0].mxu0
        %v1646 = vpop.f32.mrb[0].mxu0
        %v1647 = vpop.f32.mrb[0].mxu0
        %1648 = vdwg.mxu0
        %1649 = vmatprep.subr.bf16.mxu0 0
        %1650 = vmatpush1.bf16.msra.mxu0 %v1511
        %1651 = vmatprep.subr.bf16.mxu0 0
        %1652 = vmatpush1.bf16.msra.mxu0 0
        %1653 = vmatprep.subr.bf16.mxu0 0
        %1654 = vmatpush1.bf16.msra.mxu0 0
        %1655 = vmatprep.subr.bf16.mxu0 0
        %1656 = vmatpush1.bf16.msra.mxu0 0
        %1657 = vmatprep.subr.bf16.mxu0 0
        %1658 = vmatpush1.bf16.msra.mxu0 0
        %1659 = vmatprep.subr.bf16.mxu0 0
        %1660 = vmatpush1.bf16.msra.mxu0 0
        %1661 = vmatprep.subr.bf16.mxu0 0
        %1662 = vmatpush1.bf16.msra.mxu0 0
        %1663 = vmatprep.subr.bf16.mxu0 0
        %1664 = vmatpush1.bf16.msra.mxu0 0
        %1665 = vmatprep.subr.bf16.mxu0 0
        %1666 = vmatpush1.bf16.msra.mxu0 0
        %1667 = vmatprep.subr.bf16.mxu0 0
        %1668 = vmatpush1.bf16.msra.mxu0 0
        %1669 = vmatprep.subr.bf16.mxu0 0
        %1670 = vmatpush1.bf16.msra.mxu0 0
        %1671 = vmatprep.subr.bf16.mxu0 0
        %1672 = vmatpush1.bf16.msra.mxu0 0
        %1673 = vmatprep.subr.bf16.mxu0 0
        %1674 = vmatpush1.bf16.msra.mxu0 0
        %1675 = vmatprep.subr.bf16.mxu0 0
        %1676 = vmatpush1.bf16.msra.mxu0 0
        %1677 = vmatprep.subr.bf16.mxu0 0
        %1678 = vmatpush1.bf16.msra.mxu0 0
        %1679 = vmatprep.subr.bf16.mxu0 0
        %1680 = vmatpush1.bf16.msra.mxu0 0
        %1681 = vmatprep.mubr.bf16.mxu0 0
        %1682 = vmatmul.mubr.bf16.gmra.mrb[0].mxu0 %v383
        %v1683 = vpop.f32.mrb[0].mxu0
        %v1684 = vadd.f32 %v1644, %v1683
        %v1685 = vpop.f32.mrb[0].mxu0
        %v1686 = vpop.f32.mrb[0].mxu0
        %v1687 = vpop.f32.mrb[0].mxu0
        %1688 = vdwg.mxu0
        %v1689 = vpack.c.bf16 %v1596, %v1596
        %1690 = vst.msk [vmem:[%s193 + $0xc] sm:$0xf] %vm426, %v1689
        %v1691 = vpack.c.bf16 %v1684, %v1684
        %v1693 = vunpack.c.l.b16 %v1691
        %v1694 = vpack.c.b16 %v1693, %v1693
        %1695 = vrot.lane.b32.xlu0 %v1694, 32
        %v1696 = vpop.permute.xlu0 %1695
        %1698 = vst.msk [vmem:[%s193 + $0xc] sm:$0xf] %vm435, %v1696
        %v1699 = vadd.f32 %v1493, %v1596
        %v1700 = vadd.f32 %v1699, %v1684
        %v1701 = vmul.f32 %v1596, %v1596
        %v1702 = vadd.f32 %v1497, %v1701
        %v1703 = vmul.f32 %v1684, %v1684
        %v1704 = vadd.f32 %v1702, %v1703
        %v1705 = vld [vmem:[%s1289] sm:$0xf]
        %v1706 = vld [vmem:[%s1289 + $0x4] sm:$0x3]
        %v1707 = vld [vmem:[%s1502] sm:$0xf]
        %v1708 = vld [vmem:[%s1502 + $0x4] sm:$0x3]
        %s1709 = scalar_lea.vmem %s209, 72
        %v1710 = vld [vmem:[%s1709] sm:$0xf]
        %v1711 = vld [vmem:[%s1709 + $0x4] sm:$0x3]
        %v1714 = vunpack.c.l.b16 %v1707
        %v1715 = vunpack.c.l.b16 %v1708
        %v1716 = vpack.c.b16 %v1715, %v1714
        %v1718 = vsel %vm236, %v1716, 0
        %1720 = vmatprep.subr.bf16.mxu0 0
        %1721 = vmatpush1.bf16.msra.mxu0 %v1718
        %1722 = vmatprep.subr.bf16.mxu0 0
        %1723 = vmatpush1.bf16.msra.mxu0 0
        %1724 = vmatprep.subr.bf16.mxu0 0
        %1725 = vmatpush1.bf16.msra.mxu0 0
        %1726 = vmatprep.subr.bf16.mxu0 0
        %1727 = vmatpush1.bf16.msra.mxu0 0
        %1728 = vmatprep.subr.bf16.mxu0 0
        %1729 = vmatpush1.bf16.msra.mxu0 0
        %1730 = vmatprep.subr.bf16.mxu0 0
        %1731 = vmatpush1.bf16.msra.mxu0 0
        %1732 = vmatprep.subr.bf16.mxu0 0
        %1733 = vmatpush1.bf16.msra.mxu0 0
        %1734 = vmatprep.subr.bf16.mxu0 0
        %1735 = vmatpush1.bf16.msra.mxu0 0
        %1736 = vmatprep.subr.bf16.mxu0 0
        %1737 = vmatpush1.bf16.msra.mxu0 0
        %1738 = vmatprep.subr.bf16.mxu0 0
        %1739 = vmatpush1.bf16.msra.mxu0 0
        %1740 = vmatprep.subr.bf16.mxu0 0
        %1741 = vmatpush1.bf16.msra.mxu0 0
        %1742 = vmatprep.subr.bf16.mxu0 0
        %1743 = vmatpush1.bf16.msra.mxu0 0
        %1744 = vmatprep.subr.bf16.mxu0 0
        %1745 = vmatpush1.bf16.msra.mxu0 0
        %1746 = vmatprep.subr.bf16.mxu0 0
        %1747 = vmatpush1.bf16.msra.mxu0 0
        %1748 = vmatprep.subr.bf16.mxu0 0
        %1749 = vmatpush1.bf16.msra.mxu0 0
        %1750 = vmatprep.subr.bf16.mxu0 0
        %1751 = vmatpush1.bf16.msra.mxu0 0
        %1752 = vmatprep.mubr.bf16.mxu0 0
        %1753 = vmatmul.mubr.bf16.gmra.mrb[0].mxu0 %v234
        %v1754 = vpop.f32.mrb[0].mxu0
        %v1755 = vadd.f32 0.0, %v1754
        %v1756 = vpop.f32.mrb[0].mxu0
        %v1757 = vpop.f32.mrb[0].mxu0
        %v1758 = vpop.f32.mrb[0].mxu0
        %1759 = vdwg.mxu0
        %v1762 = vunpack.c.l.b16 %v1705
        %v1763 = vunpack.c.l.b16 %v1706
        %v1764 = vpack.c.b16 %v1763, %v1762
        %v1766 = vsel %vm236, %v1764, 0
        %1768 = vmatprep.subr.bf16.mxu0 0
        %1769 = vmatpush1.bf16.msra.mxu0 %v1766
        %1770 = vmatprep.subr.bf16.mxu0 0
        %1771 = vmatpush1.bf16.msra.mxu0 0
        %1772 = vmatprep.subr.bf16.mxu0 0
        %1773 = vmatpush1.bf16.msra.mxu0 0
        %1774 = vmatprep.subr.bf16.mxu0 0
        %1775 = vmatpush1.bf16.msra.mxu0 0
        %1776 = vmatprep.subr.bf16.mxu0 0
        %1777 = vmatpush1.bf16.msra.mxu0 0
        %1778 = vmatprep.subr.bf16.mxu0 0
        %1779 = vmatpush1.bf16.msra.mxu0 0
        %1780 = vmatprep.subr.bf16.mxu0 0
        %1781 = vmatpush1.bf16.msra.mxu0 0
        %1782 = vmatprep.subr.bf16.mxu0 0
        %1783 = vmatpush1.bf16.msra.mxu0 0
        %1784 = vmatprep.subr.bf16.mxu0 0
        %1785 = vmatpush1.bf16.msra.mxu0 0
        %1786 = vmatprep.subr.bf16.mxu0 0
        %1787 = vmatpush1.bf16.msra.mxu0 0
        %1788 = vmatprep.subr.bf16.mxu0 0
        %1789 = vmatpush1.bf16.msra.mxu0 0
        %1790 = vmatprep.subr.bf16.mxu0 0
        %1791 = vmatpush1.bf16.msra.mxu0 0
        %1792 = vmatprep.subr.bf16.mxu0 0
        %1793 = vmatpush1.bf16.msra.mxu0 0
        %1794 = vmatprep.subr.bf16.mxu0 0
        %1795 = vmatpush1.bf16.msra.mxu0 0
        %1796 = vmatprep.subr.bf16.mxu0 0
        %1797 = vmatpush1.bf16.msra.mxu0 0
        %1798 = vmatprep.subr.bf16.mxu0 0
        %1799 = vmatpush1.bf16.msra.mxu0 0
        %1800 = vmatprep.mubr.bf16.mxu0 0
        %1801 = vmatmul.mubr.bf16.gmra.mrb[0].mxu0 %v286
        %v1802 = vpop.f32.mrb[0].mxu0
        %v1803 = vadd.f32 %v1755, %v1802
        %v1804 = vpop.f32.mrb[0].mxu0
        %v1805 = vpop.f32.mrb[0].mxu0
        %v1806 = vpop.f32.mrb[0].mxu0
        %1807 = vdwg.mxu0
        %v1810 = vunpack.c.l.b16 %v1710
        %v1811 = vunpack.c.l.b16 %v1711
        %v1812 = vpack.c.b16 %v1811, %v1810
        %v1814 = vsel %vm236, %v1812, 0
        %1816 = vmatprep.subr.bf16.mxu0 0
        %1817 = vmatpush1.bf16.msra.mxu0 %v1814
        %1818 = vmatprep.subr.bf16.mxu0 0
        %1819 = vmatpush1.bf16.msra.mxu0 0
        %1820 = vmatprep.subr.bf16.mxu0 0
        %1821 = vmatpush1.bf16.msra.mxu0 0
        %1822 = vmatprep.subr.bf16.mxu0 0
        %1823 = vmatpush1.bf16.msra.mxu0 0
        %1824 = vmatprep.subr.bf16.mxu0 0
        %1825 = vmatpush1.bf16.msra.mxu0 0
        %1826 = vmatprep.subr.bf16.mxu0 0
        %1827 = vmatpush1.bf16.msra.mxu0 0
        %1828 = vmatprep.subr.bf16.mxu0 0
        %1829 = vmatpush1.bf16.msra.mxu0 0
        %1830 = vmatprep.subr.bf16.mxu0 0
        %1831 = vmatpush1.bf16.msra.mxu0 0
        %1832 = vmatprep.subr.bf16.mxu0 0
        %1833 = vmatpush1.bf16.msra.mxu0 0
        %1834 = vmatprep.subr.bf16.mxu0 0
        %1835 = vmatpush1.bf16.msra.mxu0 0
        %1836 = vmatprep.subr.bf16.mxu0 0
        %1837 = vmatpush1.bf16.msra.mxu0 0
        %1838 = vmatprep.subr.bf16.mxu0 0
        %1839 = vmatpush1.bf16.msra.mxu0 0
        %1840 = vmatprep.subr.bf16.mxu0 0
        %1841 = vmatpush1.bf16.msra.mxu0 0
        %1842 = vmatprep.subr.bf16.mxu0 0
        %1843 = vmatpush1.bf16.msra.mxu0 0
        %1844 = vmatprep.subr.bf16.mxu0 0
        %1845 = vmatpush1.bf16.msra.mxu0 0
        %1846 = vmatprep.subr.bf16.mxu0 0
        %1847 = vmatpush1.bf16.msra.mxu0 0
        %1848 = vmatprep.mubr.bf16.mxu0 0
        %1849 = vmatmul.mubr.bf16.gmra.mrb[0].mxu0 %v337
        %v1850 = vpop.f32.mrb[0].mxu0
        %v1851 = vadd.f32 0.0, %v1850
        %v1852 = vpop.f32.mrb[0].mxu0
        %v1853 = vpop.f32.mrb[0].mxu0
        %v1854 = vpop.f32.mrb[0].mxu0
        %1855 = vdwg.mxu0
        %1856 = vmatprep.subr.bf16.mxu0 0
        %1857 = vmatpush1.bf16.msra.mxu0 %v1718
        %1858 = vmatprep.subr.bf16.mxu0 0
        %1859 = vmatpush1.bf16.msra.mxu0 0
        %1860 = vmatprep.subr.bf16.mxu0 0
        %1861 = vmatpush1.bf16.msra.mxu0 0
        %1862 = vmatprep.subr.bf16.mxu0 0
        %1863 = vmatpush1.bf16.msra.mxu0 0
        %1864 = vmatprep.subr.bf16.mxu0 0
        %1865 = vmatpush1.bf16.msra.mxu0 0
        %1866 = vmatprep.subr.bf16.mxu0 0
        %1867 = vmatpush1.bf16.msra.mxu0 0
        %1868 = vmatprep.subr.bf16.mxu0 0
        %1869 = vmatpush1.bf16.msra.mxu0 0
        %1870 = vmatprep.subr.bf16.mxu0 0
        %1871 = vmatpush1.bf16.msra.mxu0 0
        %1872 = vmatprep.subr.bf16.mxu0 0
        %1873 = vmatpush1.bf16.msra.mxu0 0
        %1874 = vmatprep.subr.bf16.mxu0 0
        %1875 = vmatpush1.bf16.msra.mxu0 0
        %1876 = vmatprep.subr.bf16.mxu0 0
        %1877 = vmatpush1.bf16.msra.mxu0 0
        %1878 = vmatprep.subr.bf16.mxu0 0
        %1879 = vmatpush1.bf16.msra.mxu0 0
        %1880 = vmatprep.subr.bf16.mxu0 0
        %1881 = vmatpush1.bf16.msra.mxu0 0
        %1882 = vmatprep.subr.bf16.mxu0 0
        %1883 = vmatpush1.bf16.msra.mxu0 0
        %1884 = vmatprep.subr.bf16.mxu0 0
        %1885 = vmatpush1.bf16.msra.mxu0 0
        %1886 = vmatprep.subr.bf16.mxu0 0
        %1887 = vmatpush1.bf16.msra.mxu0 0
        %1888 = vmatprep.mubr.bf16.mxu0 0
        %1889 = vmatmul.mubr.bf16.gmra.mrb[0].mxu0 %v383
        %v1890 = vpop.f32.mrb[0].mxu0
        %v1891 = vadd.f32 %v1851, %v1890
        %v1892 = vpop.f32.mrb[0].mxu0
        %v1893 = vpop.f32.mrb[0].mxu0
        %v1894 = vpop.f32.mrb[0].mxu0
        %1895 = vdwg.mxu0
        %v1896 = vpack.c.bf16 %v1803, %v1803
        %v1898 = vunpack.c.l.b16 %v1896
        %v1899 = vpack.c.b16 %v1898, %v1898
        %1900 = vrot.lane.b32.xlu0 %v1899, 64
        %v1901 = vpop.permute.xlu0 %1900
        %1903 = vst.msk [vmem:[%s193 + $0xc] sm:$0xf] %vm641, %v1901
        %v1904 = vpack.c.bf16 %v1891, %v1891
        %v1906 = vunpack.c.l.b16 %v1904
        %v1907 = vpack.c.b16 %v1906, %v1906
        %1908 = vrot.lane.b32.xlu0 %v1907, 96
        %v1909 = vpop.permute.xlu0 %1908
        %1911 = vst.msk [vmem:[%s193 + $0xc] sm:$0xf] %vm650, %v1909
        %v1912 = vadd.f32 %v1700, %v1803
        %v1913 = vadd.f32 %v1912, %v1891
        %v1914 = vmul.f32 %v1803, %v1803
        %v1915 = vadd.f32 %v1704, %v1914
        %v1916 = vmul.f32 %v1891, %v1891
        %v1917 = vadd.f32 %v1915, %v1916
        %v1918 = vld [vmem:[%s1502] sm:$0xf]
        %v1919 = vld [vmem:[%s1502 + $0x4] sm:$0x3]
        %v1920 = vld [vmem:[%s1709] sm:$0xf]
        %v1921 = vld [vmem:[%s1709 + $0x4] sm:$0x3]
        %s1922 = scalar_lea.vmem %s209, 80
        %v1923 = vld [vmem:[%s1922] sm:$0xf]
        %v1924 = vld [vmem:[%s1922 + $0x4] sm:$0x3]
        %v1927 = vunpack.c.l.b16 %v1920
        %v1928 = vunpack.c.l.b16 %v1921
        %v1929 = vpack.c.b16 %v1928, %v1927
        %v1931 = vsel %vm236, %v1929, 0
        %1933 = vmatprep.subr.bf16.mxu0 0
        %1934 = vmatpush1.bf16.msra.mxu0 %v1931
        %1935 = vmatprep.subr.bf16.mxu0 0
        %1936 = vmatpush1.bf16.msra.mxu0 0
        %1937 = vmatprep.subr.bf16.mxu0 0
        %1938 = vmatpush1.bf16.msra.mxu0 0
        %1939 = vmatprep.subr.bf16.mxu0 0
        %1940 = vmatpush1.bf16.msra.mxu0 0
        %1941 = vmatprep.subr.bf16.mxu0 0
        %1942 = vmatpush1.bf16.msra.mxu0 0
        %1943 = vmatprep.subr.bf16.mxu0 0
        %1944 = vmatpush1.bf16.msra.mxu0 0
        %1945 = vmatprep.subr.bf16.mxu0 0
        %1946 = vmatpush1.bf16.msra.mxu0 0
        %1947 = vmatprep.subr.bf16.mxu0 0
        %1948 = vmatpush1.bf16.msra.mxu0 0
        %1949 = vmatprep.subr.bf16.mxu0 0
        %1950 = vmatpush1.bf16.msra.mxu0 0
        %1951 = vmatprep.subr.bf16.mxu0 0
        %1952 = vmatpush1.bf16.msra.mxu0 0
        %1953 = vmatprep.subr.bf16.mxu0 0
        %1954 = vmatpush1.bf16.msra.mxu0 0
        %1955 = vmatprep.subr.bf16.mxu0 0
        %1956 = vmatpush1.bf16.msra.mxu0 0
        %1957 = vmatprep.subr.bf16.mxu0 0
        %1958 = vmatpush1.bf16.msra.mxu0 0
        %1959 = vmatprep.subr.bf16.mxu0 0
        %1960 = vmatpush1.bf16.msra.mxu0 0
        %1961 = vmatprep.subr.bf16.mxu0 0
        %1962 = vmatpush1.bf16.msra.mxu0 0
        %1963 = vmatprep.subr.bf16.mxu0 0
        %1964 = vmatpush1.bf16.msra.mxu0 0
        %1965 = vmatprep.mubr.bf16.mxu0 0
        %1966 = vmatmul.mubr.bf16.gmra.mrb[0].mxu0 %v234
        %v1967 = vpop.f32.mrb[0].mxu0
        %v1968 = vadd.f32 0.0, %v1967
        %v1969 = vpop.f32.mrb[0].mxu0
        %v1970 = vpop.f32.mrb[0].mxu0
        %v1971 = vpop.f32.mrb[0].mxu0
        %1972 = vdwg.mxu0
        %v1975 = vunpack.c.l.b16 %v1918
        %v1976 = vunpack.c.l.b16 %v1919
        %v1977 = vpack.c.b16 %v1976, %v1975
        %v1979 = vsel %vm236, %v1977, 0
        %1981 = vmatprep.subr.bf16.mxu0 0
        %1982 = vmatpush1.bf16.msra.mxu0 %v1979
        %1983 = vmatprep.subr.bf16.mxu0 0
        %1984 = vmatpush1.bf16.msra.mxu0 0
        %1985 = vmatprep.subr.bf16.mxu0 0
        %1986 = vmatpush1.bf16.msra.mxu0 0
        %1987 = vmatprep.subr.bf16.mxu0 0
        %1988 = vmatpush1.bf16.msra.mxu0 0
        %1989 = vmatprep.subr.bf16.mxu0 0
        %1990 = vmatpush1.bf16.msra.mxu0 0
        %1991 = vmatprep.subr.bf16.mxu0 0
        %1992 = vmatpush1.bf16.msra.mxu0 0
        %1993 = vmatprep.subr.bf16.mxu0 0
        %1994 = vmatpush1.bf16.msra.mxu0 0
        %1995 = vmatprep.subr.bf16.mxu0 0
        %1996 = vmatpush1.bf16.msra.mxu0 0
        %1997 = vmatprep.subr.bf16.mxu0 0
        %1998 = vmatpush1.bf16.msra.mxu0 0
        %1999 = vmatprep.subr.bf16.mxu0 0
        %2000 = vmatpush1.bf16.msra.mxu0 0
        %2001 = vmatprep.subr.bf16.mxu0 0
        %2002 = vmatpush1.bf16.msra.mxu0 0
        %2003 = vmatprep.subr.bf16.mxu0 0
        %2004 = vmatpush1.bf16.msra.mxu0 0
        %2005 = vmatprep.subr.bf16.mxu0 0
        %2006 = vmatpush1.bf16.msra.mxu0 0
        %2007 = vmatprep.subr.bf16.mxu0 0
        %2008 = vmatpush1.bf16.msra.mxu0 0
        %2009 = vmatprep.subr.bf16.mxu0 0
        %2010 = vmatpush1.bf16.msra.mxu0 0
        %2011 = vmatprep.subr.bf16.mxu0 0
        %2012 = vmatpush1.bf16.msra.mxu0 0
        %2013 = vmatprep.mubr.bf16.mxu0 0
        %2014 = vmatmul.mubr.bf16.gmra.mrb[0].mxu0 %v286
        %v2015 = vpop.f32.mrb[0].mxu0
        %v2016 = vadd.f32 %v1968, %v2015
        %v2017 = vpop.f32.mrb[0].mxu0
        %v2018 = vpop.f32.mrb[0].mxu0
        %v2019 = vpop.f32.mrb[0].mxu0
        %2020 = vdwg.mxu0
        %v2023 = vunpack.c.l.b16 %v1923
        %v2024 = vunpack.c.l.b16 %v1924
        %v2025 = vpack.c.b16 %v2024, %v2023
        %v2027 = vsel %vm236, %v2025, 0
        %2029 = vmatprep.subr.bf16.mxu0 0
        %2030 = vmatpush1.bf16.msra.mxu0 %v2027
        %2031 = vmatprep.subr.bf16.mxu0 0
        %2032 = vmatpush1.bf16.msra.mxu0 0
        %2033 = vmatprep.subr.bf16.mxu0 0
        %2034 = vmatpush1.bf16.msra.mxu0 0
        %2035 = vmatprep.subr.bf16.mxu0 0
        %2036 = vmatpush1.bf16.msra.mxu0 0
        %2037 = vmatprep.subr.bf16.mxu0 0
        %2038 = vmatpush1.bf16.msra.mxu0 0
        %2039 = vmatprep.subr.bf16.mxu0 0
        %2040 = vmatpush1.bf16.msra.mxu0 0
        %2041 = vmatprep.subr.bf16.mxu0 0
        %2042 = vmatpush1.bf16.msra.mxu0 0
        %2043 = vmatprep.subr.bf16.mxu0 0
        %2044 = vmatpush1.bf16.msra.mxu0 0
        %2045 = vmatprep.subr.bf16.mxu0 0
        %2046 = vmatpush1.bf16.msra.mxu0 0
        %2047 = vmatprep.subr.bf16.mxu0 0
        %2048 = vmatpush1.bf16.msra.mxu0 0
        %2049 = vmatprep.subr.bf16.mxu0 0
        %2050 = vmatpush1.bf16.msra.mxu0 0
        %2051 = vmatprep.subr.bf16.mxu0 0
        %2052 = vmatpush1.bf16.msra.mxu0 0
        %2053 = vmatprep.subr.bf16.mxu0 0
        %2054 = vmatpush1.bf16.msra.mxu0 0
        %2055 = vmatprep.subr.bf16.mxu0 0
        %2056 = vmatpush1.bf16.msra.mxu0 0
        %2057 = vmatprep.subr.bf16.mxu0 0
        %2058 = vmatpush1.bf16.msra.mxu0 0
        %2059 = vmatprep.subr.bf16.mxu0 0
        %2060 = vmatpush1.bf16.msra.mxu0 0
        %2061 = vmatprep.mubr.bf16.mxu0 0
        %2062 = vmatmul.mubr.bf16.gmra.mrb[0].mxu0 %v337
        %v2063 = vpop.f32.mrb[0].mxu0
        %v2064 = vadd.f32 0.0, %v2063
        %v2065 = vpop.f32.mrb[0].mxu0
        %v2066 = vpop.f32.mrb[0].mxu0
        %v2067 = vpop.f32.mrb[0].mxu0
        %2068 = vdwg.mxu0
        %2069 = vmatprep.subr.bf16.mxu0 0
        %2070 = vmatpush1.bf16.msra.mxu0 %v1931
        %2071 = vmatprep.subr.bf16.mxu0 0
        %2072 = vmatpush1.bf16.msra.mxu0 0
        %2073 = vmatprep.subr.bf16.mxu0 0
        %2074 = vmatpush1.bf16.msra.mxu0 0
        %2075 = vmatprep.subr.bf16.mxu0 0
        %2076 = vmatpush1.bf16.msra.mxu0 0
        %2077 = vmatprep.subr.bf16.mxu0 0
        %2078 = vmatpush1.bf16.msra.mxu0 0
        %2079 = vmatprep.subr.bf16.mxu0 0
        %2080 = vmatpush1.bf16.msra.mxu0 0
        %2081 = vmatprep.subr.bf16.mxu0 0
        %2082 = vmatpush1.bf16.msra.mxu0 0
        %2083 = vmatprep.subr.bf16.mxu0 0
        %2084 = vmatpush1.bf16.msra.mxu0 0
        %2085 = vmatprep.subr.bf16.mxu0 0
        %2086 = vmatpush1.bf16.msra.mxu0 0
        %2087 = vmatprep.subr.bf16.mxu0 0
        %2088 = vmatpush1.bf16.msra.mxu0 0
        %2089 = vmatprep.subr.bf16.mxu0 0
        %2090 = vmatpush1.bf16.msra.mxu0 0
        %2091 = vmatprep.subr.bf16.mxu0 0
        %2092 = vmatpush1.bf16.msra.mxu0 0
        %2093 = vmatprep.subr.bf16.mxu0 0
        %2094 = vmatpush1.bf16.msra.mxu0 0
        %2095 = vmatprep.subr.bf16.mxu0 0
        %2096 = vmatpush1.bf16.msra.mxu0 0
        %2097 = vmatprep.subr.bf16.mxu0 0
        %2098 = vmatpush1.bf16.msra.mxu0 0
        %2099 = vmatprep.subr.bf16.mxu0 0
        %2100 = vmatpush1.bf16.msra.mxu0 0
        %2101 = vmatprep.mubr.bf16.mxu0 0
        %2102 = vmatmul.mubr.bf16.gmra.mrb[0].mxu0 %v383
        %v2103 = vpop.f32.mrb[0].mxu0
        %v2104 = vadd.f32 %v2064, %v2103
        %v2105 = vpop.f32.mrb[0].mxu0
        %v2106 = vpop.f32.mrb[0].mxu0
        %v2107 = vpop.f32.mrb[0].mxu0
        %2108 = vdwg.mxu0
        %v2109 = vpack.c.bf16 %v2016, %v2016
        %2110 = vst.msk [vmem:[%s193 + $0x10] sm:$0xf] %vm426, %v2109
        %v2111 = vpack.c.bf16 %v2104, %v2104
        %v2113 = vunpack.c.l.b16 %v2111
        %v2114 = vpack.c.b16 %v2113, %v2113
        %2115 = vrot.lane.b32.xlu0 %v2114, 32
        %v2116 = vpop.permute.xlu0 %2115
        %2118 = vst.msk [vmem:[%s193 + $0x10] sm:$0xf] %vm435, %v2116
        %v2119 = vadd.f32 %v1913, %v2016
        %v2120 = vadd.f32 %v2119, %v2104
        %v2121 = vmul.f32 %v2016, %v2016
        %v2122 = vadd.f32 %v1917, %v2121
        %v2123 = vmul.f32 %v2104, %v2104
        %v2124 = vadd.f32 %v2122, %v2123
        %v2125 = vld [vmem:[%s1709] sm:$0xf]
        %v2126 = vld [vmem:[%s1709 + $0x4] sm:$0x3]
        %v2127 = vld [vmem:[%s1922] sm:$0xf]
        %v2128 = vld [vmem:[%s1922 + $0x4] sm:$0x3]
        %s2129 = scalar_lea.vmem %s209, 88
        %v2130 = vld [vmem:[%s2129] sm:$0xf]
        %v2131 = vld [vmem:[%s2129 + $0x4] sm:$0x3]
        %v2134 = vunpack.c.l.b16 %v2127
        %v2135 = vunpack.c.l.b16 %v2128
        %v2136 = vpack.c.b16 %v2135, %v2134
        %v2138 = vsel %vm236, %v2136, 0
        %2140 = vmatprep.subr.bf16.mxu0 0
        %2141 = vmatpush1.bf16.msra.mxu0 %v2138
        %2142 = vmatprep.subr.bf16.mxu0 0
        %2143 = vmatpush1.bf16.msra.mxu0 0
        %2144 = vmatprep.subr.bf16.mxu0 0
        %2145 = vmatpush1.bf16.msra.mxu0 0
        %2146 = vmatprep.subr.bf16.mxu0 0
        %2147 = vmatpush1.bf16.msra.mxu0 0
        %2148 = vmatprep.subr.bf16.mxu0 0
        %2149 = vmatpush1.bf16.msra.mxu0 0
        %2150 = vmatprep.subr.bf16.mxu0 0
        %2151 = vmatpush1.bf16.msra.mxu0 0
        %2152 = vmatprep.subr.bf16.mxu0 0
        %2153 = vmatpush1.bf16.msra.mxu0 0
        %2154 = vmatprep.subr.bf16.mxu0 0
        %2155 = vmatpush1.bf16.msra.mxu0 0
        %2156 = vmatprep.subr.bf16.mxu0 0
        %2157 = vmatpush1.bf16.msra.mxu0 0
        %2158 = vmatprep.subr.bf16.mxu0 0
        %2159 = vmatpush1.bf16.msra.mxu0 0
        %2160 = vmatprep.subr.bf16.mxu0 0
        %2161 = vmatpush1.bf16.msra.mxu0 0
        %2162 = vmatprep.subr.bf16.mxu0 0
        %2163 = vmatpush1.bf16.msra.mxu0 0
        %2164 = vmatprep.subr.bf16.mxu0 0
        %2165 = vmatpush1.bf16.msra.mxu0 0
        %2166 = vmatprep.subr.bf16.mxu0 0
        %2167 = vmatpush1.bf16.msra.mxu0 0
        %2168 = vmatprep.subr.bf16.mxu0 0
        %2169 = vmatpush1.bf16.msra.mxu0 0
        %2170 = vmatprep.subr.bf16.mxu0 0
        %2171 = vmatpush1.bf16.msra.mxu0 0
        %2172 = vmatprep.mubr.bf16.mxu0 0
        %2173 = vmatmul.mubr.bf16.gmra.mrb[0].mxu0 %v234
        %v2174 = vpop.f32.mrb[0].mxu0
        %v2175 = vadd.f32 0.0, %v2174
        %v2176 = vpop.f32.mrb[0].mxu0
        %v2177 = vpop.f32.mrb[0].mxu0
        %v2178 = vpop.f32.mrb[0].mxu0
        %2179 = vdwg.mxu0
        %v2182 = vunpack.c.l.b16 %v2125
        %v2183 = vunpack.c.l.b16 %v2126
        %v2184 = vpack.c.b16 %v2183, %v2182
        %v2186 = vsel %vm236, %v2184, 0
        %2188 = vmatprep.subr.bf16.mxu0 0
        %2189 = vmatpush1.bf16.msra.mxu0 %v2186
        %2190 = vmatprep.subr.bf16.mxu0 0
        %2191 = vmatpush1.bf16.msra.mxu0 0
        %2192 = vmatprep.subr.bf16.mxu0 0
        %2193 = vmatpush1.bf16.msra.mxu0 0
        %2194 = vmatprep.subr.bf16.mxu0 0
        %2195 = vmatpush1.bf16.msra.mxu0 0
        %2196 = vmatprep.subr.bf16.mxu0 0
        %2197 = vmatpush1.bf16.msra.mxu0 0
        %2198 = vmatprep.subr.bf16.mxu0 0
        %2199 = vmatpush1.bf16.msra.mxu0 0
        %2200 = vmatprep.subr.bf16.mxu0 0
        %2201 = vmatpush1.bf16.msra.mxu0 0
        %2202 = vmatprep.subr.bf16.mxu0 0
        %2203 = vmatpush1.bf16.msra.mxu0 0
        %2204 = vmatprep.subr.bf16.mxu0 0
        %2205 = vmatpush1.bf16.msra.mxu0 0
        %2206 = vmatprep.subr.bf16.mxu0 0
        %2207 = vmatpush1.bf16.msra.mxu0 0
        %2208 = vmatprep.subr.bf16.mxu0 0
        %2209 = vmatpush1.bf16.msra.mxu0 0
        %2210 = vmatprep.subr.bf16.mxu0 0
        %2211 = vmatpush1.bf16.msra.mxu0 0
        %2212 = vmatprep.subr.bf16.mxu0 0
        %2213 = vmatpush1.bf16.msra.mxu0 0
        %2214 = vmatprep.subr.bf16.mxu0 0
        %2215 = vmatpush1.bf16.msra.mxu0 0
        %2216 = vmatprep.subr.bf16.mxu0 0
        %2217 = vmatpush1.bf16.msra.mxu0 0
        %2218 = vmatprep.subr.bf16.mxu0 0
        %2219 = vmatpush1.bf16.msra.mxu0 0
        %2220 = vmatprep.mubr.bf16.mxu0 0
        %2221 = vmatmul.mubr.bf16.gmra.mrb[0].mxu0 %v286
        %v2222 = vpop.f32.mrb[0].mxu0
        %v2223 = vadd.f32 %v2175, %v2222
        %v2224 = vpop.f32.mrb[0].mxu0
        %v2225 = vpop.f32.mrb[0].mxu0
        %v2226 = vpop.f32.mrb[0].mxu0
        %2227 = vdwg.mxu0
        %v2230 = vunpack.c.l.b16 %v2130
        %v2231 = vunpack.c.l.b16 %v2131
        %v2232 = vpack.c.b16 %v2231, %v2230
        %v2234 = vsel %vm236, %v2232, 0
        %2236 = vmatprep.subr.bf16.mxu0 0
        %2237 = vmatpush1.bf16.msra.mxu0 %v2234
        %2238 = vmatprep.subr.bf16.mxu0 0
        %2239 = vmatpush1.bf16.msra.mxu0 0
        %2240 = vmatprep.subr.bf16.mxu0 0
        %2241 = vmatpush1.bf16.msra.mxu0 0
        %2242 = vmatprep.subr.bf16.mxu0 0
        %2243 = vmatpush1.bf16.msra.mxu0 0
        %2244 = vmatprep.subr.bf16.mxu0 0
        %2245 = vmatpush1.bf16.msra.mxu0 0
        %2246 = vmatprep.subr.bf16.mxu0 0
        %2247 = vmatpush1.bf16.msra.mxu0 0
        %2248 = vmatprep.subr.bf16.mxu0 0
        %2249 = vmatpush1.bf16.msra.mxu0 0
        %2250 = vmatprep.subr.bf16.mxu0 0
        %2251 = vmatpush1.bf16.msra.mxu0 0
        %2252 = vmatprep.subr.bf16.mxu0 0
        %2253 = vmatpush1.bf16.msra.mxu0 0
        %2254 = vmatprep.subr.bf16.mxu0 0
        %2255 = vmatpush1.bf16.msra.mxu0 0
        %2256 = vmatprep.subr.bf16.mxu0 0
        %2257 = vmatpush1.bf16.msra.mxu0 0
        %2258 = vmatprep.subr.bf16.mxu0 0
        %2259 = vmatpush1.bf16.msra.mxu0 0
        %2260 = vmatprep.subr.bf16.mxu0 0
        %2261 = vmatpush1.bf16.msra.mxu0 0
        %2262 = vmatprep.subr.bf16.mxu0 0
        %2263 = vmatpush1.bf16.msra.mxu0 0
        %2264 = vmatprep.subr.bf16.mxu0 0
        %2265 = vmatpush1.bf16.msra.mxu0 0
        %2266 = vmatprep.subr.bf16.mxu0 0
        %2267 = vmatpush1.bf16.msra.mxu0 0
        %2268 = vmatprep.mubr.bf16.mxu0 0
        %2269 = vmatmul.mubr.bf16.gmra.mrb[0].mxu0 %v337
        %v2270 = vpop.f32.mrb[0].mxu0
        %v2271 = vadd.f32 0.0, %v2270
        %v2272 = vpop.f32.mrb[0].mxu0
        %v2273 = vpop.f32.mrb[0].mxu0
        %v2274 = vpop.f32.mrb[0].mxu0
        %2275 = vdwg.mxu0
        %2276 = vmatprep.subr.bf16.mxu0 0
        %2277 = vmatpush1.bf16.msra.mxu0 %v2138
        %2278 = vmatprep.subr.bf16.mxu0 0
        %2279 = vmatpush1.bf16.msra.mxu0 0
        %2280 = vmatprep.subr.bf16.mxu0 0
        %2281 = vmatpush1.bf16.msra.mxu0 0
        %2282 = vmatprep.subr.bf16.mxu0 0
        %2283 = vmatpush1.bf16.msra.mxu0 0
        %2284 = vmatprep.subr.bf16.mxu0 0
        %2285 = vmatpush1.bf16.msra.mxu0 0
        %2286 = vmatprep.subr.bf16.mxu0 0
        %2287 = vmatpush1.bf16.msra.mxu0 0
        %2288 = vmatprep.subr.bf16.mxu0 0
        %2289 = vmatpush1.bf16.msra.mxu0 0
        %2290 = vmatprep.subr.bf16.mxu0 0
        %2291 = vmatpush1.bf16.msra.mxu0 0
        %2292 = vmatprep.subr.bf16.mxu0 0
        %2293 = vmatpush1.bf16.msra.mxu0 0
        %2294 = vmatprep.subr.bf16.mxu0 0
        %2295 = vmatpush1.bf16.msra.mxu0 0
        %2296 = vmatprep.subr.bf16.mxu0 0
        %2297 = vmatpush1.bf16.msra.mxu0 0
        %2298 = vmatprep.subr.bf16.mxu0 0
        %2299 = vmatpush1.bf16.msra.mxu0 0
        %2300 = vmatprep.subr.bf16.mxu0 0
        %2301 = vmatpush1.bf16.msra.mxu0 0
        %2302 = vmatprep.subr.bf16.mxu0 0
        %2303 = vmatpush1.bf16.msra.mxu0 0
        %2304 = vmatprep.subr.bf16.mxu0 0
        %2305 = vmatpush1.bf16.msra.mxu0 0
        %2306 = vmatprep.subr.bf16.mxu0 0
        %2307 = vmatpush1.bf16.msra.mxu0 0
        %2308 = vmatprep.mubr.bf16.mxu0 0
        %2309 = vmatmul.mubr.bf16.gmra.mrb[0].mxu0 %v383
        %v2310 = vpop.f32.mrb[0].mxu0
        %v2311 = vadd.f32 %v2271, %v2310
        %v2312 = vpop.f32.mrb[0].mxu0
        %v2313 = vpop.f32.mrb[0].mxu0
        %v2314 = vpop.f32.mrb[0].mxu0
        %2315 = vdwg.mxu0
        %v2316 = vpack.c.bf16 %v2223, %v2223
        %v2318 = vunpack.c.l.b16 %v2316
        %v2319 = vpack.c.b16 %v2318, %v2318
        %2320 = vrot.lane.b32.xlu0 %v2319, 64
        %v2321 = vpop.permute.xlu0 %2320
        %2323 = vst.msk [vmem:[%s193 + $0x10] sm:$0xf] %vm641, %v2321
        %v2324 = vpack.c.bf16 %v2311, %v2311
        %v2326 = vunpack.c.l.b16 %v2324
        %v2327 = vpack.c.b16 %v2326, %v2326
        %2328 = vrot.lane.b32.xlu0 %v2327, 96
        %v2329 = vpop.permute.xlu0 %2328
        %2331 = vst.msk [vmem:[%s193 + $0x10] sm:$0xf] %vm650, %v2329
        %v2332 = vadd.f32 %v2120, %v2223
        %v2333 = vadd.f32 %v2332, %v2311
        %v2334 = vmul.f32 %v2223, %v2223
        %v2335 = vadd.f32 %v2124, %v2334
        %v2336 = vmul.f32 %v2311, %v2311
        %v2337 = vadd.f32 %v2335, %v2336
        %v2338 = vld [vmem:[%s1922] sm:$0xf]
        %v2339 = vld [vmem:[%s1922 + $0x4] sm:$0x3]
        %v2340 = vld [vmem:[%s2129] sm:$0xf]
        %v2341 = vld [vmem:[%s2129 + $0x4] sm:$0x3]
        %s2342 = scalar_lea.vmem %s209, 96
        %v2343 = vld [vmem:[%s2342] sm:$0xf]
        %v2344 = vld [vmem:[%s2342 + $0x4] sm:$0x3]
        %v2347 = vunpack.c.l.b16 %v2340
        %v2348 = vunpack.c.l.b16 %v2341
        %v2349 = vpack.c.b16 %v2348, %v2347
        %v2351 = vsel %vm236, %v2349, 0
        %2353 = vmatprep.subr.bf16.mxu0 0
        %2354 = vmatpush1.bf16.msra.mxu0 %v2351
        %2355 = vmatprep.subr.bf16.mxu0 0
        %2356 = vmatpush1.bf16.msra.mxu0 0
        %2357 = vmatprep.subr.bf16.mxu0 0
        %2358 = vmatpush1.bf16.msra.mxu0 0
        %2359 = vmatprep.subr.bf16.mxu0 0
        %2360 = vmatpush1.bf16.msra.mxu0 0
        %2361 = vmatprep.subr.bf16.mxu0 0
        %2362 = vmatpush1.bf16.msra.mxu0 0
        %2363 = vmatprep.subr.bf16.mxu0 0
        %2364 = vmatpush1.bf16.msra.mxu0 0
        %2365 = vmatprep.subr.bf16.mxu0 0
        %2366 = vmatpush1.bf16.msra.mxu0 0
        %2367 = vmatprep.subr.bf16.mxu0 0
        %2368 = vmatpush1.bf16.msra.mxu0 0
        %2369 = vmatprep.subr.bf16.mxu0 0
        %2370 = vmatpush1.bf16.msra.mxu0 0
        %2371 = vmatprep.subr.bf16.mxu0 0
        %2372 = vmatpush1.bf16.msra.mxu0 0
        %2373 = vmatprep.subr.bf16.mxu0 0
        %2374 = vmatpush1.bf16.msra.mxu0 0
        %2375 = vmatprep.subr.bf16.mxu0 0
        %2376 = vmatpush1.bf16.msra.mxu0 0
        %2377 = vmatprep.subr.bf16.mxu0 0
        %2378 = vmatpush1.bf16.msra.mxu0 0
        %2379 = vmatprep.subr.bf16.mxu0 0
        %2380 = vmatpush1.bf16.msra.mxu0 0
        %2381 = vmatprep.subr.bf16.mxu0 0
        %2382 = vmatpush1.bf16.msra.mxu0 0
        %2383 = vmatprep.subr.bf16.mxu0 0
        %2384 = vmatpush1.bf16.msra.mxu0 0
        %2385 = vmatprep.mubr.bf16.mxu0 0
        %2386 = vmatmul.mubr.bf16.gmra.mrb[0].mxu0 %v234
        %v2387 = vpop.f32.mrb[0].mxu0
        %v2388 = vadd.f32 0.0, %v2387
        %v2389 = vpop.f32.mrb[0].mxu0
        %v2390 = vpop.f32.mrb[0].mxu0
        %v2391 = vpop.f32.mrb[0].mxu0
        %2392 = vdwg.mxu0
        %v2395 = vunpack.c.l.b16 %v2338
        %v2396 = vunpack.c.l.b16 %v2339
        %v2397 = vpack.c.b16 %v2396, %v2395
        %v2399 = vsel %vm236, %v2397, 0
        %2401 = vmatprep.subr.bf16.mxu0 0
        %2402 = vmatpush1.bf16.msra.mxu0 %v2399
        %2403 = vmatprep.subr.bf16.mxu0 0
        %2404 = vmatpush1.bf16.msra.mxu0 0
        %2405 = vmatprep.subr.bf16.mxu0 0
        %2406 = vmatpush1.bf16.msra.mxu0 0
        %2407 = vmatprep.subr.bf16.mxu0 0
        %2408 = vmatpush1.bf16.msra.mxu0 0
        %2409 = vmatprep.subr.bf16.mxu0 0
        %2410 = vmatpush1.bf16.msra.mxu0 0
        %2411 = vmatprep.subr.bf16.mxu0 0
        %2412 = vmatpush1.bf16.msra.mxu0 0
        %2413 = vmatprep.subr.bf16.mxu0 0
        %2414 = vmatpush1.bf16.msra.mxu0 0
        %2415 = vmatprep.subr.bf16.mxu0 0
        %2416 = vmatpush1.bf16.msra.mxu0 0
        %2417 = vmatprep.subr.bf16.mxu0 0
        %2418 = vmatpush1.bf16.msra.mxu0 0
        %2419 = vmatprep.subr.bf16.mxu0 0
        %2420 = vmatpush1.bf16.msra.mxu0 0
        %2421 = vmatprep.subr.bf16.mxu0 0
        %2422 = vmatpush1.bf16.msra.mxu0 0
        %2423 = vmatprep.subr.bf16.mxu0 0
        %2424 = vmatpush1.bf16.msra.mxu0 0
        %2425 = vmatprep.subr.bf16.mxu0 0
        %2426 = vmatpush1.bf16.msra.mxu0 0
        %2427 = vmatprep.subr.bf16.mxu0 0
        %2428 = vmatpush1.bf16.msra.mxu0 0
        %2429 = vmatprep.subr.bf16.mxu0 0
        %2430 = vmatpush1.bf16.msra.mxu0 0
        %2431 = vmatprep.subr.bf16.mxu0 0
        %2432 = vmatpush1.bf16.msra.mxu0 0
        %2433 = vmatprep.mubr.bf16.mxu0 0
        %2434 = vmatmul.mubr.bf16.gmra.mrb[0].mxu0 %v286
        %v2435 = vpop.f32.mrb[0].mxu0
        %v2436 = vadd.f32 %v2388, %v2435
        %v2437 = vpop.f32.mrb[0].mxu0
        %v2438 = vpop.f32.mrb[0].mxu0
        %v2439 = vpop.f32.mrb[0].mxu0
        %2440 = vdwg.mxu0
        %v2443 = vunpack.c.l.b16 %v2343
        %v2444 = vunpack.c.l.b16 %v2344
        %v2445 = vpack.c.b16 %v2444, %v2443
        %v2447 = vsel %vm236, %v2445, 0
        %2449 = vmatprep.subr.bf16.mxu0 0
        %2450 = vmatpush1.bf16.msra.mxu0 %v2447
        %2451 = vmatprep.subr.bf16.mxu0 0
        %2452 = vmatpush1.bf16.msra.mxu0 0
        %2453 = vmatprep.subr.bf16.mxu0 0
        %2454 = vmatpush1.bf16.msra.mxu0 0
        %2455 = vmatprep.subr.bf16.mxu0 0
        %2456 = vmatpush1.bf16.msra.mxu0 0
        %2457 = vmatprep.subr.bf16.mxu0 0
        %2458 = vmatpush1.bf16.msra.mxu0 0
        %2459 = vmatprep.subr.bf16.mxu0 0
        %2460 = vmatpush1.bf16.msra.mxu0 0
        %2461 = vmatprep.subr.bf16.mxu0 0
        %2462 = vmatpush1.bf16.msra.mxu0 0
        %2463 = vmatprep.subr.bf16.mxu0 0
        %2464 = vmatpush1.bf16.msra.mxu0 0
        %2465 = vmatprep.subr.bf16.mxu0 0
        %2466 = vmatpush1.bf16.msra.mxu0 0
        %2467 = vmatprep.subr.bf16.mxu0 0
        %2468 = vmatpush1.bf16.msra.mxu0 0
        %2469 = vmatprep.subr.bf16.mxu0 0
        %2470 = vmatpush1.bf16.msra.mxu0 0
        %2471 = vmatprep.subr.bf16.mxu0 0
        %2472 = vmatpush1.bf16.msra.mxu0 0
        %2473 = vmatprep.subr.bf16.mxu0 0
        %2474 = vmatpush1.bf16.msra.mxu0 0
        %2475 = vmatprep.subr.bf16.mxu0 0
        %2476 = vmatpush1.bf16.msra.mxu0 0
        %2477 = vmatprep.subr.bf16.mxu0 0
        %2478 = vmatpush1.bf16.msra.mxu0 0
        %2479 = vmatprep.subr.bf16.mxu0 0
        %2480 = vmatpush1.bf16.msra.mxu0 0
        %2481 = vmatprep.mubr.bf16.mxu0 0
        %2482 = vmatmul.mubr.bf16.gmra.mrb[0].mxu0 %v337
        %v2483 = vpop.f32.mrb[0].mxu0
        %v2484 = vadd.f32 0.0, %v2483
        %v2485 = vpop.f32.mrb[0].mxu0
        %v2486 = vpop.f32.mrb[0].mxu0
        %v2487 = vpop.f32.mrb[0].mxu0
        %2488 = vdwg.mxu0
        %2489 = vmatprep.subr.bf16.mxu0 0
        %2490 = vmatpush1.bf16.msra.mxu0 %v2351
        %2491 = vmatprep.subr.bf16.mxu0 0
        %2492 = vmatpush1.bf16.msra.mxu0 0
        %2493 = vmatprep.subr.bf16.mxu0 0
        %2494 = vmatpush1.bf16.msra.mxu0 0
        %2495 = vmatprep.subr.bf16.mxu0 0
        %2496 = vmatpush1.bf16.msra.mxu0 0
        %2497 = vmatprep.subr.bf16.mxu0 0
        %2498 = vmatpush1.bf16.msra.mxu0 0
        %2499 = vmatprep.subr.bf16.mxu0 0
        %2500 = vmatpush1.bf16.msra.mxu0 0
        %2501 = vmatprep.subr.bf16.mxu0 0
        %2502 = vmatpush1.bf16.msra.mxu0 0
        %2503 = vmatprep.subr.bf16.mxu0 0
        %2504 = vmatpush1.bf16.msra.mxu0 0
        %2505 = vmatprep.subr.bf16.mxu0 0
        %2506 = vmatpush1.bf16.msra.mxu0 0
        %2507 = vmatprep.subr.bf16.mxu0 0
        %2508 = vmatpush1.bf16.msra.mxu0 0
        %2509 = vmatprep.subr.bf16.mxu0 0
        %2510 = vmatpush1.bf16.msra.mxu0 0
        %2511 = vmatprep.subr.bf16.mxu0 0
        %2512 = vmatpush1.bf16.msra.mxu0 0
        %2513 = vmatprep.subr.bf16.mxu0 0
        %2514 = vmatpush1.bf16.msra.mxu0 0
        %2515 = vmatprep.subr.bf16.mxu0 0
        %2516 = vmatpush1.bf16.msra.mxu0 0
        %2517 = vmatprep.subr.bf16.mxu0 0
        %2518 = vmatpush1.bf16.msra.mxu0 0
        %2519 = vmatprep.subr.bf16.mxu0 0
        %2520 = vmatpush1.bf16.msra.mxu0 0
        %2521 = vmatprep.mubr.bf16.mxu0 0
        %2522 = vmatmul.mubr.bf16.gmra.mrb[0].mxu0 %v383
        %v2523 = vpop.f32.mrb[0].mxu0
        %v2524 = vadd.f32 %v2484, %v2523
        %v2525 = vpop.f32.mrb[0].mxu0
        %v2526 = vpop.f32.mrb[0].mxu0
        %v2527 = vpop.f32.mrb[0].mxu0
        %2528 = vdwg.mxu0
        %v2529 = vpack.c.bf16 %v2436, %v2436
        %2530 = vst.msk [vmem:[%s193 + $0x14] sm:$0xf] %vm426, %v2529
        %v2531 = vpack.c.bf16 %v2524, %v2524
        %v2533 = vunpack.c.l.b16 %v2531
        %v2534 = vpack.c.b16 %v2533, %v2533
        %2535 = vrot.lane.b32.xlu0 %v2534, 32
        %v2536 = vpop.permute.xlu0 %2535
        %2538 = vst.msk [vmem:[%s193 + $0x14] sm:$0xf] %vm435, %v2536
        %v2539 = vadd.f32 %v2333, %v2436
        %v2540 = vadd.f32 %v2539, %v2524
        %v2541 = vmul.f32 %v2436, %v2436
        %v2542 = vadd.f32 %v2337, %v2541
        %v2543 = vmul.f32 %v2524, %v2524
        %v2544 = vadd.f32 %v2542, %v2543
        %v2545 = vld [vmem:[%s2129] sm:$0xf]
        %v2546 = vld [vmem:[%s2129 + $0x4] sm:$0x3]
        %v2547 = vld [vmem:[%s2342] sm:$0xf]
        %v2548 = vld [vmem:[%s2342 + $0x4] sm:$0x3]
        %s2549 = scalar_lea.vmem %s209, 104
        %v2550 = vld [vmem:[%s2549] sm:$0xf]
        %v2551 = vld [vmem:[%s2549 + $0x4] sm:$0x3]
        %v2554 = vunpack.c.l.b16 %v2547
        %v2555 = vunpack.c.l.b16 %v2548
        %v2556 = vpack.c.b16 %v2555, %v2554
        %v2558 = vsel %vm236, %v2556, 0
        %2560 = vmatprep.subr.bf16.mxu0 0
        %2561 = vmatpush1.bf16.msra.mxu0 %v2558
        %2562 = vmatprep.subr.bf16.mxu0 0
        %2563 = vmatpush1.bf16.msra.mxu0 0
        %2564 = vmatprep.subr.bf16.mxu0 0
        %2565 = vmatpush1.bf16.msra.mxu0 0
        %2566 = vmatprep.subr.bf16.mxu0 0
        %2567 = vmatpush1.bf16.msra.mxu0 0
        %2568 = vmatprep.subr.bf16.mxu0 0
        %2569 = vmatpush1.bf16.msra.mxu0 0
        %2570 = vmatprep.subr.bf16.mxu0 0
        %2571 = vmatpush1.bf16.msra.mxu0 0
        %2572 = vmatprep.subr.bf16.mxu0 0
        %2573 = vmatpush1.bf16.msra.mxu0 0
        %2574 = vmatprep.subr.bf16.mxu0 0
        %2575 = vmatpush1.bf16.msra.mxu0 0
        %2576 = vmatprep.subr.bf16.mxu0 0
        %2577 = vmatpush1.bf16.msra.mxu0 0
        %2578 = vmatprep.subr.bf16.mxu0 0
        %2579 = vmatpush1.bf16.msra.mxu0 0
        %2580 = vmatprep.subr.bf16.mxu0 0
        %2581 = vmatpush1.bf16.msra.mxu0 0
        %2582 = vmatprep.subr.bf16.mxu0 0
        %2583 = vmatpush1.bf16.msra.mxu0 0
        %2584 = vmatprep.subr.bf16.mxu0 0
        %2585 = vmatpush1.bf16.msra.mxu0 0
        %2586 = vmatprep.subr.bf16.mxu0 0
        %2587 = vmatpush1.bf16.msra.mxu0 0
        %2588 = vmatprep.subr.bf16.mxu0 0
        %2589 = vmatpush1.bf16.msra.mxu0 0
        %2590 = vmatprep.subr.bf16.mxu0 0
        %2591 = vmatpush1.bf16.msra.mxu0 0
        %2592 = vmatprep.mubr.bf16.mxu0 0
        %2593 = vmatmul.mubr.bf16.gmra.mrb[0].mxu0 %v234
        %v2594 = vpop.f32.mrb[0].mxu0
        %v2595 = vadd.f32 0.0, %v2594
        %v2596 = vpop.f32.mrb[0].mxu0
        %v2597 = vpop.f32.mrb[0].mxu0
        %v2598 = vpop.f32.mrb[0].mxu0
        %2599 = vdwg.mxu0
        %v2602 = vunpack.c.l.b16 %v2545
        %v2603 = vunpack.c.l.b16 %v2546
        %v2604 = vpack.c.b16 %v2603, %v2602
        %v2606 = vsel %vm236, %v2604, 0
        %2608 = vmatprep.subr.bf16.mxu0 0
        %2609 = vmatpush1.bf16.msra.mxu0 %v2606
        %2610 = vmatprep.subr.bf16.mxu0 0
        %2611 = vmatpush1.bf16.msra.mxu0 0
        %2612 = vmatprep.subr.bf16.mxu0 0
        %2613 = vmatpush1.bf16.msra.mxu0 0
        %2614 = vmatprep.subr.bf16.mxu0 0
        %2615 = vmatpush1.bf16.msra.mxu0 0
        %2616 = vmatprep.subr.bf16.mxu0 0
        %2617 = vmatpush1.bf16.msra.mxu0 0
        %2618 = vmatprep.subr.bf16.mxu0 0
        %2619 = vmatpush1.bf16.msra.mxu0 0
        %2620 = vmatprep.subr.bf16.mxu0 0
        %2621 = vmatpush1.bf16.msra.mxu0 0
        %2622 = vmatprep.subr.bf16.mxu0 0
        %2623 = vmatpush1.bf16.msra.mxu0 0
        %2624 = vmatprep.subr.bf16.mxu0 0
        %2625 = vmatpush1.bf16.msra.mxu0 0
        %2626 = vmatprep.subr.bf16.mxu0 0
        %2627 = vmatpush1.bf16.msra.mxu0 0
        %2628 = vmatprep.subr.bf16.mxu0 0
        %2629 = vmatpush1.bf16.msra.mxu0 0
        %2630 = vmatprep.subr.bf16.mxu0 0
        %2631 = vmatpush1.bf16.msra.mxu0 0
        %2632 = vmatprep.subr.bf16.mxu0 0
        %2633 = vmatpush1.bf16.msra.mxu0 0
        %2634 = vmatprep.subr.bf16.mxu0 0
        %2635 = vmatpush1.bf16.msra.mxu0 0
        %2636 = vmatprep.subr.bf16.mxu0 0
        %2637 = vmatpush1.bf16.msra.mxu0 0
        %2638 = vmatprep.subr.bf16.mxu0 0
        %2639 = vmatpush1.bf16.msra.mxu0 0
        %2640 = vmatprep.mubr.bf16.mxu0 0
        %2641 = vmatmul.mubr.bf16.gmra.mrb[0].mxu0 %v286
        %v2642 = vpop.f32.mrb[0].mxu0
        %v2643 = vadd.f32 %v2595, %v2642
        %v2644 = vpop.f32.mrb[0].mxu0
        %v2645 = vpop.f32.mrb[0].mxu0
        %v2646 = vpop.f32.mrb[0].mxu0
        %2647 = vdwg.mxu0
        %v2650 = vunpack.c.l.b16 %v2550
        %v2651 = vunpack.c.l.b16 %v2551
        %v2652 = vpack.c.b16 %v2651, %v2650
        %v2654 = vsel %vm236, %v2652, 0
        %2656 = vmatprep.subr.bf16.mxu0 0
        %2657 = vmatpush1.bf16.msra.mxu0 %v2654
        %2658 = vmatprep.subr.bf16.mxu0 0
        %2659 = vmatpush1.bf16.msra.mxu0 0
        %2660 = vmatprep.subr.bf16.mxu0 0
        %2661 = vmatpush1.bf16.msra.mxu0 0
        %2662 = vmatprep.subr.bf16.mxu0 0
        %2663 = vmatpush1.bf16.msra.mxu0 0
        %2664 = vmatprep.subr.bf16.mxu0 0
        %2665 = vmatpush1.bf16.msra.mxu0 0
        %2666 = vmatprep.subr.bf16.mxu0 0
        %2667 = vmatpush1.bf16.msra.mxu0 0
        %2668 = vmatprep.subr.bf16.mxu0 0
        %2669 = vmatpush1.bf16.msra.mxu0 0
        %2670 = vmatprep.subr.bf16.mxu0 0
        %2671 = vmatpush1.bf16.msra.mxu0 0
        %2672 = vmatprep.subr.bf16.mxu0 0
        %2673 = vmatpush1.bf16.msra.mxu0 0
        %2674 = vmatprep.subr.bf16.mxu0 0
        %2675 = vmatpush1.bf16.msra.mxu0 0
        %2676 = vmatprep.subr.bf16.mxu0 0
        %2677 = vmatpush1.bf16.msra.mxu0 0
        %2678 = vmatprep.subr.bf16.mxu0 0
        %2679 = vmatpush1.bf16.msra.mxu0 0
        %2680 = vmatprep.subr.bf16.mxu0 0
        %2681 = vmatpush1.bf16.msra.mxu0 0
        %2682 = vmatprep.subr.bf16.mxu0 0
        %2683 = vmatpush1.bf16.msra.mxu0 0
        %2684 = vmatprep.subr.bf16.mxu0 0
        %2685 = vmatpush1.bf16.msra.mxu0 0
        %2686 = vmatprep.subr.bf16.mxu0 0
        %2687 = vmatpush1.bf16.msra.mxu0 0
        %2688 = vmatprep.mubr.bf16.mxu0 0
        %2689 = vmatmul.mubr.bf16.gmra.mrb[0].mxu0 %v337
        %v2690 = vpop.f32.mrb[0].mxu0
        %v2691 = vadd.f32 0.0, %v2690
        %v2692 = vpop.f32.mrb[0].mxu0
        %v2693 = vpop.f32.mrb[0].mxu0
        %v2694 = vpop.f32.mrb[0].mxu0
        %2695 = vdwg.mxu0
        %2696 = vmatprep.subr.bf16.mxu0 0
        %2697 = vmatpush1.bf16.msra.mxu0 %v2558
        %2698 = vmatprep.subr.bf16.mxu0 0
        %2699 = vmatpush1.bf16.msra.mxu0 0
        %2700 = vmatprep.subr.bf16.mxu0 0
        %2701 = vmatpush1.bf16.msra.mxu0 0
        %2702 = vmatprep.subr.bf16.mxu0 0
        %2703 = vmatpush1.bf16.msra.mxu0 0
        %2704 = vmatprep.subr.bf16.mxu0 0
        %2705 = vmatpush1.bf16.msra.mxu0 0
        %2706 = vmatprep.subr.bf16.mxu0 0
        %2707 = vmatpush1.bf16.msra.mxu0 0
        %2708 = vmatprep.subr.bf16.mxu0 0
        %2709 = vmatpush1.bf16.msra.mxu0 0
        %2710 = vmatprep.subr.bf16.mxu0 0
        %2711 = vmatpush1.bf16.msra.mxu0 0
        %2712 = vmatprep.subr.bf16.mxu0 0
        %2713 = vmatpush1.bf16.msra.mxu0 0
        %2714 = vmatprep.subr.bf16.mxu0 0
        %2715 = vmatpush1.bf16.msra.mxu0 0
        %2716 = vmatprep.subr.bf16.mxu0 0
        %2717 = vmatpush1.bf16.msra.mxu0 0
        %2718 = vmatprep.subr.bf16.mxu0 0
        %2719 = vmatpush1.bf16.msra.mxu0 0
        %2720 = vmatprep.subr.bf16.mxu0 0
        %2721 = vmatpush1.bf16.msra.mxu0 0
        %2722 = vmatprep.subr.bf16.mxu0 0
        %2723 = vmatpush1.bf16.msra.mxu0 0
        %2724 = vmatprep.subr.bf16.mxu0 0
        %2725 = vmatpush1.bf16.msra.mxu0 0
        %2726 = vmatprep.subr.bf16.mxu0 0
        %2727 = vmatpush1.bf16.msra.mxu0 0
        %2728 = vmatprep.mubr.bf16.mxu0 0
        %2729 = vmatmul.mubr.bf16.gmra.mrb[0].mxu0 %v383
        %v2730 = vpop.f32.mrb[0].mxu0
        %v2731 = vadd.f32 %v2691, %v2730
        %v2732 = vpop.f32.mrb[0].mxu0
        %v2733 = vpop.f32.mrb[0].mxu0
        %v2734 = vpop.f32.mrb[0].mxu0
        %2735 = vdwg.mxu0
        %v2736 = vpack.c.bf16 %v2643, %v2643
        %v2738 = vunpack.c.l.b16 %v2736
        %v2739 = vpack.c.b16 %v2738, %v2738
        %2740 = vrot.lane.b32.xlu0 %v2739, 64
        %v2741 = vpop.permute.xlu0 %2740
        %2743 = vst.msk [vmem:[%s193 + $0x14] sm:$0xf] %vm641, %v2741
        %v2744 = vpack.c.bf16 %v2731, %v2731
        %v2746 = vunpack.c.l.b16 %v2744
        %v2747 = vpack.c.b16 %v2746, %v2746
        %2748 = vrot.lane.b32.xlu0 %v2747, 96
        %v2749 = vpop.permute.xlu0 %2748
        %2751 = vst.msk [vmem:[%s193 + $0x14] sm:$0xf] %vm650, %v2749
        %v2752 = vadd.f32 %v2540, %v2643
        %v2753 = vadd.f32 %v2752, %v2731
        %v2754 = vmul.f32 %v2643, %v2643
        %v2755 = vadd.f32 %v2544, %v2754
        %v2756 = vmul.f32 %v2731, %v2731
        %v2757 = vadd.f32 %v2755, %v2756
        %v2758 = vld [vmem:[%s2342] sm:$0xf]
        %v2759 = vld [vmem:[%s2342 + $0x4] sm:$0x3]
        %v2760 = vld [vmem:[%s2549] sm:$0xf]
        %v2761 = vld [vmem:[%s2549 + $0x4] sm:$0x3]
        %s2762 = scalar_lea.vmem %s209, 112
        %v2763 = vld [vmem:[%s2762] sm:$0xf]
        %v2764 = vld [vmem:[%s2762 + $0x4] sm:$0x3]
        %v2767 = vunpack.c.l.b16 %v2760
        %v2768 = vunpack.c.l.b16 %v2761
        %v2769 = vpack.c.b16 %v2768, %v2767
        %v2771 = vsel %vm236, %v2769, 0
        %2773 = vmatprep.subr.bf16.mxu0 0
        %2774 = vmatpush1.bf16.msra.mxu0 %v2771
        %2775 = vmatprep.subr.bf16.mxu0 0
        %2776 = vmatpush1.bf16.msra.mxu0 0
        %2777 = vmatprep.subr.bf16.mxu0 0
        %2778 = vmatpush1.bf16.msra.mxu0 0
        %2779 = vmatprep.subr.bf16.mxu0 0
        %2780 = vmatpush1.bf16.msra.mxu0 0
        %2781 = vmatprep.subr.bf16.mxu0 0
        %2782 = vmatpush1.bf16.msra.mxu0 0
        %2783 = vmatprep.subr.bf16.mxu0 0
        %2784 = vmatpush1.bf16.msra.mxu0 0
        %2785 = vmatprep.subr.bf16.mxu0 0
        %2786 = vmatpush1.bf16.msra.mxu0 0
        %2787 = vmatprep.subr.bf16.mxu0 0
        %2788 = vmatpush1.bf16.msra.mxu0 0
        %2789 = vmatprep.subr.bf16.mxu0 0
        %2790 = vmatpush1.bf16.msra.mxu0 0
        %2791 = vmatprep.subr.bf16.mxu0 0
        %2792 = vmatpush1.bf16.msra.mxu0 0
        %2793 = vmatprep.subr.bf16.mxu0 0
        %2794 = vmatpush1.bf16.msra.mxu0 0
        %2795 = vmatprep.subr.bf16.mxu0 0
        %2796 = vmatpush1.bf16.msra.mxu0 0
        %2797 = vmatprep.subr.bf16.mxu0 0
        %2798 = vmatpush1.bf16.msra.mxu0 0
        %2799 = vmatprep.subr.bf16.mxu0 0
        %2800 = vmatpush1.bf16.msra.mxu0 0
        %2801 = vmatprep.subr.bf16.mxu0 0
        %2802 = vmatpush1.bf16.msra.mxu0 0
        %2803 = vmatprep.subr.bf16.mxu0 0
        %2804 = vmatpush1.bf16.msra.mxu0 0
        %2805 = vmatprep.mubr.bf16.mxu0 0
        %2806 = vmatmul.mubr.bf16.gmra.mrb[0].mxu0 %v234
        %v2807 = vpop.f32.mrb[0].mxu0
        %v2808 = vadd.f32 0.0, %v2807
        %v2809 = vpop.f32.mrb[0].mxu0
        %v2810 = vpop.f32.mrb[0].mxu0
        %v2811 = vpop.f32.mrb[0].mxu0
        %2812 = vdwg.mxu0
        %v2815 = vunpack.c.l.b16 %v2758
        %v2816 = vunpack.c.l.b16 %v2759
        %v2817 = vpack.c.b16 %v2816, %v2815
        %v2819 = vsel %vm236, %v2817, 0
        %2821 = vmatprep.subr.bf16.mxu0 0
        %2822 = vmatpush1.bf16.msra.mxu0 %v2819
        %2823 = vmatprep.subr.bf16.mxu0 0
        %2824 = vmatpush1.bf16.msra.mxu0 0
        %2825 = vmatprep.subr.bf16.mxu0 0
        %2826 = vmatpush1.bf16.msra.mxu0 0
        %2827 = vmatprep.subr.bf16.mxu0 0
        %2828 = vmatpush1.bf16.msra.mxu0 0
        %2829 = vmatprep.subr.bf16.mxu0 0
        %2830 = vmatpush1.bf16.msra.mxu0 0
        %2831 = vmatprep.subr.bf16.mxu0 0
        %2832 = vmatpush1.bf16.msra.mxu0 0
        %2833 = vmatprep.subr.bf16.mxu0 0
        %2834 = vmatpush1.bf16.msra.mxu0 0
        %2835 = vmatprep.subr.bf16.mxu0 0
        %2836 = vmatpush1.bf16.msra.mxu0 0
        %2837 = vmatprep.subr.bf16.mxu0 0
        %2838 = vmatpush1.bf16.msra.mxu0 0
        %2839 = vmatprep.subr.bf16.mxu0 0
        %2840 = vmatpush1.bf16.msra.mxu0 0
        %2841 = vmatprep.subr.bf16.mxu0 0
        %2842 = vmatpush1.bf16.msra.mxu0 0
        %2843 = vmatprep.subr.bf16.mxu0 0
        %2844 = vmatpush1.bf16.msra.mxu0 0
        %2845 = vmatprep.subr.bf16.mxu0 0
        %2846 = vmatpush1.bf16.msra.mxu0 0
        %2847 = vmatprep.subr.bf16.mxu0 0
        %2848 = vmatpush1.bf16.msra.mxu0 0
        %2849 = vmatprep.subr.bf16.mxu0 0
        %2850 = vmatpush1.bf16.msra.mxu0 0
        %2851 = vmatprep.subr.bf16.mxu0 0
        %2852 = vmatpush1.bf16.msra.mxu0 0
        %2853 = vmatprep.mubr.bf16.mxu0 0
        %2854 = vmatmul.mubr.bf16.gmra.mrb[0].mxu0 %v286
        %v2855 = vpop.f32.mrb[0].mxu0
        %v2856 = vadd.f32 %v2808, %v2855
        %v2857 = vpop.f32.mrb[0].mxu0
        %v2858 = vpop.f32.mrb[0].mxu0
        %v2859 = vpop.f32.mrb[0].mxu0
        %2860 = vdwg.mxu0
        %v2863 = vunpack.c.l.b16 %v2763
        %v2864 = vunpack.c.l.b16 %v2764
        %v2865 = vpack.c.b16 %v2864, %v2863
        %v2867 = vsel %vm236, %v2865, 0
        %2869 = vmatprep.subr.bf16.mxu0 0
        %2870 = vmatpush1.bf16.msra.mxu0 %v2867
        %2871 = vmatprep.subr.bf16.mxu0 0
        %2872 = vmatpush1.bf16.msra.mxu0 0
        %2873 = vmatprep.subr.bf16.mxu0 0
        %2874 = vmatpush1.bf16.msra.mxu0 0
        %2875 = vmatprep.subr.bf16.mxu0 0
        %2876 = vmatpush1.bf16.msra.mxu0 0
        %2877 = vmatprep.subr.bf16.mxu0 0
        %2878 = vmatpush1.bf16.msra.mxu0 0
        %2879 = vmatprep.subr.bf16.mxu0 0
        %2880 = vmatpush1.bf16.msra.mxu0 0
        %2881 = vmatprep.subr.bf16.mxu0 0
        %2882 = vmatpush1.bf16.msra.mxu0 0
        %2883 = vmatprep.subr.bf16.mxu0 0
        %2884 = vmatpush1.bf16.msra.mxu0 0
        %2885 = vmatprep.subr.bf16.mxu0 0
        %2886 = vmatpush1.bf16.msra.mxu0 0
        %2887 = vmatprep.subr.bf16.mxu0 0
        %2888 = vmatpush1.bf16.msra.mxu0 0
        %2889 = vmatprep.subr.bf16.mxu0 0
        %2890 = vmatpush1.bf16.msra.mxu0 0
        %2891 = vmatprep.subr.bf16.mxu0 0
        %2892 = vmatpush1.bf16.msra.mxu0 0
        %2893 = vmatprep.subr.bf16.mxu0 0
        %2894 = vmatpush1.bf16.msra.mxu0 0
        %2895 = vmatprep.subr.bf16.mxu0 0
        %2896 = vmatpush1.bf16.msra.mxu0 0
        %2897 = vmatprep.subr.bf16.mxu0 0
        %2898 = vmatpush1.bf16.msra.mxu0 0
        %2899 = vmatprep.subr.bf16.mxu0 0
        %2900 = vmatpush1.bf16.msra.mxu0 0
        %2901 = vmatprep.mubr.bf16.mxu0 0
        %2902 = vmatmul.mubr.bf16.gmra.mrb[0].mxu0 %v337
        %v2903 = vpop.f32.mrb[0].mxu0
        %v2904 = vadd.f32 0.0, %v2903
        %v2905 = vpop.f32.mrb[0].mxu0
        %v2906 = vpop.f32.mrb[0].mxu0
        %v2907 = vpop.f32.mrb[0].mxu0
        %2908 = vdwg.mxu0
        %2909 = vmatprep.subr.bf16.mxu0 0
        %2910 = vmatpush1.bf16.msra.mxu0 %v2771
        %2911 = vmatprep.subr.bf16.mxu0 0
        %2912 = vmatpush1.bf16.msra.mxu0 0
        %2913 = vmatprep.subr.bf16.mxu0 0
        %2914 = vmatpush1.bf16.msra.mxu0 0
        %2915 = vmatprep.subr.bf16.mxu0 0
        %2916 = vmatpush1.bf16.msra.mxu0 0
        %2917 = vmatprep.subr.bf16.mxu0 0
        %2918 = vmatpush1.bf16.msra.mxu0 0
        %2919 = vmatprep.subr.bf16.mxu0 0
        %2920 = vmatpush1.bf16.msra.mxu0 0
        %2921 = vmatprep.subr.bf16.mxu0 0
        %2922 = vmatpush1.bf16.msra.mxu0 0
        %2923 = vmatprep.subr.bf16.mxu0 0
        %2924 = vmatpush1.bf16.msra.mxu0 0
        %2925 = vmatprep.subr.bf16.mxu0 0
        %2926 = vmatpush1.bf16.msra.mxu0 0
        %2927 = vmatprep.subr.bf16.mxu0 0
        %2928 = vmatpush1.bf16.msra.mxu0 0
        %2929 = vmatprep.subr.bf16.mxu0 0
        %2930 = vmatpush1.bf16.msra.mxu0 0
        %2931 = vmatprep.subr.bf16.mxu0 0
        %2932 = vmatpush1.bf16.msra.mxu0 0
        %2933 = vmatprep.subr.bf16.mxu0 0
        %2934 = vmatpush1.bf16.msra.mxu0 0
        %2935 = vmatprep.subr.bf16.mxu0 0
        %2936 = vmatpush1.bf16.msra.mxu0 0
        %2937 = vmatprep.subr.bf16.mxu0 0
        %2938 = vmatpush1.bf16.msra.mxu0 0
        %2939 = vmatprep.subr.bf16.mxu0 0
        %2940 = vmatpush1.bf16.msra.mxu0 0
        %2941 = vmatprep.mubr.bf16.mxu0 0
        %2942 = vmatmul.mubr.bf16.gmra.mrb[0].mxu0 %v383
        %v2943 = vpop.f32.mrb[0].mxu0
        %v2944 = vadd.f32 %v2904, %v2943
        %v2945 = vpop.f32.mrb[0].mxu0
        %v2946 = vpop.f32.mrb[0].mxu0
        %v2947 = vpop.f32.mrb[0].mxu0
        %2948 = vdwg.mxu0
        %v2949 = vpack.c.bf16 %v2856, %v2856
        %2950 = vst.msk [vmem:[%s193 + $0x18] sm:$0xf] %vm426, %v2949
        %v2951 = vpack.c.bf16 %v2944, %v2944
        %v2953 = vunpack.c.l.b16 %v2951
        %v2954 = vpack.c.b16 %v2953, %v2953
        %2955 = vrot.lane.b32.xlu0 %v2954, 32
        %v2956 = vpop.permute.xlu0 %2955
        %2958 = vst.msk [vmem:[%s193 + $0x18] sm:$0xf] %vm435, %v2956
        %v2959 = vadd.f32 %v2753, %v2856
        %v2960 = vadd.f32 %v2959, %v2944
        %v2961 = vmul.f32 %v2856, %v2856
        %v2962 = vadd.f32 %v2757, %v2961
        %v2963 = vmul.f32 %v2944, %v2944
        %v2964 = vadd.f32 %v2962, %v2963
        %v2965 = vld [vmem:[%s2549] sm:$0xf]
        %v2966 = vld [vmem:[%s2549 + $0x4] sm:$0x3]
        %v2967 = vld [vmem:[%s2762] sm:$0xf]
        %v2968 = vld [vmem:[%s2762 + $0x4] sm:$0x3]
        %s2969 = scalar_lea.vmem %s209, 120
        %v2970 = vld [vmem:[%s2969] sm:$0xf]
        %v2971 = vld [vmem:[%s2969 + $0x4] sm:$0x3]
        %v2974 = vunpack.c.l.b16 %v2967
        %v2975 = vunpack.c.l.b16 %v2968
        %v2976 = vpack.c.b16 %v2975, %v2974
        %v2978 = vsel %vm236, %v2976, 0
        %2980 = vmatprep.subr.bf16.mxu0 0
        %2981 = vmatpush1.bf16.msra.mxu0 %v2978
        %2982 = vmatprep.subr.bf16.mxu0 0
        %2983 = vmatpush1.bf16.msra.mxu0 0
        %2984 = vmatprep.subr.bf16.mxu0 0
        %2985 = vmatpush1.bf16.msra.mxu0 0
        %2986 = vmatprep.subr.bf16.mxu0 0
        %2987 = vmatpush1.bf16.msra.mxu0 0
        %2988 = vmatprep.subr.bf16.mxu0 0
        %2989 = vmatpush1.bf16.msra.mxu0 0
        %2990 = vmatprep.subr.bf16.mxu0 0
        %2991 = vmatpush1.bf16.msra.mxu0 0
        %2992 = vmatprep.subr.bf16.mxu0 0
        %2993 = vmatpush1.bf16.msra.mxu0 0
        %2994 = vmatprep.subr.bf16.mxu0 0
        %2995 = vmatpush1.bf16.msra.mxu0 0
        %2996 = vmatprep.subr.bf16.mxu0 0
        %2997 = vmatpush1.bf16.msra.mxu0 0
        %2998 = vmatprep.subr.bf16.mxu0 0
        %2999 = vmatpush1.bf16.msra.mxu0 0
        %3000 = vmatprep.subr.bf16.mxu0 0
        %3001 = vmatpush1.bf16.msra.mxu0 0
        %3002 = vmatprep.subr.bf16.mxu0 0
        %3003 = vmatpush1.bf16.msra.mxu0 0
        %3004 = vmatprep.subr.bf16.mxu0 0
        %3005 = vmatpush1.bf16.msra.mxu0 0
        %3006 = vmatprep.subr.bf16.mxu0 0
        %3007 = vmatpush1.bf16.msra.mxu0 0
        %3008 = vmatprep.subr.bf16.mxu0 0
        %3009 = vmatpush1.bf16.msra.mxu0 0
        %3010 = vmatprep.subr.bf16.mxu0 0
        %3011 = vmatpush1.bf16.msra.mxu0 0
        %3012 = vmatprep.mubr.bf16.mxu0 0
        %3013 = vmatmul.mubr.bf16.gmra.mrb[0].mxu0 %v234
        %v3014 = vpop.f32.mrb[0].mxu0
        %v3015 = vadd.f32 0.0, %v3014
        %v3016 = vpop.f32.mrb[0].mxu0
        %v3017 = vpop.f32.mrb[0].mxu0
        %v3018 = vpop.f32.mrb[0].mxu0
        %3019 = vdwg.mxu0
        %v3022 = vunpack.c.l.b16 %v2965
        %v3023 = vunpack.c.l.b16 %v2966
        %v3024 = vpack.c.b16 %v3023, %v3022
        %v3026 = vsel %vm236, %v3024, 0
        %3028 = vmatprep.subr.bf16.mxu0 0
        %3029 = vmatpush1.bf16.msra.mxu0 %v3026
        %3030 = vmatprep.subr.bf16.mxu0 0
        %3031 = vmatpush1.bf16.msra.mxu0 0
        %3032 = vmatprep.subr.bf16.mxu0 0
        %3033 = vmatpush1.bf16.msra.mxu0 0
        %3034 = vmatprep.subr.bf16.mxu0 0
        %3035 = vmatpush1.bf16.msra.mxu0 0
        %3036 = vmatprep.subr.bf16.mxu0 0
        %3037 = vmatpush1.bf16.msra.mxu0 0
        %3038 = vmatprep.subr.bf16.mxu0 0
        %3039 = vmatpush1.bf16.msra.mxu0 0
        %3040 = vmatprep.subr.bf16.mxu0 0
        %3041 = vmatpush1.bf16.msra.mxu0 0
        %3042 = vmatprep.subr.bf16.mxu0 0
        %3043 = vmatpush1.bf16.msra.mxu0 0
        %3044 = vmatprep.subr.bf16.mxu0 0
        %3045 = vmatpush1.bf16.msra.mxu0 0
        %3046 = vmatprep.subr.bf16.mxu0 0
        %3047 = vmatpush1.bf16.msra.mxu0 0
        %3048 = vmatprep.subr.bf16.mxu0 0
        %3049 = vmatpush1.bf16.msra.mxu0 0
        %3050 = vmatprep.subr.bf16.mxu0 0
        %3051 = vmatpush1.bf16.msra.mxu0 0
        %3052 = vmatprep.subr.bf16.mxu0 0
        %3053 = vmatpush1.bf16.msra.mxu0 0
        %3054 = vmatprep.subr.bf16.mxu0 0
        %3055 = vmatpush1.bf16.msra.mxu0 0
        %3056 = vmatprep.subr.bf16.mxu0 0
        %3057 = vmatpush1.bf16.msra.mxu0 0
        %3058 = vmatprep.subr.bf16.mxu0 0
        %3059 = vmatpush1.bf16.msra.mxu0 0
        %3060 = vmatprep.mubr.bf16.mxu0 0
        %3061 = vmatmul.mubr.bf16.gmra.mrb[0].mxu0 %v286
        %v3062 = vpop.f32.mrb[0].mxu0
        %v3063 = vadd.f32 %v3015, %v3062
        %v3064 = vpop.f32.mrb[0].mxu0
        %v3065 = vpop.f32.mrb[0].mxu0
        %v3066 = vpop.f32.mrb[0].mxu0
        %3067 = vdwg.mxu0
        %v3070 = vunpack.c.l.b16 %v2970
        %v3071 = vunpack.c.l.b16 %v2971
        %v3072 = vpack.c.b16 %v3071, %v3070
        %v3074 = vsel %vm236, %v3072, 0
        %3076 = vmatprep.subr.bf16.mxu0 0
        %3077 = vmatpush1.bf16.msra.mxu0 %v3074
        %3078 = vmatprep.subr.bf16.mxu0 0
        %3079 = vmatpush1.bf16.msra.mxu0 0
        %3080 = vmatprep.subr.bf16.mxu0 0
        %3081 = vmatpush1.bf16.msra.mxu0 0
        %3082 = vmatprep.subr.bf16.mxu0 0
        %3083 = vmatpush1.bf16.msra.mxu0 0
        %3084 = vmatprep.subr.bf16.mxu0 0
        %3085 = vmatpush1.bf16.msra.mxu0 0
        %3086 = vmatprep.subr.bf16.mxu0 0
        %3087 = vmatpush1.bf16.msra.mxu0 0
        %3088 = vmatprep.subr.bf16.mxu0 0
        %3089 = vmatpush1.bf16.msra.mxu0 0
        %3090 = vmatprep.subr.bf16.mxu0 0
        %3091 = vmatpush1.bf16.msra.mxu0 0
        %3092 = vmatprep.subr.bf16.mxu0 0
        %3093 = vmatpush1.bf16.msra.mxu0 0
        %3094 = vmatprep.subr.bf16.mxu0 0
        %3095 = vmatpush1.bf16.msra.mxu0 0
        %3096 = vmatprep.subr.bf16.mxu0 0
        %3097 = vmatpush1.bf16.msra.mxu0 0
        %3098 = vmatprep.subr.bf16.mxu0 0
        %3099 = vmatpush1.bf16.msra.mxu0 0
        %3100 = vmatprep.subr.bf16.mxu0 0
        %3101 = vmatpush1.bf16.msra.mxu0 0
        %3102 = vmatprep.subr.bf16.mxu0 0
        %3103 = vmatpush1.bf16.msra.mxu0 0
        %3104 = vmatprep.subr.bf16.mxu0 0
        %3105 = vmatpush1.bf16.msra.mxu0 0
        %3106 = vmatprep.subr.bf16.mxu0 0
        %3107 = vmatpush1.bf16.msra.mxu0 0
        %3108 = vmatprep.mubr.bf16.mxu0 0
        %3109 = vmatmul.mubr.bf16.gmra.mrb[0].mxu0 %v337
        %v3110 = vpop.f32.mrb[0].mxu0
        %v3111 = vadd.f32 0.0, %v3110
        %v3112 = vpop.f32.mrb[0].mxu0
        %v3113 = vpop.f32.mrb[0].mxu0
        %v3114 = vpop.f32.mrb[0].mxu0
        %3115 = vdwg.mxu0
        %3116 = vmatprep.subr.bf16.mxu0 0
        %3117 = vmatpush1.bf16.msra.mxu0 %v2978
        %3118 = vmatprep.subr.bf16.mxu0 0
        %3119 = vmatpush1.bf16.msra.mxu0 0
        %3120 = vmatprep.subr.bf16.mxu0 0
        %3121 = vmatpush1.bf16.msra.mxu0 0
        %3122 = vmatprep.subr.bf16.mxu0 0
        %3123 = vmatpush1.bf16.msra.mxu0 0
        %3124 = vmatprep.subr.bf16.mxu0 0
        %3125 = vmatpush1.bf16.msra.mxu0 0
        %3126 = vmatprep.subr.bf16.mxu0 0
        %3127 = vmatpush1.bf16.msra.mxu0 0
        %3128 = vmatprep.subr.bf16.mxu0 0
        %3129 = vmatpush1.bf16.msra.mxu0 0
        %3130 = vmatprep.subr.bf16.mxu0 0
        %3131 = vmatpush1.bf16.msra.mxu0 0
        %3132 = vmatprep.subr.bf16.mxu0 0
        %3133 = vmatpush1.bf16.msra.mxu0 0
        %3134 = vmatprep.subr.bf16.mxu0 0
        %3135 = vmatpush1.bf16.msra.mxu0 0
        %3136 = vmatprep.subr.bf16.mxu0 0
        %3137 = vmatpush1.bf16.msra.mxu0 0
        %3138 = vmatprep.subr.bf16.mxu0 0
        %3139 = vmatpush1.bf16.msra.mxu0 0
        %3140 = vmatprep.subr.bf16.mxu0 0
        %3141 = vmatpush1.bf16.msra.mxu0 0
        %3142 = vmatprep.subr.bf16.mxu0 0
        %3143 = vmatpush1.bf16.msra.mxu0 0
        %3144 = vmatprep.subr.bf16.mxu0 0
        %3145 = vmatpush1.bf16.msra.mxu0 0
        %3146 = vmatprep.subr.bf16.mxu0 0
        %3147 = vmatpush1.bf16.msra.mxu0 0
        %3148 = vmatprep.mubr.bf16.mxu0 0
        %3149 = vmatmul.mubr.bf16.gmra.mrb[0].mxu0 %v383
        %v3150 = vpop.f32.mrb[0].mxu0
        %v3151 = vadd.f32 %v3111, %v3150
        %v3152 = vpop.f32.mrb[0].mxu0
        %v3153 = vpop.f32.mrb[0].mxu0
        %v3154 = vpop.f32.mrb[0].mxu0
        %3155 = vdwg.mxu0
        %v3156 = vpack.c.bf16 %v3063, %v3063
        %v3158 = vunpack.c.l.b16 %v3156
        %v3159 = vpack.c.b16 %v3158, %v3158
        %3160 = vrot.lane.b32.xlu0 %v3159, 64
        %v3161 = vpop.permute.xlu0 %3160
        %3163 = vst.msk [vmem:[%s193 + $0x18] sm:$0xf] %vm641, %v3161
        %v3164 = vpack.c.bf16 %v3151, %v3151
        %v3166 = vunpack.c.l.b16 %v3164
        %v3167 = vpack.c.b16 %v3166, %v3166
        %3168 = vrot.lane.b32.xlu0 %v3167, 96
        %v3169 = vpop.permute.xlu0 %3168
        %3171 = vst.msk [vmem:[%s193 + $0x18] sm:$0xf] %vm650, %v3169
        %v3172 = vadd.f32 %v2960, %v3063
        %v3173 = vadd.f32 %v3172, %v3151
        %v3174 = vmul.f32 %v3063, %v3063
        %v3175 = vadd.f32 %v2964, %v3174
        %v3176 = vmul.f32 %v3151, %v3151
        %v3177 = vadd.f32 %v3175, %v3176
        %v3178 = vld [vmem:[%s2762] sm:$0xf]
        %v3179 = vld [vmem:[%s2762 + $0x4] sm:$0x3]
        %v3180 = vld [vmem:[%s2969] sm:$0xf]
        %v3181 = vld [vmem:[%s2969 + $0x4] sm:$0x3]
        %s3182 = scalar_lea.vmem %s209, 128
        %v3183 = vld [vmem:[%s3182] sm:$0xf]
        %v3184 = vld [vmem:[%s3182 + $0x4] sm:$0x3]
        %v3187 = vunpack.c.l.b16 %v3180
        %v3188 = vunpack.c.l.b16 %v3181
        %v3189 = vpack.c.b16 %v3188, %v3187
        %v3191 = vsel %vm236, %v3189, 0
        %3193 = vmatprep.subr.bf16.mxu0 0
        %3194 = vmatpush1.bf16.msra.mxu0 %v3191
        %3195 = vmatprep.subr.bf16.mxu0 0
        %3196 = vmatpush1.bf16.msra.mxu0 0
        %3197 = vmatprep.subr.bf16.mxu0 0
        %3198 = vmatpush1.bf16.msra.mxu0 0
        %3199 = vmatprep.subr.bf16.mxu0 0
        %3200 = vmatpush1.bf16.msra.mxu0 0
        %3201 = vmatprep.subr.bf16.mxu0 0
        %3202 = vmatpush1.bf16.msra.mxu0 0
        %3203 = vmatprep.subr.bf16.mxu0 0
        %3204 = vmatpush1.bf16.msra.mxu0 0
        %3205 = vmatprep.subr.bf16.mxu0 0
        %3206 = vmatpush1.bf16.msra.mxu0 0
        %3207 = vmatprep.subr.bf16.mxu0 0
        %3208 = vmatpush1.bf16.msra.mxu0 0
        %3209 = vmatprep.subr.bf16.mxu0 0
        %3210 = vmatpush1.bf16.msra.mxu0 0
        %3211 = vmatprep.subr.bf16.mxu0 0
        %3212 = vmatpush1.bf16.msra.mxu0 0
        %3213 = vmatprep.subr.bf16.mxu0 0
        %3214 = vmatpush1.bf16.msra.mxu0 0
        %3215 = vmatprep.subr.bf16.mxu0 0
        %3216 = vmatpush1.bf16.msra.mxu0 0
        %3217 = vmatprep.subr.bf16.mxu0 0
        %3218 = vmatpush1.bf16.msra.mxu0 0
        %3219 = vmatprep.subr.bf16.mxu0 0
        %3220 = vmatpush1.bf16.msra.mxu0 0
        %3221 = vmatprep.subr.bf16.mxu0 0
        %3222 = vmatpush1.bf16.msra.mxu0 0
        %3223 = vmatprep.subr.bf16.mxu0 0
        %3224 = vmatpush1.bf16.msra.mxu0 0
        %3225 = vmatprep.mubr.bf16.mxu0 0
        %3226 = vmatmul.mubr.bf16.gmra.mrb[0].mxu0 %v234
        %v3227 = vpop.f32.mrb[0].mxu0
        %v3228 = vadd.f32 0.0, %v3227
        %v3229 = vpop.f32.mrb[0].mxu0
        %v3230 = vpop.f32.mrb[0].mxu0
        %v3231 = vpop.f32.mrb[0].mxu0
        %3232 = vdwg.mxu0
        %v3235 = vunpack.c.l.b16 %v3178
        %v3236 = vunpack.c.l.b16 %v3179
        %v3237 = vpack.c.b16 %v3236, %v3235
        %v3239 = vsel %vm236, %v3237, 0
        %3241 = vmatprep.subr.bf16.mxu0 0
        %3242 = vmatpush1.bf16.msra.mxu0 %v3239
        %3243 = vmatprep.subr.bf16.mxu0 0
        %3244 = vmatpush1.bf16.msra.mxu0 0
        %3245 = vmatprep.subr.bf16.mxu0 0
        %3246 = vmatpush1.bf16.msra.mxu0 0
        %3247 = vmatprep.subr.bf16.mxu0 0
        %3248 = vmatpush1.bf16.msra.mxu0 0
        %3249 = vmatprep.subr.bf16.mxu0 0
        %3250 = vmatpush1.bf16.msra.mxu0 0
        %3251 = vmatprep.subr.bf16.mxu0 0
        %3252 = vmatpush1.bf16.msra.mxu0 0
        %3253 = vmatprep.subr.bf16.mxu0 0
        %3254 = vmatpush1.bf16.msra.mxu0 0
        %3255 = vmatprep.subr.bf16.mxu0 0
        %3256 = vmatpush1.bf16.msra.mxu0 0
        %3257 = vmatprep.subr.bf16.mxu0 0
        %3258 = vmatpush1.bf16.msra.mxu0 0
        %3259 = vmatprep.subr.bf16.mxu0 0
        %3260 = vmatpush1.bf16.msra.mxu0 0
        %3261 = vmatprep.subr.bf16.mxu0 0
        %3262 = vmatpush1.bf16.msra.mxu0 0
        %3263 = vmatprep.subr.bf16.mxu0 0
        %3264 = vmatpush1.bf16.msra.mxu0 0
        %3265 = vmatprep.subr.bf16.mxu0 0
        %3266 = vmatpush1.bf16.msra.mxu0 0
        %3267 = vmatprep.subr.bf16.mxu0 0
        %3268 = vmatpush1.bf16.msra.mxu0 0
        %3269 = vmatprep.subr.bf16.mxu0 0
        %3270 = vmatpush1.bf16.msra.mxu0 0
        %3271 = vmatprep.subr.bf16.mxu0 0
        %3272 = vmatpush1.bf16.msra.mxu0 0
        %3273 = vmatprep.mubr.bf16.mxu0 0
        %3274 = vmatmul.mubr.bf16.gmra.mrb[0].mxu0 %v286
        %v3275 = vpop.f32.mrb[0].mxu0
        %v3276 = vadd.f32 %v3228, %v3275
        %v3277 = vpop.f32.mrb[0].mxu0
        %v3278 = vpop.f32.mrb[0].mxu0
        %v3279 = vpop.f32.mrb[0].mxu0
        %3280 = vdwg.mxu0
        %v3283 = vunpack.c.l.b16 %v3183
        %v3284 = vunpack.c.l.b16 %v3184
        %v3285 = vpack.c.b16 %v3284, %v3283
        %v3287 = vsel %vm236, %v3285, 0
        %3289 = vmatprep.subr.bf16.mxu0 0
        %3290 = vmatpush1.bf16.msra.mxu0 %v3287
        %3291 = vmatprep.subr.bf16.mxu0 0
        %3292 = vmatpush1.bf16.msra.mxu0 0
        %3293 = vmatprep.subr.bf16.mxu0 0
        %3294 = vmatpush1.bf16.msra.mxu0 0
        %3295 = vmatprep.subr.bf16.mxu0 0
        %3296 = vmatpush1.bf16.msra.mxu0 0
        %3297 = vmatprep.subr.bf16.mxu0 0
        %3298 = vmatpush1.bf16.msra.mxu0 0
        %3299 = vmatprep.subr.bf16.mxu0 0
        %3300 = vmatpush1.bf16.msra.mxu0 0
        %3301 = vmatprep.subr.bf16.mxu0 0
        %3302 = vmatpush1.bf16.msra.mxu0 0
        %3303 = vmatprep.subr.bf16.mxu0 0
        %3304 = vmatpush1.bf16.msra.mxu0 0
        %3305 = vmatprep.subr.bf16.mxu0 0
        %3306 = vmatpush1.bf16.msra.mxu0 0
        %3307 = vmatprep.subr.bf16.mxu0 0
        %3308 = vmatpush1.bf16.msra.mxu0 0
        %3309 = vmatprep.subr.bf16.mxu0 0
        %3310 = vmatpush1.bf16.msra.mxu0 0
        %3311 = vmatprep.subr.bf16.mxu0 0
        %3312 = vmatpush1.bf16.msra.mxu0 0
        %3313 = vmatprep.subr.bf16.mxu0 0
        %3314 = vmatpush1.bf16.msra.mxu0 0
        %3315 = vmatprep.subr.bf16.mxu0 0
        %3316 = vmatpush1.bf16.msra.mxu0 0
        %3317 = vmatprep.subr.bf16.mxu0 0
        %3318 = vmatpush1.bf16.msra.mxu0 0
        %3319 = vmatprep.subr.bf16.mxu0 0
        %3320 = vmatpush1.bf16.msra.mxu0 0
        %3321 = vmatprep.mubr.bf16.mxu0 0
        %3322 = vmatmul.mubr.bf16.gmra.mrb[0].mxu0 %v337
        %v3323 = vpop.f32.mrb[0].mxu0
        %v3324 = vadd.f32 0.0, %v3323
        %v3325 = vpop.f32.mrb[0].mxu0
        %v3326 = vpop.f32.mrb[0].mxu0
        %v3327 = vpop.f32.mrb[0].mxu0
        %3328 = vdwg.mxu0
        %3329 = vmatprep.subr.bf16.mxu0 0
        %3330 = vmatpush1.bf16.msra.mxu0 %v3191
        %3331 = vmatprep.subr.bf16.mxu0 0
        %3332 = vmatpush1.bf16.msra.mxu0 0
        %3333 = vmatprep.subr.bf16.mxu0 0
        %3334 = vmatpush1.bf16.msra.mxu0 0
        %3335 = vmatprep.subr.bf16.mxu0 0
        %3336 = vmatpush1.bf16.msra.mxu0 0
        %3337 = vmatprep.subr.bf16.mxu0 0
        %3338 = vmatpush1.bf16.msra.mxu0 0
        %3339 = vmatprep.subr.bf16.mxu0 0
        %3340 = vmatpush1.bf16.msra.mxu0 0
        %3341 = vmatprep.subr.bf16.mxu0 0
        %3342 = vmatpush1.bf16.msra.mxu0 0
        %3343 = vmatprep.subr.bf16.mxu0 0
        %3344 = vmatpush1.bf16.msra.mxu0 0
        %3345 = vmatprep.subr.bf16.mxu0 0
        %3346 = vmatpush1.bf16.msra.mxu0 0
        %3347 = vmatprep.subr.bf16.mxu0 0
        %3348 = vmatpush1.bf16.msra.mxu0 0
        %3349 = vmatprep.subr.bf16.mxu0 0
        %3350 = vmatpush1.bf16.msra.mxu0 0
        %3351 = vmatprep.subr.bf16.mxu0 0
        %3352 = vmatpush1.bf16.msra.mxu0 0
        %3353 = vmatprep.subr.bf16.mxu0 0
        %3354 = vmatpush1.bf16.msra.mxu0 0
        %3355 = vmatprep.subr.bf16.mxu0 0
        %3356 = vmatpush1.bf16.msra.mxu0 0
        %3357 = vmatprep.subr.bf16.mxu0 0
        %3358 = vmatpush1.bf16.msra.mxu0 0
        %3359 = vmatprep.subr.bf16.mxu0 0
        %3360 = vmatpush1.bf16.msra.mxu0 0
        %3361 = vmatprep.mubr.bf16.mxu0 0
        %3362 = vmatmul.mubr.bf16.gmra.mrb[0].mxu0 %v383
        %v3363 = vpop.f32.mrb[0].mxu0
        %v3364 = vadd.f32 %v3324, %v3363
        %v3365 = vpop.f32.mrb[0].mxu0
        %v3366 = vpop.f32.mrb[0].mxu0
        %v3367 = vpop.f32.mrb[0].mxu0
        %3368 = vdwg.mxu0
        %v3369 = vpack.c.bf16 %v3276, %v3276
        %3370 = vst.msk [vmem:[%s193 + $0x1c] sm:$0xf] %vm426, %v3369
        %v3371 = vpack.c.bf16 %v3364, %v3364
        %v3373 = vunpack.c.l.b16 %v3371
        %v3374 = vpack.c.b16 %v3373, %v3373
        %3375 = vrot.lane.b32.xlu0 %v3374, 32
        %v3376 = vpop.permute.xlu0 %3375
        %3378 = vst.msk [vmem:[%s193 + $0x1c] sm:$0xf] %vm435, %v3376
        %v3379 = vadd.f32 %v3173, %v3276
        %v3380 = vadd.f32 %v3379, %v3364
        %v3381 = vmul.f32 %v3276, %v3276
        %v3382 = vadd.f32 %v3177, %v3381
        %v3383 = vmul.f32 %v3364, %v3364
        %v3384 = vadd.f32 %v3382, %v3383
        %v3385 = vld [vmem:[%s2969] sm:$0xf]
        %v3386 = vld [vmem:[%s2969 + $0x4] sm:$0x3]
        %v3387 = vld [vmem:[%s3182] sm:$0xf]
        %v3388 = vld [vmem:[%s3182 + $0x4] sm:$0x3]
        %s3389 = scalar_lea.vmem %s209, 136
        %v3390 = vld [vmem:[%s3389] sm:$0xf]
        %v3391 = vld [vmem:[%s3389 + $0x4] sm:$0x3]
        %v3394 = vunpack.c.l.b16 %v3387
        %v3395 = vunpack.c.l.b16 %v3388
        %v3396 = vpack.c.b16 %v3395, %v3394
        %v3398 = vsel %vm236, %v3396, 0
        %3400 = vmatprep.subr.bf16.mxu0 0
        %3401 = vmatpush1.bf16.msra.mxu0 %v3398
        %3402 = vmatprep.subr.bf16.mxu0 0
        %3403 = vmatpush1.bf16.msra.mxu0 0
        %3404 = vmatprep.subr.bf16.mxu0 0
        %3405 = vmatpush1.bf16.msra.mxu0 0
        %3406 = vmatprep.subr.bf16.mxu0 0
        %3407 = vmatpush1.bf16.msra.mxu0 0
        %3408 = vmatprep.subr.bf16.mxu0 0
        %3409 = vmatpush1.bf16.msra.mxu0 0
        %3410 = vmatprep.subr.bf16.mxu0 0
        %3411 = vmatpush1.bf16.msra.mxu0 0
        %3412 = vmatprep.subr.bf16.mxu0 0
        %3413 = vmatpush1.bf16.msra.mxu0 0
        %3414 = vmatprep.subr.bf16.mxu0 0
        %3415 = vmatpush1.bf16.msra.mxu0 0
        %3416 = vmatprep.subr.bf16.mxu0 0
        %3417 = vmatpush1.bf16.msra.mxu0 0
        %3418 = vmatprep.subr.bf16.mxu0 0
        %3419 = vmatpush1.bf16.msra.mxu0 0
        %3420 = vmatprep.subr.bf16.mxu0 0
        %3421 = vmatpush1.bf16.msra.mxu0 0
        %3422 = vmatprep.subr.bf16.mxu0 0
        %3423 = vmatpush1.bf16.msra.mxu0 0
        %3424 = vmatprep.subr.bf16.mxu0 0
        %3425 = vmatpush1.bf16.msra.mxu0 0
        %3426 = vmatprep.subr.bf16.mxu0 0
        %3427 = vmatpush1.bf16.msra.mxu0 0
        %3428 = vmatprep.subr.bf16.mxu0 0
        %3429 = vmatpush1.bf16.msra.mxu0 0
        %3430 = vmatprep.subr.bf16.mxu0 0
        %3431 = vmatpush1.bf16.msra.mxu0 0
        %3432 = vmatprep.mubr.bf16.mxu0 0
        %3433 = vmatmul.mubr.bf16.gmra.mrb[0].mxu0 %v234
        %v3434 = vpop.f32.mrb[0].mxu0
        %v3435 = vadd.f32 0.0, %v3434
        %v3436 = vpop.f32.mrb[0].mxu0
        %v3437 = vpop.f32.mrb[0].mxu0
        %v3438 = vpop.f32.mrb[0].mxu0
        %3439 = vdwg.mxu0
        %v3442 = vunpack.c.l.b16 %v3385
        %v3443 = vunpack.c.l.b16 %v3386
        %v3444 = vpack.c.b16 %v3443, %v3442
        %v3446 = vsel %vm236, %v3444, 0
        %3448 = vmatprep.subr.bf16.mxu0 0
        %3449 = vmatpush1.bf16.msra.mxu0 %v3446
        %3450 = vmatprep.subr.bf16.mxu0 0
        %3451 = vmatpush1.bf16.msra.mxu0 0
        %3452 = vmatprep.subr.bf16.mxu0 0
        %3453 = vmatpush1.bf16.msra.mxu0 0
        %3454 = vmatprep.subr.bf16.mxu0 0
        %3455 = vmatpush1.bf16.msra.mxu0 0
        %3456 = vmatprep.subr.bf16.mxu0 0
        %3457 = vmatpush1.bf16.msra.mxu0 0
        %3458 = vmatprep.subr.bf16.mxu0 0
        %3459 = vmatpush1.bf16.msra.mxu0 0
        %3460 = vmatprep.subr.bf16.mxu0 0
        %3461 = vmatpush1.bf16.msra.mxu0 0
        %3462 = vmatprep.subr.bf16.mxu0 0
        %3463 = vmatpush1.bf16.msra.mxu0 0
        %3464 = vmatprep.subr.bf16.mxu0 0
        %3465 = vmatpush1.bf16.msra.mxu0 0
        %3466 = vmatprep.subr.bf16.mxu0 0
        %3467 = vmatpush1.bf16.msra.mxu0 0
        %3468 = vmatprep.subr.bf16.mxu0 0
        %3469 = vmatpush1.bf16.msra.mxu0 0
        %3470 = vmatprep.subr.bf16.mxu0 0
        %3471 = vmatpush1.bf16.msra.mxu0 0
        %3472 = vmatprep.subr.bf16.mxu0 0
        %3473 = vmatpush1.bf16.msra.mxu0 0
        %3474 = vmatprep.subr.bf16.mxu0 0
        %3475 = vmatpush1.bf16.msra.mxu0 0
        %3476 = vmatprep.subr.bf16.mxu0 0
        %3477 = vmatpush1.bf16.msra.mxu0 0
        %3478 = vmatprep.subr.bf16.mxu0 0
        %3479 = vmatpush1.bf16.msra.mxu0 0
        %3480 = vmatprep.mubr.bf16.mxu0 0
        %3481 = vmatmul.mubr.bf16.gmra.mrb[0].mxu0 %v286
        %v3482 = vpop.f32.mrb[0].mxu0
        %v3483 = vadd.f32 %v3435, %v3482
        %v3484 = vpop.f32.mrb[0].mxu0
        %v3485 = vpop.f32.mrb[0].mxu0
        %v3486 = vpop.f32.mrb[0].mxu0
        %3487 = vdwg.mxu0
        %v3490 = vunpack.c.l.b16 %v3390
        %v3491 = vunpack.c.l.b16 %v3391
        %v3492 = vpack.c.b16 %v3491, %v3490
        %v3494 = vsel %vm236, %v3492, 0
        %3496 = vmatprep.subr.bf16.mxu0 0
        %3497 = vmatpush1.bf16.msra.mxu0 %v3494
        %3498 = vmatprep.subr.bf16.mxu0 0
        %3499 = vmatpush1.bf16.msra.mxu0 0
        %3500 = vmatprep.subr.bf16.mxu0 0
        %3501 = vmatpush1.bf16.msra.mxu0 0
        %3502 = vmatprep.subr.bf16.mxu0 0
        %3503 = vmatpush1.bf16.msra.mxu0 0
        %3504 = vmatprep.subr.bf16.mxu0 0
        %3505 = vmatpush1.bf16.msra.mxu0 0
        %3506 = vmatprep.subr.bf16.mxu0 0
        %3507 = vmatpush1.bf16.msra.mxu0 0
        %3508 = vmatprep.subr.bf16.mxu0 0
        %3509 = vmatpush1.bf16.msra.mxu0 0
        %3510 = vmatprep.subr.bf16.mxu0 0
        %3511 = vmatpush1.bf16.msra.mxu0 0
        %3512 = vmatprep.subr.bf16.mxu0 0
        %3513 = vmatpush1.bf16.msra.mxu0 0
        %3514 = vmatprep.subr.bf16.mxu0 0
        %3515 = vmatpush1.bf16.msra.mxu0 0
        %3516 = vmatprep.subr.bf16.mxu0 0
        %3517 = vmatpush1.bf16.msra.mxu0 0
        %3518 = vmatprep.subr.bf16.mxu0 0
        %3519 = vmatpush1.bf16.msra.mxu0 0
        %3520 = vmatprep.subr.bf16.mxu0 0
        %3521 = vmatpush1.bf16.msra.mxu0 0
        %3522 = vmatprep.subr.bf16.mxu0 0
        %3523 = vmatpush1.bf16.msra.mxu0 0
        %3524 = vmatprep.subr.bf16.mxu0 0
        %3525 = vmatpush1.bf16.msra.mxu0 0
        %3526 = vmatprep.subr.bf16.mxu0 0
        %3527 = vmatpush1.bf16.msra.mxu0 0
        %3528 = vmatprep.mubr.bf16.mxu0 0
        %3529 = vmatmul.mubr.bf16.gmra.mrb[0].mxu0 %v337
        %v3530 = vpop.f32.mrb[0].mxu0
        %v3531 = vadd.f32 0.0, %v3530
        %v3532 = vpop.f32.mrb[0].mxu0
        %v3533 = vpop.f32.mrb[0].mxu0
        %v3534 = vpop.f32.mrb[0].mxu0
        %3535 = vdwg.mxu0
        %3536 = vmatprep.subr.bf16.mxu0 0
        %3537 = vmatpush1.bf16.msra.mxu0 %v3398
        %3538 = vmatprep.subr.bf16.mxu0 0
        %3539 = vmatpush1.bf16.msra.mxu0 0
        %3540 = vmatprep.subr.bf16.mxu0 0
        %3541 = vmatpush1.bf16.msra.mxu0 0
        %3542 = vmatprep.subr.bf16.mxu0 0
        %3543 = vmatpush1.bf16.msra.mxu0 0
        %3544 = vmatprep.subr.bf16.mxu0 0
        %3545 = vmatpush1.bf16.msra.mxu0 0
        %3546 = vmatprep.subr.bf16.mxu0 0
        %3547 = vmatpush1.bf16.msra.mxu0 0
        %3548 = vmatprep.subr.bf16.mxu0 0
        %3549 = vmatpush1.bf16.msra.mxu0 0
        %3550 = vmatprep.subr.bf16.mxu0 0
        %3551 = vmatpush1.bf16.msra.mxu0 0
        %3552 = vmatprep.subr.bf16.mxu0 0
        %3553 = vmatpush1.bf16.msra.mxu0 0
        %3554 = vmatprep.subr.bf16.mxu0 0
        %3555 = vmatpush1.bf16.msra.mxu0 0
        %3556 = vmatprep.subr.bf16.mxu0 0
        %3557 = vmatpush1.bf16.msra.mxu0 0
        %3558 = vmatprep.subr.bf16.mxu0 0
        %3559 = vmatpush1.bf16.msra.mxu0 0
        %3560 = vmatprep.subr.bf16.mxu0 0
        %3561 = vmatpush1.bf16.msra.mxu0 0
        %3562 = vmatprep.subr.bf16.mxu0 0
        %3563 = vmatpush1.bf16.msra.mxu0 0
        %3564 = vmatprep.subr.bf16.mxu0 0
        %3565 = vmatpush1.bf16.msra.mxu0 0
        %3566 = vmatprep.subr.bf16.mxu0 0
        %3567 = vmatpush1.bf16.msra.mxu0 0
        %3568 = vmatprep.mubr.bf16.mxu0 0
        %3569 = vmatmul.mubr.bf16.gmra.mrb[0].mxu0 %v383
        %v3570 = vpop.f32.mrb[0].mxu0
        %v3571 = vadd.f32 %v3531, %v3570
        %v3572 = vpop.f32.mrb[0].mxu0
        %v3573 = vpop.f32.mrb[0].mxu0
        %v3574 = vpop.f32.mrb[0].mxu0
        %3575 = vdwg.mxu0
        %v3576 = vpack.c.bf16 %v3483, %v3483
        %v3578 = vunpack.c.l.b16 %v3576
        %v3579 = vpack.c.b16 %v3578, %v3578
        %3580 = vrot.lane.b32.xlu0 %v3579, 64
        %v3581 = vpop.permute.xlu0 %3580
        %3583 = vst.msk [vmem:[%s193 + $0x1c] sm:$0xf] %vm641, %v3581
        %v3584 = vpack.c.bf16 %v3571, %v3571
        %v3586 = vunpack.c.l.b16 %v3584
        %v3587 = vpack.c.b16 %v3586, %v3586
        %3588 = vrot.lane.b32.xlu0 %v3587, 96
        %v3589 = vpop.permute.xlu0 %3588
        %3591 = vst.msk [vmem:[%s193 + $0x1c] sm:$0xf] %vm650, %v3589
        %v3592 = vadd.f32 %v3380, %v3483
        %v3593 = vadd.f32 %v3592, %v3571
        %v3594 = vmul.f32 %v3483, %v3483
        %v3595 = vadd.f32 %v3384, %v3594
        %v3596 = vmul.f32 %v3571, %v3571
        %v3597 = vadd.f32 %v3595, %v3596
        %vm3598 = vcmask 261120
        %v3599 = vsel %vm3598, %v3593, 0.0
        %3600 = vadd.xlane.f32.xlu0 %v3599
        %v3601 = vpop.xlane.xlu0 %3600
        %v3602 = vsel %vm3598, %v3597, 0.0
        %3603 = vadd.xlane.f32.xlu0 %v3602
        %v3604 = vpop.xlane.xlu0 %3603
        %v3607 = vlaneseq
        %v3608 = vand.u32 %v3607, 127
        %v3609 = vlaneseq
        %v3610 = vshrl.u32 %v3609, 7
        %v3611 = vsub.s32 %v3608, %v3610
        %v3612 = vrot.slane %v3601, %v3611
        %v3613 = vlaneseq
        %v3614 = vshrl.u32 %v3613, 7
        %v3615 = vsub.s32 %v3608, %v3614
        %v3616 = vrot.slane %v3604, %v3615
        %vm3617 = vcmask 1041409
        %v3618 = vsel %vm3617, %v3616, %v3612
        %vm3620 = vcmask 58368
        %3621 = vst.msk [vmem:[%s200] sm:$0x3] %vm3620, %v3618
        %s3622 = sand.u32 %s92, 1
        %s3623 = scalar_lea.sflag [#allocation3], %s3622
        %s3624 = sand.u32 %s92, 1
        %s3625 = smul.addr %s3624, 32
        %s3626 = scalar_lea.vmem [#allocation2], %s3625
        %s3627 = sand.u32 %s120, 1
        %s3628 = scalar_lea.sflag [#allocation5], %s3627
        %s3629 = sand.u32 %s120, 1
        %s3630 = smul.addr %s3629, 2
        %s3631 = scalar_lea.vmem [#allocation4], %s3630
        // Predicated region
        $region29: #{tpu_custom_call.1} parent=27 // pred_check
          %p3632 = pneg %p102
        $region30: #{tpu_custom_call.1} parent=27 // pred_check_branch
          %3634 = sbr.rel (%p3632) target = $region32
        $region31: #{tpu_custom_call.1} parent=27 // pred_region
          %s3635 = smul.u32 8, %s26
          %s3637 = ssub.s32 512, 512
          %3638 = vsyncadd %s3623, %s3637
          %s3639 = smul.addr %s25, 8
          %s3640 = sadd.s32 %s3635, %s3639
          %s3641 = smul.addr %s3640, 64
          %s3642 = scalar_lea.hbm %s2, %s3641
          %s3644 = sshll.u32 %s3626, 4
          %s3645 = int_to_ptr.vmem [resolvable:$true] %s3644
          %3647 = dma.vmem_to_hbm [thread:$0]  %s3645, 512, %s3642, %s3623
        $region32: #{tpu_custom_call.1} parent=27 // pred_fallthru
          _
        // Predicated region
        $region33: #{tpu_custom_call.1} parent=27 // pred_check
          %p3648 = pneg %p130
        $region34: #{tpu_custom_call.1} parent=27 // pred_check_branch
          %3650 = sbr.rel (%p3648) target = $region36
        $region35: #{tpu_custom_call.1} parent=27 // pred_region
          %s3652 = ssub.s32 32, 32
          %3653 = vsyncadd %s3628, %s3652
          %s3654 = sadd.s32 %s26, %s25
          %s3655 = smul.addr %s3654, 32
          %s3656 = scalar_lea.hbm %s3, %s3655
          %s3658 = sshll.u32 %s3631, 4
          %s3659 = int_to_ptr.vmem [resolvable:$true] %s3658
          %3661 = dma.vmem_to_hbm [thread:$0]  %s3659, 32, %s3656, %s3628
        $region36: #{tpu_custom_call.1} parent=27 // pred_fallthru
          _
      $region28: #{tpu_custom_call.1} parent=5 // pred_fallthru
        _
      %p3662 = scmp.le.s32.totalorder 2, %s16
      // Predicated region
      $region37: #{tpu_custom_call.1} parent=5 // pred_check
        %p3663 = pneg %p3662
      $region38: #{tpu_custom_call.1} parent=5 // pred_check_branch
        %3665 = sbr.rel (%p3663) target = $region40
      $region39: #{tpu_custom_call.1} parent=5 // pred_region
        %s3666 = ssub.s32 %s16, 2
        // Predicated region
        $region41: #{tpu_custom_call.1} parent=39 // pred_check
          %p3667 = pneg %p108
        $region42: #{tpu_custom_call.1} parent=39 // pred_check_branch
          %3669 = sbr.rel (%p3667) target = $region44
        $region43: #{tpu_custom_call.1} parent=39 // pred_region
          %s3670 = sand.u32 %s93, 1
          %s3671 = scalar_lea.sflag [#allocation3], %s3670
          %s3672 = sand.u32 %s93, 1
          %s3673 = smul.addr %s3672, 32
          %s3674 = scalar_lea.vmem [#allocation2], %s3673
          %3675 = dma.done %s3671, 512
        $region44: #{tpu_custom_call.1} parent=39 // pred_fallthru
          _
        // Predicated region
        $region45: #{tpu_custom_call.1} parent=39 // pred_check
          %p3676 = pneg %p136
        $region46: #{tpu_custom_call.1} parent=39 // pred_check_branch
          %3678 = sbr.rel (%p3676) target = $region48
        $region47: #{tpu_custom_call.1} parent=39 // pred_region
          %s3679 = sand.u32 %s121, 1
          %s3680 = scalar_lea.sflag [#allocation5], %s3679
          %s3681 = sand.u32 %s121, 1
          %s3682 = smul.addr %s3681, 2
          %s3683 = scalar_lea.vmem [#allocation4], %s3682
          %3684 = dma.done %s3680, 32
        $region48: #{tpu_custom_call.1} parent=39 // pred_fallthru
          _
      $region40: #{tpu_custom_call.1} parent=5 // pred_fallthru
        _
    $region6: #{tpu_custom_call.1} parent=1 // loop_footer
      %s20 = sadd.s32 1, %s16
    $region7: #{tpu_custom_call.1} parent=1 // loop_footer_branch
      %15 = sbr.rel target = $region3
    $region8: #{tpu_custom_call.1} parent=1 // loop_exit
      _
    %3685 = vsyncpa [#allocation3], 1
    %s3686 = scalar_lea.sflag [#allocation3], 1
    %3687 = vsyncpa %s3686, 1
    %3688 = vsyncpa [#allocation5], 1
    %s3689 = scalar_lea.sflag [#allocation5], 1
    %3690 = vsyncpa %s3689, 1

</llo_original>
